<compile_context>
chip_gen: v6e
topology: v6e:2x2x1
jax: 0.10.0
libtpu: 0.0.40
codegen_flags: <defaults>
</compile_context>

<pallas_src>
import functools

import jax
import jax.numpy as jnp
from jax.experimental import pallas as pl
from jax.experimental.pallas import tpu as pltpu


def _round_up(x, m):
    return ((x + m - 1) // m) * m


def _vmem_budget_bytes():
    """Per-TensorCore scoped-VMEM budget (v7x only has 64 MiB per TC)."""
    kind = ""
    try:
        kind = jax.devices()[0].device_kind.lower()
    except Exception:
        pass
    if any(t in kind for t in ("v5 lite", "v5e", "v5litepod", "v6", "v6e", "v6 lite")):
        return 96 * 1024 * 1024          # v5e / v6e: 128 MiB physical VMEM
    return 48 * 1024 * 1024              # v7x (64 MiB) / unknown: stay conservative


def _vq_kernel(x_ref, emb_ref, embt_ref, e2h_ref, liota_ref,   # inputs
               q_ref, idx_ref, l2_ref,                         # outputs
               minv_sc, idx_sc, qacc_sc,                       # scratch carries
               *, n_valid, k_tile, use_bf16_scoring, l2_from_scores):
    # x_ref    : (TN, D)   tile of flattened tokens (resident across the K axis)
    # emb_ref  : (D, Kt)   codebook column chunk (f32, or bf16 on the fast path)
    # embt_ref : (Kt, D)   transposed codebook chunk (always f32: exact gather)
    # e2h_ref  : (1, Kt)   0.5*sum(e^2) per code, +inf in padded columns
    # liota_ref: (1, Kt)   constant local column indices 0..Kt-1 (f32, hoisted)
    # q_ref    : (TN, D)   quantized output tile (written on the last K step)
    # idx_ref  : (TN, 1)   argmin indices column (written on the last K step)
    # l2_ref   : (1, 1)    per-tile partial sum of (q - x)^2 over valid rows
    # minv_sc  : (TN, 1)   running min score        } carried across the K axis
    # idx_sc   : (TN, 1)   running global argmin    }
    # qacc_sc  : (TN, D)   running best codebook row}
    i = pl.program_id(0)
    k = pl.program_id(1)
    nk = pl.num_programs(1)

    @pl.when(k == 0)
    def _init():
        minv_sc[...] = jnp.full_like(minv_sc, jnp.inf)
        idx_sc[...] = jnp.zeros_like(idx_sc)
        qacc_sc[...] = jnp.zeros_like(qacc_sc)

    x = x_ref[...].astype(jnp.float32)                               # (TN, D)

    # argmin_k ||x - e_k||^2 == argmin_k (0.5*||e_k||^2 - x.e_k)  (||x||^2 dropped,
    # 0.5 folded into the hoisted e2h constant).
    if use_bf16_scoring:
        xe = jnp.dot(x_ref[...].astype(jnp.bfloat16), emb_ref[...],
                     preferred_element_type=jnp.float32)             # (TN, Kt) MXU
    else:
        xe = jnp.dot(x, emb_ref[...],
                     preferred_element_type=jnp.float32)             # (TN, Kt) MXU
    score = e2h_ref[...] - xe                                        # (TN, Kt)

    liota = liota_ref[...]                                           # (1, Kt)
    cmin = jnp.min(score, axis=-1, keepdims=True)                    # (TN, 1)
    # first local index attaining the chunk min (matches torch .min(-1) tie-break);
    # padded columns have score == +inf so they can never win.
    lidx_f = jnp.min(jnp.where(score <= cmin, liota, float(k_tile)),
                     axis=-1, keepdims=True)                         # (TN, 1)

    # chunk-local gather of the winning codebook rows via one-hot matmul (f32, MXU)
    onehot = (liota == lidx_f).astype(jnp.float32)                   # (TN, Kt)
    qc = jnp.dot(onehot, embt_ref[...],
                 preferred_element_type=jnp.float32)                 # (TN, D)  MXU
    gidx = lidx_f.astype(jnp.int32) + k * k_tile                     # (TN, 1) global

    prev_min = minv_sc[...]
    better = cmin < prev_min          # strict: earlier chunk wins exact ties
    minv_sc[...] = jnp.where(better, cmin, prev_min)
    idx_sc[...] = jnp.where(better, gidx, idx_sc[...])
    qacc_sc[...] = jnp.where(better, qc, qacc_sc[...])

    @pl.when(k == nk - 1)
    def _finalize():
        q = qacc_sc[...]
        q_ref[...] = q.astype(q_ref.dtype)
        idx_ref[...] = idx_sc[...]

        # fused l2 partial sum: mask out padded tail tokens of the last tile
        tn = q.shape[0]
        row = i * tn + jax.lax.broadcasted_iota(jnp.int32, (tn, 1), 0)
        valid = (row < n_valid).astype(jnp.float32)                  # (TN, 1)
        if l2_from_scores:
            # ||x - e*||^2 = ||x||^2 + 2 * (0.5||e*||^2 - x.e*)  (inherits matmul
            # rounding; only used for larger D where it saves (TN, D) VPU passes)
            x2 = jnp.sum(x * x, axis=1, keepdims=True)               # (TN, 1)
            l2row = jnp.maximum(x2 + 2.0 * minv_sc[...], 0.0) * valid
            l2_ref[...] = jnp.sum(l2row, axis=0, keepdims=True)
        else:
            diff = q - x
            sq = diff * diff * valid                                 # (TN, D)
            l2_ref[...] = jnp.sum(jnp.sum(sq, axis=1, keepdims=True),
                                  axis=0, keepdims=True)


@functools.partial(jax.jit,
                   static_argnames=("tile_n", "k_tile", "use_bf16_scoring"))
def quantize_forward(x, emb, *, tile_n=None, k_tile=None, use_bf16_scoring=False):
    """x: (B, D, H, W) float32, emb: (D, K) float32."""
    B, D, H, W = x.shape
    Dw, K = emb.shape
    assert D == Dw, "input channel dim must equal emb.shape[0]"
    N = B * H * W

    # ---- codebook padding (256-aligned for the 256x256 MXU on v6e/v7x) ----
    Kp = max(256, _round_up(K, 256))
    if k_tile is None:
        if Kp <= 1024:
            k_tile = Kp
        else:
            k_tile = next(t for t in (1024, 512, 256) if Kp % t == 0)
    assert Kp % k_tile == 0 and k_tile % 256 == 0
    grid_k = Kp // k_tile

    # ---- VMEM-budget-adaptive token tile (keeps v7x out of spill territory) ----
    budget = _vmem_budget_bytes()
    if tile_n is None:
        row_bytes = 4 * (6 * k_tile + 10 * D + 12)          # live (TN,*) temps/row
        const_bytes = 4 * (4 * D * k_tile + 4 * k_tile)     # double-buffered chunks
        avail = max(budget - const_bytes - (4 << 20), 2 << 20)
        cap = max(256, (avail // row_bytes) // 256 * 256)
        tile_n = int(min(2048, cap, _round_up(N, 256)))
    assert tile_n % 256 == 0

    # ---- layout glue: NCHW -> token-major (N, D), pad N to tile multiple ----
    x_flat = jnp.transpose(x, (0, 2, 3, 1)).reshape(N, D)
    n_pad = _round_up(N, tile_n)
    if n_pad != N:
        x_flat = jnp.pad(x_flat, ((0, n_pad - N), (0, 0)))
    grid_n = n_pad // tile_n

    # ---- hoisted codebook constants (computed once, constant/chunked index_maps) ----
    embf = emb.astype(jnp.float32)
    e2h = 0.5 * jnp.sum(embf * embf, axis=0, keepdims=True)          # (1, K)
    if Kp != K:
        emb_p = jnp.pad(embf, ((0, 0), (0, Kp - K)))                 # zero columns
        e2h_p = jnp.pad(e2h, ((0, 0), (0, Kp - K)), constant_values=jnp.inf)
    else:
        emb_p, e2h_p = embf, e2h
    embt_p = emb_p.T                                                 # (Kp, D) f32
    emb_in = emb_p.astype(jnp.bfloat16) if use_bf16_scoring else emb_p
    liota = jnp.arange(k_tile, dtype=jnp.float32).reshape(1, k_tile)  # hoisted iota

    kernel = functools.partial(
        _vq_kernel,
        n_valid=N,
        k_tile=k_tile,
        use_bf16_scoring=use_bf16_scoring,
        l2_from_scores=(D >= 128),
    )

    q_flat, idx_col, l2_part = pl.pallas_call(
        kernel,
        out_shape=(
            jax.ShapeDtypeStruct((n_pad, D), x.dtype),
            jax.ShapeDtypeStruct((n_pad, 1), jnp.int32),
            jax.ShapeDtypeStruct((grid_n, 1), jnp.float32),
        ),
        grid_spec=pltpu.PrefetchScalarGridSpec(
            num_scalar_prefetch=0,
            grid=(grid_n, grid_k),
            in_specs=[
                pl.BlockSpec((tile_n, D), lambda i, k: (i, 0)),   # x tile (resident over k)
                pl.BlockSpec((D, k_tile), lambda i, k: (0, k)),   # codebook chunk
                pl.BlockSpec((k_tile, D), lambda i, k: (k, 0)),   # codebook^T chunk
                pl.BlockSpec((1, k_tile), lambda i, k: (0, k)),   # 0.5*||e||^2 chunk
                pl.BlockSpec((1, k_tile), lambda i, k: (0, 0)),   # constant local iota
            ],
            out_specs=[
                pl.BlockSpec((tile_n, D), lambda i, k: (i, 0)),
                pl.BlockSpec((tile_n, 1), lambda i, k: (i, 0)),
                pl.BlockSpec((1, 1), lambda i, k: (i, 0)),
            ],
            scratch_shapes=[
                pltpu.VMEM((tile_n, 1), jnp.float32),   # running min score
                pltpu.VMEM((tile_n, 1), jnp.int32),     # running argmin
                pltpu.VMEM((tile_n, D), jnp.float32),   # running best row
            ],
        ),
        compiler_params=pltpu.CompilerParams(
            dimension_semantics=("parallel", "arbitrary"),
            vmem_limit_bytes=int(budget),
        ),
    )(x_flat, emb_in, embt_p, e2h_p, liota)

    q_flat = q_flat[:N]
    idx_flat = idx_col[:N, 0]

    # back to NCHW / (B, H, W) — layout glue (drop if the model carries NHWC)
    quantize = jnp.transpose(q_flat.reshape(B, H, W, D), (0, 3, 1, 2))
    emd_ind = idx_flat.reshape(B, H, W)

    # l2_diff = mean((quantize - x)^2) from in-kernel partial sums (no extra HBM pass)
    l2_diff = jnp.sum(l2_part) / jnp.float32(N * D)
    return quantize, l2_diff, emd_ind


def _reference(x, emb):
    # pure-JAX reference of NearestEmbedFunc.forward + Quantize.forward
    B, D, H, W = x.shape
    xt = jnp.transpose(x, (0, 2, 3, 1)).reshape(-1, D)               # (N, D)
    dist = jnp.sum((xt[:, :, None] - emb[None, :, :]) ** 2, axis=1)  # (N, K)
    idx = jnp.argmin(dist, axis=-1)                                  # (N,)
    q = emb.T[idx]                                                   # (N, D)
    quantize = jnp.transpose(q.reshape(B, H, W, D), (0, 3, 1, 2))
    l2_diff = jnp.mean((quantize - x) ** 2)
    return quantize, l2_diff, idx.reshape(B, H, W)


if __name__ == "__main__":
    key = jax.random.PRNGKey(0)
    kx, kw = jax.random.split(key)

    B, D, H, W = 2, 4, 16, 16       # batch, emb_dim (channels), spatial
    K = 16                          # num_embeddings

    x = jax.random.normal(kx, (B, D, H, W), dtype=jnp.float32)
    # deterministic init matching torch.rand(embeddings_dim, num_embeddings)
    emb = jax.random.uniform(kw, (D, K), dtype=jnp.float32)

    quantize, l2_diff, emd_ind = quantize_forward(x, emb)
    jax.block_until_ready((quantize, l2_diff, emd_ind))

    q_ref, l2_ref, idx_ref = _reference(x, emb)
    assert quantize.shape == (B, D, H, W)
    assert emd_ind.shape == (B, H, W)
    assert jnp.allclose(quantize, q_ref, atol=1e-4)
    assert jnp.allclose(l2_diff, l2_ref, atol=1e-4)
    assert jnp.array_equal(emd_ind, idx_ref)

    print("KERNEL_OK")
</pallas_src>

<mosaic_0001>
module attributes {stable_mosaic.version = 11 : i64} {
  func.func @_vq_kernel(%arg0: i32, %arg1: i32, %arg2: memref<512x4xf32, #tpu.memory_space<vmem>>, %arg3: memref<4x256xf32, #tpu.memory_space<vmem>>, %arg4: memref<256x4xf32, #tpu.memory_space<vmem>>, %arg5: memref<1x256xf32, #tpu.memory_space<vmem>>, %arg6: memref<1x256xf32, #tpu.memory_space<vmem>>, %arg7: memref<512x4xf32, #tpu.memory_space<vmem>>, %arg8: memref<512x1xi32, #tpu.memory_space<vmem>>, %arg9: memref<1x1xf32, #tpu.memory_space<vmem>>, %arg10: memref<512x1xf32, #tpu.memory_space<vmem>>, %arg11: memref<512x1xi32, #tpu.memory_space<vmem>>, %arg12: memref<512x4xf32, #tpu.memory_space<vmem>>) attributes {dimension_semantics = [#tpu.dimension_semantics<parallel>, #tpu.dimension_semantics<arbitrary>], iteration_bounds = array<i64: 1, 1>, scalar_prefetch = 0 : i64, scratch_operands = 3 : i64, tpu.core_type = #tpu.core_type<tc>, window_params = [{transform_indices = @transform_0, window_bounds = array<i64: 512, 4>}, {transform_indices = @transform_1, window_bounds = array<i64: 4, 256>}, {transform_indices = @transform_2, window_bounds = array<i64: 256, 4>}, {transform_indices = @transform_3, window_bounds = array<i64: 1, 256>}, {pipeline_mode = #tpu.pipeline_mode<synchronous>, transform_indices = @transform_4, window_bounds = array<i64: 1, 256>}, {transform_indices = @transform_5, window_bounds = array<i64: 512, 4>}, {transform_indices = @transform_6, window_bounds = array<i64: 512, 1>}, {transform_indices = @transform_7, window_bounds = array<i64: 1, 1>}]} {
    %c0_i32 = arith.constant 0 : i32
    %0 = arith.cmpi eq, %arg1, %c0_i32 : i32
    %1 = arith.extui %0 : i1 to i32
    %c0_i32_0 = arith.constant 0 : i32
    %2 = arith.cmpi ne, %1, %c0_i32_0 : i32
    scf.if %2 {
      %cst_28 = arith.constant 0x7F800000 : f32
      %46 = vector.broadcast %cst_28 : f32 to vector<512x1xf32>
      %c0_29 = arith.constant 0 : index
      %c0_30 = arith.constant 0 : index
      %47 = vector.load %arg10[%c0_29, %c0_30] : memref<512x1xf32, #tpu.memory_space<vmem>>, vector<512x1xf32>
      tpu.vector_store %arg10[%c0_29, %c0_30], %46 {strides = array<i32>} : memref<512x1xf32, #tpu.memory_space<vmem>>, vector<512x1xf32>,
      %c0_i32_31 = arith.constant 0 : i32
      %48 = vector.broadcast %c0_i32_31 : i32 to vector<512x1xi32>
      %c0_32 = arith.constant 0 : index
      %c0_33 = arith.constant 0 : index
      %49 = vector.load %arg11[%c0_32, %c0_33] : memref<512x1xi32, #tpu.memory_space<vmem>>, vector<512x1xi32>
      tpu.vector_store %arg11[%c0_32, %c0_33], %48 {strides = array<i32>} : memref<512x1xi32, #tpu.memory_space<vmem>>, vector<512x1xi32>,
      %cst_34 = arith.constant 0.000000e+00 : f32
      %50 = vector.broadcast %cst_34 : f32 to vector<512x4xf32>
      %c0_35 = arith.constant 0 : index
      %c0_36 = arith.constant 0 : index
      %51 = vector.load %arg12[%c0_35, %c0_36] : memref<512x4xf32, #tpu.memory_space<vmem>>, vector<512x4xf32>
      tpu.vector_store %arg12[%c0_35, %c0_36], %50 {strides = array<i32>} : memref<512x4xf32, #tpu.memory_space<vmem>>, vector<512x4xf32>,
    } else {
    }
    %c0 = arith.constant 0 : index
    %c0_1 = arith.constant 0 : index
    %3 = vector.load %arg2[%c0, %c0_1] : memref<512x4xf32, #tpu.memory_space<vmem>>, vector<512x4xf32>
    %c0_2 = arith.constant 0 : index
    %c0_3 = arith.constant 0 : index
    %4 = vector.load %arg3[%c0_2, %c0_3] : memref<4x256xf32, #tpu.memory_space<vmem>>, vector<4x256xf32>
    %cst = arith.constant dense<0.000000e+00> : vector<512x256xf32>
    %5 = tpu.matmul %3, %4, %cst {dimension_numbers = #tpu.dot_dimension_numbers<[1], [0], [0], [1], [0, 0, 1, 1], [], []>} : vector<512x4xf32>, vector<4x256xf32>, vector<512x256xf32> -> vector<512x256xf32>
    %c0_4 = arith.constant 0 : index
    %c0_5 = arith.constant 0 : index
    %6 = vector.load %arg5[%c0_4, %c0_5] : memref<1x256xf32, #tpu.memory_space<vmem>>, vector<1x256xf32>
    %7 = vector.broadcast %6 : vector<1x256xf32> to vector<512x256xf32>
    %8 = arith.subf %7, %5 : vector<512x256xf32>
    %c0_6 = arith.constant 0 : index
    %c0_7 = arith.constant 0 : index
    %9 = vector.load %arg6[%c0_6, %c0_7] : memref<1x256xf32, #tpu.memory_space<vmem>>, vector<1x256xf32>
    %cst_8 = arith.constant dense<0x7F800000> : vector<512xf32>
    %10 = vector.multi_reduction <minimumf>, %8, %cst_8 [1] : vector<512x256xf32> to vector<512xf32>
    %11 = vector.shape_cast %10 : vector<512xf32> to vector<512x1xf32>
    %12 = vector.broadcast %11 : vector<512x1xf32> to vector<512x256xf32>
    %13 = arith.cmpf ole, %8, %12 : vector<512x256xf32>
    %cst_9 = arith.constant 2.560000e+02 : f32
    %14 = vector.shape_cast %9 : vector<1x256xf32> to vector<1x256xf32>
    %15 = vector.broadcast %14 : vector<1x256xf32> to vector<512x256xf32>
    %16 = vector.broadcast %cst_9 : f32 to vector<512x256xf32>
    %17 = arith.select %13, %15, %16 : vector<512x256xi1>, vector<512x256xf32>
    %cst_10 = arith.constant dense<0x7F800000> : vector<512xf32>
    %18 = vector.multi_reduction <minimumf>, %17, %cst_10 [1] : vector<512x256xf32> to vector<512xf32>
    %19 = vector.shape_cast %18 : vector<512xf32> to vector<512x1xf32>
    %20 = vector.broadcast %9 : vector<1x256xf32> to vector<512x256xf32>
    %21 = vector.broadcast %19 : vector<512x1xf32> to vector<512x256xf32>
    %22 = arith.cmpf oeq, %20, %21 : vector<512x256xf32>
    %23 = arith.extui %22 : vector<512x256xi1> to vector<512x256xi32>
    %24 = arith.sitofp %23 : vector<512x256xi32> to vector<512x256xf32>
    %c0_11 = arith.constant 0 : index
    %c0_12 = arith.constant 0 : index
    %25 = vector.load %arg4[%c0_11, %c0_12] : memref<256x4xf32, #tpu.memory_space<vmem>>, vector<256x4xf32>
    %cst_13 = arith.constant dense<0.000000e+00> : vector<512x4xf32>
    %26 = tpu.matmul %24, %25, %cst_13 {dimension_numbers = #tpu.dot_dimension_numbers<[1], [0], [0], [1], [0, 0, 1, 1], [], []>} : vector<512x256xf32>, vector<256x4xf32>, vector<512x4xf32> -> vector<512x4xf32>
    %27 = arith.fptosi %19 : vector<512x1xf32> to vector<512x1xi32>
    %c256_i32 = arith.constant 256 : i32
    %28 = arith.muli %arg1, %c256_i32 : i32
    %29 = vector.broadcast %28 : i32 to vector<512x1xi32>
    %30 = arith.addi %27, %29 : vector<512x1xi32>
    %c0_14 = arith.constant 0 : index
    %c0_15 = arith.constant 0 : index
    %31 = vector.load %arg10[%c0_14, %c0_15] : memref<512x1xf32, #tpu.memory_space<vmem>>, vector<512x1xf32>
    %32 = arith.cmpf olt, %11, %31 : vector<512x1xf32>
    %33 = arith.select %32, %11, %31 : vector<512x1xi1>, vector<512x1xf32>
    %c0_16 = arith.constant 0 : index
    %c0_17 = arith.constant 0 : index
    %34 = vector.load %arg10[%c0_16, %c0_17] : memref<512x1xf32, #tpu.memory_space<vmem>>, vector<512x1xf32>
    tpu.vector_store %arg10[%c0_16, %c0_17], %33 {strides = array<i32>} : memref<512x1xf32, #tpu.memory_space<vmem>>, vector<512x1xf32>,
    %c0_18 = arith.constant 0 : index
    %c0_19 = arith.constant 0 : index
    %35 = vector.load %arg11[%c0_18, %c0_19] : memref<512x1xi32, #tpu.memory_space<vmem>>, vector<512x1xi32>
    %36 = arith.select %32, %30, %35 : vector<512x1xi1>, vector<512x1xi32>
    %c0_20 = arith.constant 0 : index
    %c0_21 = arith.constant 0 : index
    %37 = vector.load %arg11[%c0_20, %c0_21] : memref<512x1xi32, #tpu.memory_space<vmem>>, vector<512x1xi32>
    tpu.vector_store %arg11[%c0_20, %c0_21], %36 {strides = array<i32>} : memref<512x1xi32, #tpu.memory_space<vmem>>, vector<512x1xi32>,
    %c0_22 = arith.constant 0 : index
    %c0_23 = arith.constant 0 : index
    %38 = vector.load %arg12[%c0_22, %c0_23] : memref<512x4xf32, #tpu.memory_space<vmem>>, vector<512x4xf32>
    %39 = vector.shape_cast %32 : vector<512x1xi1> to vector<512x1xi1>
    %40 = vector.broadcast %39 : vector<512x1xi1> to vector<512x4xi1>
    %41 = arith.select %40, %26, %38 : vector<512x4xi1>, vector<512x4xf32>
    %c0_24 = arith.constant 0 : index
    %c0_25 = arith.constant 0 : index
    %42 = vector.load %arg12[%c0_24, %c0_25] : memref<512x4xf32, #tpu.memory_space<vmem>>, vector<512x4xf32>
    tpu.vector_store %arg12[%c0_24, %c0_25], %41 {strides = array<i32>} : memref<512x4xf32, #tpu.memory_space<vmem>>, vector<512x4xf32>,
    %c0_i32_26 = arith.constant 0 : i32
    %43 = arith.cmpi eq, %arg1, %c0_i32_26 : i32
    %44 = arith.extui %43 : i1 to i32
    %c0_i32_27 = arith.constant 0 : i32
    %45 = arith.cmpi ne, %44, %c0_i32_27 : i32
    scf.if %45 {
      %c0_28 = arith.constant 0 : index
      %c0_29 = arith.constant 0 : index
      %46 = vector.load %arg12[%c0_28, %c0_29] : memref<512x4xf32, #tpu.memory_space<vmem>>, vector<512x4xf32>
      %c0_30 = arith.constant 0 : index
      %c0_31 = arith.constant 0 : index
      %47 = vector.load %arg7[%c0_30, %c0_31] : memref<512x4xf32, #tpu.memory_space<vmem>>, vector<512x4xf32>
      tpu.vector_store %arg7[%c0_30, %c0_31], %46 {strides = array<i32>} : memref<512x4xf32, #tpu.memory_space<vmem>>, vector<512x4xf32>,
      %c0_32 = arith.constant 0 : index
      %c0_33 = arith.constant 0 : index
      %48 = vector.load %arg11[%c0_32, %c0_33] : memref<512x1xi32, #tpu.memory_space<vmem>>, vector<512x1xi32>
      %c0_34 = arith.constant 0 : index
      %c0_35 = arith.constant 0 : index
      %49 = vector.load %arg8[%c0_34, %c0_35] : memref<512x1xi32, #tpu.memory_space<vmem>>, vector<512x1xi32>
      tpu.vector_store %arg8[%c0_34, %c0_35], %48 {strides = array<i32>} : memref<512x1xi32, #tpu.memory_space<vmem>>, vector<512x1xi32>,
      %c512_i32 = arith.constant 512 : i32
      %50 = arith.muli %arg0, %c512_i32 : i32
      %51 = tpu.iota {dimensions = array<i32: 0>} : vector<512x1xi32>
      %52 = vector.broadcast %50 : i32 to vector<512x1xi32>
      %53 = arith.addi %52, %51 : vector<512x1xi32>
      %c512_i32_36 = arith.constant 512 : i32
      %54 = vector.broadcast %c512_i32_36 : i32 to vector<512x1xi32>
      %55 = arith.cmpi slt, %53, %54 : vector<512x1xi32>
      %56 = arith.extui %55 : vector<512x1xi1> to vector<512x1xi32>
      %57 = arith.sitofp %56 : vector<512x1xi32> to vector<512x1xf32>
      %58 = arith.subf %46, %3 : vector<512x4xf32>
      %59 = arith.mulf %58, %58 : vector<512x4xf32>
      %60 = vector.broadcast %57 : vector<512x1xf32> to vector<512x4xf32>
      %61 = arith.mulf %59, %60 : vector<512x4xf32>
      %cst_37 = arith.constant dense<0.000000e+00> : vector<512xf32>
      %62 = vector.multi_reduction <add>, %61, %cst_37 [1] : vector<512x4xf32> to vector<512xf32>
      %63 = vector.shape_cast %62 : vector<512xf32> to vector<512x1xf32>
      %cst_38 = arith.constant dense<0.000000e+00> : vector<1xf32>
      %64 = vector.multi_reduction <add>, %63, %cst_38 [0] : vector<512x1xf32> to vector<1xf32>
      %65 = vector.shape_cast %64 : vector<1xf32> to vector<1x1xf32>
      %c0_39 = arith.constant 0 : index
      %c0_40 = arith.constant 0 : index
      %66 = vector.load %arg9[%c0_39, %c0_40] : memref<1x1xf32, #tpu.memory_space<vmem>>, vector<1x1xf32>
      tpu.vector_store %arg9[%c0_39, %c0_40], %65 {strides = array<i32>} : memref<1x1xf32, #tpu.memory_space<vmem>>, vector<1x1xf32>,
    } else {
    }
    return
  }
  func.func @transform_0(%arg0: i32, %arg1: i32) -> (i32, i32) {
    %c0_i32 = arith.constant 0 : i32
    %c0_i32_0 = arith.constant 0 : i32
    return %arg0, %c0_i32 : i32, i32
  }
  func.func @transform_1(%arg0: i32, %arg1: i32) -> (i32, i32) {
    %c0_i32 = arith.constant 0 : i32
    %c0_i32_0 = arith.constant 0 : i32
    return %c0_i32, %arg1 : i32, i32
  }
  func.func @transform_2(%arg0: i32, %arg1: i32) -> (i32, i32) {
    %c0_i32 = arith.constant 0 : i32
    %c0_i32_0 = arith.constant 0 : i32
    return %arg1, %c0_i32 : i32, i32
  }
  func.func @transform_3(%arg0: i32, %arg1: i32) -> (i32, i32) {
    %c0_i32 = arith.constant 0 : i32
    %c0_i32_0 = arith.constant 0 : i32
    return %c0_i32, %arg1 : i32, i32
  }
  func.func @transform_4(%arg0: i32, %arg1: i32) -> (i32, i32) {
    %c0_i32 = arith.constant 0 : i32
    %c0_i32_0 = arith.constant 0 : i32
    %c0_i32_1 = arith.constant 0 : i32
    return %c0_i32, %c0_i32_0 : i32, i32
  }
  func.func @transform_5(%arg0: i32, %arg1: i32) -> (i32, i32) {
    %c0_i32 = arith.constant 0 : i32
    %c0_i32_0 = arith.constant 0 : i32
    return %arg0, %c0_i32 : i32, i32
  }
  func.func @transform_6(%arg0: i32, %arg1: i32) -> (i32, i32) {
    %c0_i32 = arith.constant 0 : i32
    %c0_i32_0 = arith.constant 0 : i32
    return %arg0, %c0_i32 : i32, i32
  }
  func.func @transform_7(%arg0: i32, %arg1: i32) -> (i32, i32) {
    %c0_i32 = arith.constant 0 : i32
    %c0_i32_0 = arith.constant 0 : i32
    return %arg0, %c0_i32 : i32, i32
  }
}

</mosaic_0001>

<llo_original>
// kernel: squeeze.1
$region0: #{squeeze.1}
  %s0 = inlined_call_operand.vmem [shape: s32[512], index: 0, kind: input, shape index: {}]
  %s1 = inlined_call_operand.hbm [shape: s32[2,16,16], index: 1, kind: output, shape index: {}]
  $region1: #{squeeze.1} parent=0
    #allocation0 [shape = 'u8[16384]{0}', space=vmem, size = 0x4000, scoped, tag = 'operand span for operand 1']
    #allocation1 [shape = 's32[1]{0}', space=sflag, size = 0x4, scoped, tag = 'scoped memory for squeeze.1']
    #allocation2 [shape = 'u8[4096]{0}', space=vmem, size = 0x1000, scoped, tag = 'scoped mem for input reshape']
    %2 = vsyncpa [#allocation1], 0
    %s4 = sshll.u32 1, 4
    %s5 = ssub.s32 %s4, 1
    %v6 = vld [vmem:[%s0] sm:%s5]
    %7 = vst [vmem:[#allocation2] sm:%s5] %v6
    %v8 = vld [vmem:[#allocation2] sm:$0xf]
    %vm9 = vcmask 130048
    %10 = vst.msk [vmem:[#allocation0] ss:$8 sm:$0xf] %vm9, %v8
    %v11 = vld [vmem:[#allocation2] sm:$0xf]
    %12 = vrot.lane.b32.xlu0 %v11, 112
    %v13 = vpop.permute.xlu0 %12
    %vm14 = vcmask 130048
    %s15 = scalar_lea.vmem [#allocation0], 1
    %16 = vst.msk [vmem:[%s15] ss:$8 sm:$0xf] %vm14, %v13
    %v17 = vld [vmem:[#allocation2] sm:$0xf]
    %18 = vrot.lane.b32.xlu0 %v17, 96
    %v19 = vpop.permute.xlu0 %18
    %vm20 = vcmask 130048
    %s21 = scalar_lea.vmem [#allocation0], 2
    %22 = vst.msk [vmem:[%s21] ss:$8 sm:$0xf] %vm20, %v19
    %v23 = vld [vmem:[#allocation2] sm:$0xf]
    %24 = vrot.lane.b32.xlu0 %v23, 80
    %v25 = vpop.permute.xlu0 %24
    %vm26 = vcmask 130048
    %s27 = scalar_lea.vmem [#allocation0], 3
    %28 = vst.msk [vmem:[%s27] ss:$8 sm:$0xf] %vm26, %v25
    %v29 = vld [vmem:[#allocation2] sm:$0xf]
    %30 = vrot.lane.b32.xlu0 %v29, 64
    %v31 = vpop.permute.xlu0 %30
    %vm32 = vcmask 130048
    %s33 = scalar_lea.vmem [#allocation0], 4
    %34 = vst.msk [vmem:[%s33] ss:$8 sm:$0xf] %vm32, %v31
    %v35 = vld [vmem:[#allocation2] sm:$0xf]
    %36 = vrot.lane.b32.xlu0 %v35, 48
    %v37 = vpop.permute.xlu0 %36
    %vm38 = vcmask 130048
    %s39 = scalar_lea.vmem [#allocation0], 5
    %40 = vst.msk [vmem:[%s39] ss:$8 sm:$0xf] %vm38, %v37
    %v41 = vld [vmem:[#allocation2] sm:$0xf]
    %42 = vrot.lane.b32.xlu0 %v41, 32
    %v43 = vpop.permute.xlu0 %42
    %vm44 = vcmask 130048
    %s45 = scalar_lea.vmem [#allocation0], 6
    %46 = vst.msk [vmem:[%s45] ss:$8 sm:$0xf] %vm44, %v43
    %v47 = vld [vmem:[#allocation2] sm:$0xf]
    %48 = vrot.lane.b32.xlu0 %v47, 16
    %v49 = vpop.permute.xlu0 %48
    %vm50 = vcmask 130048
    %s51 = scalar_lea.vmem [#allocation0], 7
    %52 = vst.msk [vmem:[%s51] ss:$8 sm:$0xf] %vm50, %v49
    %s54 = ssub.s32 512, 512
    %55 = vsyncadd [#allocation1], %s54
    %s57 = sshll.u32 [#allocation0], 4
    %s58 = int_to_ptr.vmem [resolvable:$true] %s57
    %60 = dma.vmem_to_hbm [thread:$0]  %s58, 512, %s1, [#allocation1]
    %61 = dma.done [#allocation1], 512
    %62 = vsyncpa [#allocation1], 1

// kernel: quantize_forward.1
$region0: #{quantize_forward.1}
  #allocation0 [shape = 'u32[]', space=smem, size = 0x4, offset = 0x4, fixed_abs, tag = 'smem constant byte address 0x4 - core index']
  #allocation1 [shape = 'u32[144,128]{1,0:T(1,128)}', space=vmem, size = 0x12000, scoped, tag = 'internal scratch']
  #allocation2 [shape = 'f32[512,1]{1,0:T(8,128)}', space=vmem, size = 0x40000, scoped, tag = 'scratch operand']
  #allocation3 [shape = 's32[512,1]{1,0:T(8,128)}', space=vmem, size = 0x40000, scoped, tag = 'scratch operand']
  #allocation4 [shape = 'f32[512,4]{1,0:T(8,128)}', space=vmem, size = 0x40000, scoped, tag = 'scratch operand']
  %s0 = inlined_call_operand.vmem [shape: f32[512,4], index: 0, kind: input, shape index: {}]
  %s1 = inlined_call_operand.vmem [shape: f32[4,256], index: 1, kind: input, shape index: {}]
  %s2 = inlined_call_operand.vmem [shape: f32[256,4], index: 2, kind: input, shape index: {}]
  %s3 = inlined_call_operand.vmem [shape: f32[1,256], index: 3, kind: input, shape index: {}]
  %s4 = inlined_call_operand.vmem [shape: f32[1,256], index: 4, kind: input, shape index: {}]
  %s5 = inlined_call_operand.vmem [shape: f32[512,4], index: 5, kind: output, shape index: {0}]
  %s6 = inlined_call_operand.vmem [shape: s32[512,1], index: 6, kind: output, shape index: {1}]
  %s7 = inlined_call_operand.hbm [shape: f32[1,1], index: 7, kind: output, shape index: {2}]
  %8 = xla_tuple %s5, %s6, %s7
  %s9 = sld [smem:[#allocation0]]
  $region54: #{quantize_forward.1} parent=0
    _
  %s11 = ssub.s32 1, %s9
  %s12 = scalar_select 0, %s11, %s9
  $region1: #{quantize_forward.1} parent=0
    #allocation5 [shape = 'u8[512]{0}', space=vmem, size = 0x400, scoped, tag = 'output window, operand 2, single buffered']
    #allocation6 [shape = 's32[1]{0}', space=sflag, size = 0x4, scoped, tag = 'scoped memory for quantize_forward.1']
    %13 = vsyncpa [#allocation6], 0
    // Predicated region
    $region2: #{quantize_forward.1} parent=1 // pred_check
      _
    $region3: #{quantize_forward.1} parent=1 // pred_check_branch
      %15 = sbr.rel (0) target = $region5
    $region4: #{quantize_forward.1} parent=1 // pred_region
      _
    $region5: #{quantize_forward.1} parent=1 // pred_fallthru
      _
    // Predicated region
    $region6: #{quantize_forward.1} parent=1 // pred_check
      _
    $region7: #{quantize_forward.1} parent=1 // pred_check_branch
      %17 = sbr.rel (0) target = $region9
    $region8: #{quantize_forward.1} parent=1 // pred_region
      _
    $region9: #{quantize_forward.1} parent=1 // pred_fallthru
      _
    // Predicated region
    $region10: #{quantize_forward.1} parent=1 // pred_check
      _
    $region11: #{quantize_forward.1} parent=1 // pred_check_branch
      %19 = sbr.rel (0) target = $region13
    $region12: #{quantize_forward.1} parent=1 // pred_region
      _
    $region13: #{quantize_forward.1} parent=1 // pred_fallthru
      _
    // Predicated region
    $region14: #{quantize_forward.1} parent=1 // pred_check
      _
    $region15: #{quantize_forward.1} parent=1 // pred_check_branch
      %21 = sbr.rel (0) target = $region17
    $region16: #{quantize_forward.1} parent=1 // pred_region
      _
    $region17: #{quantize_forward.1} parent=1 // pred_fallthru
      _
    // Predicated region
    $region18: #{quantize_forward.1} parent=1 // pred_check
      _
    $region19: #{quantize_forward.1} parent=1 // pred_check_branch
      %23 = sbr.rel (0) target = $region21
    $region20: #{quantize_forward.1} parent=1 // pred_region
      _
    $region21: #{quantize_forward.1} parent=1 // pred_fallthru
      _
    %p24 = scmp.eq.s32.totalorder 0, 0
    // Predicated region
    $region22: #{quantize_forward.1} parent=1 // pred_check
      %p25 = pneg %p24
    $region23: #{quantize_forward.1} parent=1 // pred_check_branch
      %27 = sbr.rel (%p25) target = $region25
    $region24: #{quantize_forward.1} parent=1 // pred_region
      %vm28 = vcmask 7168
      %29 = vst.msk [vmem:[#allocation2] sm:$0xff] %vm28, inf
      %30 = vst.msk [vmem:[#allocation2 + $0x8] sm:$0xff] %vm28, inf
      %31 = vst.msk [vmem:[#allocation2 + $0x10] sm:$0xff] %vm28, inf
      %32 = vst.msk [vmem:[#allocation2 + $0x18] sm:$0xff] %vm28, inf
      %33 = vst.msk [vmem:[#allocation2 + $0x20] sm:$0xff] %vm28, inf
      %34 = vst.msk [vmem:[#allocation2 + $0x28] sm:$0xff] %vm28, inf
      %35 = vst.msk [vmem:[#allocation2 + $0x30] sm:$0xff] %vm28, inf
      %36 = vst.msk [vmem:[#allocation2 + $0x38] sm:$0xff] %vm28, inf
      %37 = vst.msk [vmem:[#allocation2 + $0x40] sm:$0xff] %vm28, inf
      %38 = vst.msk [vmem:[#allocation2 + $0x48] sm:$0xff] %vm28, inf
      %39 = vst.msk [vmem:[#allocation2 + $0x50] sm:$0xff] %vm28, inf
      %40 = vst.msk [vmem:[#allocation2 + $0x58] sm:$0xff] %vm28, inf
      %41 = vst.msk [vmem:[#allocation2 + $0x60] sm:$0xff] %vm28, inf
      %42 = vst.msk [vmem:[#allocation2 + $0x68] sm:$0xff] %vm28, inf
      %43 = vst.msk [vmem:[#allocation2 + $0x70] sm:$0xff] %vm28, inf
      %44 = vst.msk [vmem:[#allocation2 + $0x78] sm:$0xff] %vm28, inf
      %45 = vst.msk [vmem:[#allocation2 + $0x80] sm:$0xff] %vm28, inf
      %46 = vst.msk [vmem:[#allocation2 + $0x88] sm:$0xff] %vm28, inf
      %47 = vst.msk [vmem:[#allocation2 + $0x90] sm:$0xff] %vm28, inf
      %48 = vst.msk [vmem:[#allocation2 + $0x98] sm:$0xff] %vm28, inf
      %49 = vst.msk [vmem:[#allocation2 + $0xa0] sm:$0xff] %vm28, inf
      %50 = vst.msk [vmem:[#allocation2 + $0xa8] sm:$0xff] %vm28, inf
      %51 = vst.msk [vmem:[#allocation2 + $0xb0] sm:$0xff] %vm28, inf
      %52 = vst.msk [vmem:[#allocation2 + $0xb8] sm:$0xff] %vm28, inf
      %53 = vst.msk [vmem:[#allocation2 + $0xc0] sm:$0xff] %vm28, inf
      %54 = vst.msk [vmem:[#allocation2 + $0xc8] sm:$0xff] %vm28, inf
      %55 = vst.msk [vmem:[#allocation2 + $0xd0] sm:$0xff] %vm28, inf
      %56 = vst.msk [vmem:[#allocation2 + $0xd8] sm:$0xff] %vm28, inf
      %57 = vst.msk [vmem:[#allocation2 + $0xe0] sm:$0xff] %vm28, inf
      %58 = vst.msk [vmem:[#allocation2 + $0xe8] sm:$0xff] %vm28, inf
      %59 = vst.msk [vmem:[#allocation2 + $0xf0] sm:$0xff] %vm28, inf
      %60 = vst.msk [vmem:[#allocation2 + $0xf8] sm:$0xff] %vm28, inf
      %61 = vst.msk [vmem:[#allocation2 + $0x100] sm:$0xff] %vm28, inf
      %62 = vst.msk [vmem:[#allocation2 + $0x108] sm:$0xff] %vm28, inf
      %63 = vst.msk [vmem:[#allocation2 + $0x110] sm:$0xff] %vm28, inf
      %64 = vst.msk [vmem:[#allocation2 + $0x118] sm:$0xff] %vm28, inf
      %65 = vst.msk [vmem:[#allocation2 + $0x120] sm:$0xff] %vm28, inf
      %66 = vst.msk [vmem:[#allocation2 + $0x128] sm:$0xff] %vm28, inf
      %67 = vst.msk [vmem:[#allocation2 + $0x130] sm:$0xff] %vm28, inf
      %68 = vst.msk [vmem:[#allocation2 + $0x138] sm:$0xff] %vm28, inf
      %69 = vst.msk [vmem:[#allocation2 + $0x140] sm:$0xff] %vm28, inf
      %70 = vst.msk [vmem:[#allocation2 + $0x148] sm:$0xff] %vm28, inf
      %71 = vst.msk [vmem:[#allocation2 + $0x150] sm:$0xff] %vm28, inf
      %72 = vst.msk [vmem:[#allocation2 + $0x158] sm:$0xff] %vm28, inf
      %73 = vst.msk [vmem:[#allocation2 + $0x160] sm:$0xff] %vm28, inf
      %74 = vst.msk [vmem:[#allocation2 + $0x168] sm:$0xff] %vm28, inf
      %75 = vst.msk [vmem:[#allocation2 + $0x170] sm:$0xff] %vm28, inf
      %76 = vst.msk [vmem:[#allocation2 + $0x178] sm:$0xff] %vm28, inf
      %77 = vst.msk [vmem:[#allocation2 + $0x180] sm:$0xff] %vm28, inf
      %78 = vst.msk [vmem:[#allocation2 + $0x188] sm:$0xff] %vm28, inf
      %79 = vst.msk [vmem:[#allocation2 + $0x190] sm:$0xff] %vm28, inf
      %80 = vst.msk [vmem:[#allocation2 + $0x198] sm:$0xff] %vm28, inf
      %81 = vst.msk [vmem:[#allocation2 + $0x1a0] sm:$0xff] %vm28, inf
      %82 = vst.msk [vmem:[#allocation2 + $0x1a8] sm:$0xff] %vm28, inf
      %83 = vst.msk [vmem:[#allocation2 + $0x1b0] sm:$0xff] %vm28, inf
      %84 = vst.msk [vmem:[#allocation2 + $0x1b8] sm:$0xff] %vm28, inf
      %85 = vst.msk [vmem:[#allocation2 + $0x1c0] sm:$0xff] %vm28, inf
      %86 = vst.msk [vmem:[#allocation2 + $0x1c8] sm:$0xff] %vm28, inf
      %87 = vst.msk [vmem:[#allocation2 + $0x1d0] sm:$0xff] %vm28, inf
      %88 = vst.msk [vmem:[#allocation2 + $0x1d8] sm:$0xff] %vm28, inf
      %89 = vst.msk [vmem:[#allocation2 + $0x1e0] sm:$0xff] %vm28, inf
      %90 = vst.msk [vmem:[#allocation2 + $0x1e8] sm:$0xff] %vm28, inf
      %91 = vst.msk [vmem:[#allocation2 + $0x1f0] sm:$0xff] %vm28, inf
      %92 = vst.msk [vmem:[#allocation2 + $0x1f8] sm:$0xff] %vm28, inf
      %93 = vst.msk [vmem:[#allocation3] sm:$0xff] %vm28, 0
      %94 = vst.msk [vmem:[#allocation3 + $0x8] sm:$0xff] %vm28, 0
      %95 = vst.msk [vmem:[#allocation3 + $0x10] sm:$0xff] %vm28, 0
      %96 = vst.msk [vmem:[#allocation3 + $0x18] sm:$0xff] %vm28, 0
      %97 = vst.msk [vmem:[#allocation3 + $0x20] sm:$0xff] %vm28, 0
      %98 = vst.msk [vmem:[#allocation3 + $0x28] sm:$0xff] %vm28, 0
      %99 = vst.msk [vmem:[#allocation3 + $0x30] sm:$0xff] %vm28, 0
      %100 = vst.msk [vmem:[#allocation3 + $0x38] sm:$0xff] %vm28, 0
      %101 = vst.msk [vmem:[#allocation3 + $0x40] sm:$0xff] %vm28, 0
      %102 = vst.msk [vmem:[#allocation3 + $0x48] sm:$0xff] %vm28, 0
      %103 = vst.msk [vmem:[#allocation3 + $0x50] sm:$0xff] %vm28, 0
      %104 = vst.msk [vmem:[#allocation3 + $0x58] sm:$0xff] %vm28, 0
      %105 = vst.msk [vmem:[#allocation3 + $0x60] sm:$0xff] %vm28, 0
      %106 = vst.msk [vmem:[#allocation3 + $0x68] sm:$0xff] %vm28, 0
      %107 = vst.msk [vmem:[#allocation3 + $0x70] sm:$0xff] %vm28, 0
      %108 = vst.msk [vmem:[#allocation3 + $0x78] sm:$0xff] %vm28, 0
      %109 = vst.msk [vmem:[#allocation3 + $0x80] sm:$0xff] %vm28, 0
      %110 = vst.msk [vmem:[#allocation3 + $0x88] sm:$0xff] %vm28, 0
      %111 = vst.msk [vmem:[#allocation3 + $0x90] sm:$0xff] %vm28, 0
      %112 = vst.msk [vmem:[#allocation3 + $0x98] sm:$0xff] %vm28, 0
      %113 = vst.msk [vmem:[#allocation3 + $0xa0] sm:$0xff] %vm28, 0
      %114 = vst.msk [vmem:[#allocation3 + $0xa8] sm:$0xff] %vm28, 0
      %115 = vst.msk [vmem:[#allocation3 + $0xb0] sm:$0xff] %vm28, 0
      %116 = vst.msk [vmem:[#allocation3 + $0xb8] sm:$0xff] %vm28, 0
      %117 = vst.msk [vmem:[#allocation3 + $0xc0] sm:$0xff] %vm28, 0
      %118 = vst.msk [vmem:[#allocation3 + $0xc8] sm:$0xff] %vm28, 0
      %119 = vst.msk [vmem:[#allocation3 + $0xd0] sm:$0xff] %vm28, 0
      %120 = vst.msk [vmem:[#allocation3 + $0xd8] sm:$0xff] %vm28, 0
      %121 = vst.msk [vmem:[#allocation3 + $0xe0] sm:$0xff] %vm28, 0
      %122 = vst.msk [vmem:[#allocation3 + $0xe8] sm:$0xff] %vm28, 0
      %123 = vst.msk [vmem:[#allocation3 + $0xf0] sm:$0xff] %vm28, 0
      %124 = vst.msk [vmem:[#allocation3 + $0xf8] sm:$0xff] %vm28, 0
      %125 = vst.msk [vmem:[#allocation3 + $0x100] sm:$0xff] %vm28, 0
      %126 = vst.msk [vmem:[#allocation3 + $0x108] sm:$0xff] %vm28, 0
      %127 = vst.msk [vmem:[#allocation3 + $0x110] sm:$0xff] %vm28, 0
      %128 = vst.msk [vmem:[#allocation3 + $0x118] sm:$0xff] %vm28, 0
      %129 = vst.msk [vmem:[#allocation3 + $0x120] sm:$0xff] %vm28, 0
      %130 = vst.msk [vmem:[#allocation3 + $0x128] sm:$0xff] %vm28, 0
      %131 = vst.msk [vmem:[#allocation3 + $0x130] sm:$0xff] %vm28, 0
      %132 = vst.msk [vmem:[#allocation3 + $0x138] sm:$0xff] %vm28, 0
      %133 = vst.msk [vmem:[#allocation3 + $0x140] sm:$0xff] %vm28, 0
      %134 = vst.msk [vmem:[#allocation3 + $0x148] sm:$0xff] %vm28, 0
      %135 = vst.msk [vmem:[#allocation3 + $0x150] sm:$0xff] %vm28, 0
      %136 = vst.msk [vmem:[#allocation3 + $0x158] sm:$0xff] %vm28, 0
      %137 = vst.msk [vmem:[#allocation3 + $0x160] sm:$0xff] %vm28, 0
      %138 = vst.msk [vmem:[#allocation3 + $0x168] sm:$0xff] %vm28, 0
      %139 = vst.msk [vmem:[#allocation3 + $0x170] sm:$0xff] %vm28, 0
      %140 = vst.msk [vmem:[#allocation3 + $0x178] sm:$0xff] %vm28, 0
      %141 = vst.msk [vmem:[#allocation3 + $0x180] sm:$0xff] %vm28, 0
      %142 = vst.msk [vmem:[#allocation3 + $0x188] sm:$0xff] %vm28, 0
      %143 = vst.msk [vmem:[#allocation3 + $0x190] sm:$0xff] %vm28, 0
      %144 = vst.msk [vmem:[#allocation3 + $0x198] sm:$0xff] %vm28, 0
      %145 = vst.msk [vmem:[#allocation3 + $0x1a0] sm:$0xff] %vm28, 0
      %146 = vst.msk [vmem:[#allocation3 + $0x1a8] sm:$0xff] %vm28, 0
      %147 = vst.msk [vmem:[#allocation3 + $0x1b0] sm:$0xff] %vm28, 0
      %148 = vst.msk [vmem:[#allocation3 + $0x1b8] sm:$0xff] %vm28, 0
      %149 = vst.msk [vmem:[#allocation3 + $0x1c0] sm:$0xff] %vm28, 0
      %150 = vst.msk [vmem:[#allocation3 + $0x1c8] sm:$0xff] %vm28, 0
      %151 = vst.msk [vmem:[#allocation3 + $0x1d0] sm:$0xff] %vm28, 0
      %152 = vst.msk [vmem:[#allocation3 + $0x1d8] sm:$0xff] %vm28, 0
      %153 = vst.msk [vmem:[#allocation3 + $0x1e0] sm:$0xff] %vm28, 0
      %154 = vst.msk [vmem:[#allocation3 + $0x1e8] sm:$0xff] %vm28, 0
      %155 = vst.msk [vmem:[#allocation3 + $0x1f0] sm:$0xff] %vm28, 0
      %156 = vst.msk [vmem:[#allocation3 + $0x1f8] sm:$0xff] %vm28, 0
      %vm157 = vcmask 31744
      %158 = vst.msk [vmem:[#allocation4] sm:$0xff] %vm157, 0.0
      %159 = vst.msk [vmem:[#allocation4 + $0x8] sm:$0xff] %vm157, 0.0
      %160 = vst.msk [vmem:[#allocation4 + $0x10] sm:$0xff] %vm157, 0.0
      %161 = vst.msk [vmem:[#allocation4 + $0x18] sm:$0xff] %vm157, 0.0
      %162 = vst.msk [vmem:[#allocation4 + $0x20] sm:$0xff] %vm157, 0.0
      %163 = vst.msk [vmem:[#allocation4 + $0x28] sm:$0xff] %vm157, 0.0
      %164 = vst.msk [vmem:[#allocation4 + $0x30] sm:$0xff] %vm157, 0.0
      %165 = vst.msk [vmem:[#allocation4 + $0x38] sm:$0xff] %vm157, 0.0
      %166 = vst.msk [vmem:[#allocation4 + $0x40] sm:$0xff] %vm157, 0.0
      %167 = vst.msk [vmem:[#allocation4 + $0x48] sm:$0xff] %vm157, 0.0
      %168 = vst.msk [vmem:[#allocation4 + $0x50] sm:$0xff] %vm157, 0.0
      %169 = vst.msk [vmem:[#allocation4 + $0x58] sm:$0xff] %vm157, 0.0
      %170 = vst.msk [vmem:[#allocation4 + $0x60] sm:$0xff] %vm157, 0.0
      %171 = vst.msk [vmem:[#allocation4 + $0x68] sm:$0xff] %vm157, 0.0
      %172 = vst.msk [vmem:[#allocation4 + $0x70] sm:$0xff] %vm157, 0.0
      %173 = vst.msk [vmem:[#allocation4 + $0x78] sm:$0xff] %vm157, 0.0
      %174 = vst.msk [vmem:[#allocation4 + $0x80] sm:$0xff] %vm157, 0.0
      %175 = vst.msk [vmem:[#allocation4 + $0x88] sm:$0xff] %vm157, 0.0
      %176 = vst.msk [vmem:[#allocation4 + $0x90] sm:$0xff] %vm157, 0.0
      %177 = vst.msk [vmem:[#allocation4 + $0x98] sm:$0xff] %vm157, 0.0
      %178 = vst.msk [vmem:[#allocation4 + $0xa0] sm:$0xff] %vm157, 0.0
      %179 = vst.msk [vmem:[#allocation4 + $0xa8] sm:$0xff] %vm157, 0.0
      %180 = vst.msk [vmem:[#allocation4 + $0xb0] sm:$0xff] %vm157, 0.0
      %181 = vst.msk [vmem:[#allocation4 + $0xb8] sm:$0xff] %vm157, 0.0
      %182 = vst.msk [vmem:[#allocation4 + $0xc0] sm:$0xff] %vm157, 0.0
      %183 = vst.msk [vmem:[#allocation4 + $0xc8] sm:$0xff] %vm157, 0.0
      %184 = vst.msk [vmem:[#allocation4 + $0xd0] sm:$0xff] %vm157, 0.0
      %185 = vst.msk [vmem:[#allocation4 + $0xd8] sm:$0xff] %vm157, 0.0
      %186 = vst.msk [vmem:[#allocation4 + $0xe0] sm:$0xff] %vm157, 0.0
      %187 = vst.msk [vmem:[#allocation4 + $0xe8] sm:$0xff] %vm157, 0.0
      %188 = vst.msk [vmem:[#allocation4 + $0xf0] sm:$0xff] %vm157, 0.0
      %189 = vst.msk [vmem:[#allocation4 + $0xf8] sm:$0xff] %vm157, 0.0
      %190 = vst.msk [vmem:[#allocation4 + $0x100] sm:$0xff] %vm157, 0.0
      %191 = vst.msk [vmem:[#allocation4 + $0x108] sm:$0xff] %vm157, 0.0
      %192 = vst.msk [vmem:[#allocation4 + $0x110] sm:$0xff] %vm157, 0.0
      %193 = vst.msk [vmem:[#allocation4 + $0x118] sm:$0xff] %vm157, 0.0
      %194 = vst.msk [vmem:[#allocation4 + $0x120] sm:$0xff] %vm157, 0.0
      %195 = vst.msk [vmem:[#allocation4 + $0x128] sm:$0xff] %vm157, 0.0
      %196 = vst.msk [vmem:[#allocation4 + $0x130] sm:$0xff] %vm157, 0.0
      %197 = vst.msk [vmem:[#allocation4 + $0x138] sm:$0xff] %vm157, 0.0
      %198 = vst.msk [vmem:[#allocation4 + $0x140] sm:$0xff] %vm157, 0.0
      %199 = vst.msk [vmem:[#allocation4 + $0x148] sm:$0xff] %vm157, 0.0
      %200 = vst.msk [vmem:[#allocation4 + $0x150] sm:$0xff] %vm157, 0.0
      %201 = vst.msk [vmem:[#allocation4 + $0x158] sm:$0xff] %vm157, 0.0
      %202 = vst.msk [vmem:[#allocation4 + $0x160] sm:$0xff] %vm157, 0.0
      %203 = vst.msk [vmem:[#allocation4 + $0x168] sm:$0xff] %vm157, 0.0
      %204 = vst.msk [vmem:[#allocation4 + $0x170] sm:$0xff] %vm157, 0.0
      %205 = vst.msk [vmem:[#allocation4 + $0x178] sm:$0xff] %vm157, 0.0
      %206 = vst.msk [vmem:[#allocation4 + $0x180] sm:$0xff] %vm157, 0.0
      %207 = vst.msk [vmem:[#allocation4 + $0x188] sm:$0xff] %vm157, 0.0
      %208 = vst.msk [vmem:[#allocation4 + $0x190] sm:$0xff] %vm157, 0.0
      %209 = vst.msk [vmem:[#allocation4 + $0x198] sm:$0xff] %vm157, 0.0
      %210 = vst.msk [vmem:[#allocation4 + $0x1a0] sm:$0xff] %vm157, 0.0
      %211 = vst.msk [vmem:[#allocation4 + $0x1a8] sm:$0xff] %vm157, 0.0
      %212 = vst.msk [vmem:[#allocation4 + $0x1b0] sm:$0xff] %vm157, 0.0
      %213 = vst.msk [vmem:[#allocation4 + $0x1b8] sm:$0xff] %vm157, 0.0
      %214 = vst.msk [vmem:[#allocation4 + $0x1c0] sm:$0xff] %vm157, 0.0
      %215 = vst.msk [vmem:[#allocation4 + $0x1c8] sm:$0xff] %vm157, 0.0
      %216 = vst.msk [vmem:[#allocation4 + $0x1d0] sm:$0xff] %vm157, 0.0
      %217 = vst.msk [vmem:[#allocation4 + $0x1d8] sm:$0xff] %vm157, 0.0
      %218 = vst.msk [vmem:[#allocation4 + $0x1e0] sm:$0xff] %vm157, 0.0
      %219 = vst.msk [vmem:[#allocation4 + $0x1e8] sm:$0xff] %vm157, 0.0
      %220 = vst.msk [vmem:[#allocation4 + $0x1f0] sm:$0xff] %vm157, 0.0
      %221 = vst.msk [vmem:[#allocation4 + $0x1f8] sm:$0xff] %vm157, 0.0
    $region25: #{quantize_forward.1} parent=1 // pred_fallthru
      _
    %v222 = vld [vmem:[%s0] sm:$0xff]
    %v223 = vld [vmem:[%s0 + $0x8] sm:$0xff]
    %v224 = vld [vmem:[%s0 + $0x10] sm:$0xff]
    %v225 = vld [vmem:[%s0 + $0x18] sm:$0xff]
    %v226 = vld [vmem:[%s0 + $0x20] sm:$0xff]
    %v227 = vld [vmem:[%s0 + $0x28] sm:$0xff]
    %v228 = vld [vmem:[%s0 + $0x30] sm:$0xff]
    %v229 = vld [vmem:[%s0 + $0x38] sm:$0xff]
    %v230 = vld [vmem:[%s0 + $0x40] sm:$0xff]
    %v231 = vld [vmem:[%s0 + $0x48] sm:$0xff]
    %v232 = vld [vmem:[%s0 + $0x50] sm:$0xff]
    %v233 = vld [vmem:[%s0 + $0x58] sm:$0xff]
    %v234 = vld [vmem:[%s0 + $0x60] sm:$0xff]
    %v235 = vld [vmem:[%s0 + $0x68] sm:$0xff]
    %v236 = vld [vmem:[%s0 + $0x70] sm:$0xff]
    %v237 = vld [vmem:[%s0 + $0x78] sm:$0xff]
    %v238 = vld [vmem:[%s0 + $0x80] sm:$0xff]
    %v239 = vld [vmem:[%s0 + $0x88] sm:$0xff]
    %v240 = vld [vmem:[%s0 + $0x90] sm:$0xff]
    %v241 = vld [vmem:[%s0 + $0x98] sm:$0xff]
    %v242 = vld [vmem:[%s0 + $0xa0] sm:$0xff]
    %v243 = vld [vmem:[%s0 + $0xa8] sm:$0xff]
    %v244 = vld [vmem:[%s0 + $0xb0] sm:$0xff]
    %v245 = vld [vmem:[%s0 + $0xb8] sm:$0xff]
    %v246 = vld [vmem:[%s0 + $0xc0] sm:$0xff]
    %v247 = vld [vmem:[%s0 + $0xc8] sm:$0xff]
    %v248 = vld [vmem:[%s0 + $0xd0] sm:$0xff]
    %v249 = vld [vmem:[%s0 + $0xd8] sm:$0xff]
    %v250 = vld [vmem:[%s0 + $0xe0] sm:$0xff]
    %v251 = vld [vmem:[%s0 + $0xe8] sm:$0xff]
    %v252 = vld [vmem:[%s0 + $0xf0] sm:$0xff]
    %v253 = vld [vmem:[%s0 + $0xf8] sm:$0xff]
    %v254 = vld [vmem:[%s0 + $0x100] sm:$0xff]
    %v255 = vld [vmem:[%s0 + $0x108] sm:$0xff]
    %v256 = vld [vmem:[%s0 + $0x110] sm:$0xff]
    %v257 = vld [vmem:[%s0 + $0x118] sm:$0xff]
    %v258 = vld [vmem:[%s0 + $0x120] sm:$0xff]
    %v259 = vld [vmem:[%s0 + $0x128] sm:$0xff]
    %v260 = vld [vmem:[%s0 + $0x130] sm:$0xff]
    %v261 = vld [vmem:[%s0 + $0x138] sm:$0xff]
    %v262 = vld [vmem:[%s0 + $0x140] sm:$0xff]
    %v263 = vld [vmem:[%s0 + $0x148] sm:$0xff]
    %v264 = vld [vmem:[%s0 + $0x150] sm:$0xff]
    %v265 = vld [vmem:[%s0 + $0x158] sm:$0xff]
    %v266 = vld [vmem:[%s0 + $0x160] sm:$0xff]
    %v267 = vld [vmem:[%s0 + $0x168] sm:$0xff]
    %v268 = vld [vmem:[%s0 + $0x170] sm:$0xff]
    %v269 = vld [vmem:[%s0 + $0x178] sm:$0xff]
    %v270 = vld [vmem:[%s0 + $0x180] sm:$0xff]
    %v271 = vld [vmem:[%s0 + $0x188] sm:$0xff]
    %v272 = vld [vmem:[%s0 + $0x190] sm:$0xff]
    %v273 = vld [vmem:[%s0 + $0x198] sm:$0xff]
    %v274 = vld [vmem:[%s0 + $0x1a0] sm:$0xff]
    %v275 = vld [vmem:[%s0 + $0x1a8] sm:$0xff]
    %v276 = vld [vmem:[%s0 + $0x1b0] sm:$0xff]
    %v277 = vld [vmem:[%s0 + $0x1b8] sm:$0xff]
    %v278 = vld [vmem:[%s0 + $0x1c0] sm:$0xff]
    %v279 = vld [vmem:[%s0 + $0x1c8] sm:$0xff]
    %v280 = vld [vmem:[%s0 + $0x1d0] sm:$0xff]
    %v281 = vld [vmem:[%s0 + $0x1d8] sm:$0xff]
    %v282 = vld [vmem:[%s0 + $0x1e0] sm:$0xff]
    %v283 = vld [vmem:[%s0 + $0x1e8] sm:$0xff]
    %v284 = vld [vmem:[%s0 + $0x1f0] sm:$0xff]
    %v285 = vld [vmem:[%s0 + $0x1f8] sm:$0xff]
    %v286 = vld [vmem:[%s1] sm:$0xff]
    %v288 = vcombine.high %v286, %v286
    %vm289 = vcmask 31744
    %v291 = vsel %vm289, %v222, 0
    %v294 = vsel %vm289, %v223, 0
    %v297 = vsel %vm289, %v224, 0
    %v300 = vsel %vm289, %v225, 0
    %v303 = vsel %vm289, %v226, 0
    %v306 = vsel %vm289, %v227, 0
    %v309 = vsel %vm289, %v228, 0
    %v312 = vsel %vm289, %v229, 0
    %v315 = vsel %vm289, %v230, 0
    %v318 = vsel %vm289, %v231, 0
    %v321 = vsel %vm289, %v232, 0
    %v324 = vsel %vm289, %v233, 0
    %v327 = vsel %vm289, %v234, 0
    %v330 = vsel %vm289, %v235, 0
    %v333 = vsel %vm289, %v236, 0
    %v336 = vsel %vm289, %v237, 0
    %v339 = vsel %vm289, %v238, 0
    %v342 = vsel %vm289, %v239, 0
    %v345 = vsel %vm289, %v240, 0
    %v348 = vsel %vm289, %v241, 0
    %v351 = vsel %vm289, %v242, 0
    %v354 = vsel %vm289, %v243, 0
    %v357 = vsel %vm289, %v244, 0
    %v360 = vsel %vm289, %v245, 0
    %v363 = vsel %vm289, %v246, 0
    %v366 = vsel %vm289, %v247, 0
    %v369 = vsel %vm289, %v248, 0
    %v372 = vsel %vm289, %v249, 0
    %v375 = vsel %vm289, %v250, 0
    %v378 = vsel %vm289, %v251, 0
    %v381 = vsel %vm289, %v252, 0
    %v384 = vsel %vm289, %v253, 0
    %v387 = vsel %vm289, %v254, 0
    %v390 = vsel %vm289, %v255, 0
    %v393 = vsel %vm289, %v256, 0
    %v396 = vsel %vm289, %v257, 0
    %v399 = vsel %vm289, %v258, 0
    %v402 = vsel %vm289, %v259, 0
    %v405 = vsel %vm289, %v260, 0
    %v408 = vsel %vm289, %v261, 0
    %v411 = vsel %vm289, %v262, 0
    %v414 = vsel %vm289, %v263, 0
    %v417 = vsel %vm289, %v264, 0
    %v420 = vsel %vm289, %v265, 0
    %v423 = vsel %vm289, %v266, 0
    %v426 = vsel %vm289, %v267, 0
    %v429 = vsel %vm289, %v268, 0
    %v432 = vsel %vm289, %v269, 0
    %v435 = vsel %vm289, %v270, 0
    %v438 = vsel %vm289, %v271, 0
    %v441 = vsel %vm289, %v272, 0
    %v444 = vsel %vm289, %v273, 0
    %v447 = vsel %vm289, %v274, 0
    %v450 = vsel %vm289, %v275, 0
    %v453 = vsel %vm289, %v276, 0
    %v456 = vsel %vm289, %v277, 0
    %v459 = vsel %vm289, %v278, 0
    %v462 = vsel %vm289, %v279, 0
    %v465 = vsel %vm289, %v280, 0
    %v468 = vsel %vm289, %v281, 0
    %v471 = vsel %vm289, %v282, 0
    %v474 = vsel %vm289, %v283, 0
    %v477 = vsel %vm289, %v284, 0
    %v480 = vsel %vm289, %v285, 0
    %vm482 = vcmask 1043456
    %v483 = vsel %vm482, %v286, 0
    %v485 = vsel %vm482, %v288, 0
    %487 = vmatprep.subr.mxu0 0.0
    %488 = vmatpush1.msra.mxu0 0.0
    %489 = vmatprep.subr.mxu0 0.0
    %490 = vmatpush1.msra.mxu0 0.0
    %491 = vmatprep.subr.mxu0 0.0
    %492 = vmatpush1.msra.mxu0 0.0
    %493 = vmatprep.subr.mxu0 0.0
    %494 = vmatpush1.msra.mxu0 0.0
    %495 = vmatprep.subr.mxu0 0.0
    %496 = vmatpush1.msra.mxu0 0.0
    %497 = vmatprep.subr.mxu0 0.0
    %498 = vmatpush1.msra.mxu0 0.0
    %499 = vmatprep.subr.mxu0 0.0
    %500 = vmatpush1.msra.mxu0 0.0
    %501 = vmatprep.subr.mxu0 0.0
    %502 = vmatpush1.msra.mxu0 0.0
    %503 = vmatprep.subr.mxu0 0.0
    %504 = vmatpush1.msra.mxu0 0.0
    %505 = vmatprep.subr.mxu0 0.0
    %506 = vmatpush1.msra.mxu0 0.0
    %507 = vmatprep.subr.mxu0 0.0
    %508 = vmatpush1.msra.mxu0 0.0
    %509 = vmatprep.subr.mxu0 0.0
    %510 = vmatpush1.msra.mxu0 0.0
    %511 = vmatprep.subr.mxu0 0.0
    %512 = vmatpush1.msra.mxu0 0.0
    %513 = vmatprep.subr.mxu0 0.0
    %514 = vmatpush1.msra.mxu0 0.0
    %515 = vmatprep.subr.mxu0 0.0
    %516 = vmatpush1.msra.mxu0 0.0
    %517 = vmatprep.subr.mxu0 %v485
    %518 = vmatpush1.msra.mxu0 %v483
    %519 = vmatprep.subr.mxu0 0.0
    %520 = vmatpush2.msra.mxu0 0.0
    %521 = vmatprep.subr.mxu0 0.0
    %522 = vmatpush2.msra.mxu0 0.0
    %523 = vmatprep.subr.mxu0 0.0
    %524 = vmatpush2.msra.mxu0 0.0
    %525 = vmatprep.subr.mxu0 0.0
    %526 = vmatpush2.msra.mxu0 0.0
    %527 = vmatprep.subr.mxu0 0.0
    %528 = vmatpush2.msra.mxu0 0.0
    %529 = vmatprep.subr.mxu0 0.0
    %530 = vmatpush2.msra.mxu0 0.0
    %531 = vmatprep.subr.mxu0 0.0
    %532 = vmatpush2.msra.mxu0 0.0
    %533 = vmatprep.subr.mxu0 0.0
    %534 = vmatpush2.msra.mxu0 0.0
    %535 = vmatprep.subr.mxu0 0.0
    %536 = vmatpush2.msra.mxu0 0.0
    %537 = vmatprep.subr.mxu0 0.0
    %538 = vmatpush2.msra.mxu0 0.0
    %539 = vmatprep.subr.mxu0 0.0
    %540 = vmatpush2.msra.mxu0 0.0
    %541 = vmatprep.subr.mxu0 0.0
    %542 = vmatpush2.msra.mxu0 0.0
    %543 = vmatprep.subr.mxu0 0.0
    %544 = vmatpush2.msra.mxu0 0.0
    %545 = vmatprep.subr.mxu0 0.0
    %546 = vmatpush2.msra.mxu0 0.0
    %547 = vmatprep.subr.mxu0 0.0
    %548 = vmatpush2.msra.mxu0 0.0
    %549 = vmatprep.subr.mxu0 0.0
    %550 = vmatpush2.msra.mxu0 0.0
    %551 = vmatprep.mubr.f32.mxu0 0.0
    %552 = vmatmul.mubr.f32.gmra.mxu0 %v291
    %v553 = vpop.f32.mrf.mxu0
    %v554 = vadd.f32 0.0, %v553
    %v555 = vpop.f32.mrf.mxu0
    %v556 = vadd.f32 0.0, %v555
    %557 = vmatprep.mubr.f32.mxu0 0.0
    %558 = vmatmul.mubr.f32.gmra.mxu0 %v294
    %v559 = vpop.f32.mrf.mxu0
    %v560 = vadd.f32 0.0, %v559
    %v561 = vpop.f32.mrf.mxu0
    %v562 = vadd.f32 0.0, %v561
    %563 = vmatprep.mubr.f32.mxu0 0.0
    %564 = vmatmul.mubr.f32.gmra.mxu0 %v297
    %v565 = vpop.f32.mrf.mxu0
    %v566 = vadd.f32 0.0, %v565
    %v567 = vpop.f32.mrf.mxu0
    %v568 = vadd.f32 0.0, %v567
    %569 = vmatprep.mubr.f32.mxu0 0.0
    %570 = vmatmul.mubr.f32.gmra.mxu0 %v300
    %v571 = vpop.f32.mrf.mxu0
    %v572 = vadd.f32 0.0, %v571
    %v573 = vpop.f32.mrf.mxu0
    %v574 = vadd.f32 0.0, %v573
    %575 = vmatprep.mubr.f32.mxu0 0.0
    %576 = vmatmul.mubr.f32.gmra.mxu0 %v303
    %v577 = vpop.f32.mrf.mxu0
    %v578 = vadd.f32 0.0, %v577
    %v579 = vpop.f32.mrf.mxu0
    %v580 = vadd.f32 0.0, %v579
    %581 = vmatprep.mubr.f32.mxu0 0.0
    %582 = vmatmul.mubr.f32.gmra.mxu0 %v306
    %v583 = vpop.f32.mrf.mxu0
    %v584 = vadd.f32 0.0, %v583
    %v585 = vpop.f32.mrf.mxu0
    %v586 = vadd.f32 0.0, %v585
    %587 = vmatprep.mubr.f32.mxu0 0.0
    %588 = vmatmul.mubr.f32.gmra.mxu0 %v309
    %v589 = vpop.f32.mrf.mxu0
    %v590 = vadd.f32 0.0, %v589
    %v591 = vpop.f32.mrf.mxu0
    %v592 = vadd.f32 0.0, %v591
    %593 = vmatprep.mubr.f32.mxu0 0.0
    %594 = vmatmul.mubr.f32.gmra.mxu0 %v312
    %v595 = vpop.f32.mrf.mxu0
    %v596 = vadd.f32 0.0, %v595
    %v597 = vpop.f32.mrf.mxu0
    %v598 = vadd.f32 0.0, %v597
    %599 = vmatprep.mubr.f32.mxu0 0.0
    %600 = vmatmul.mubr.f32.gmra.mxu0 %v315
    %v601 = vpop.f32.mrf.mxu0
    %v602 = vadd.f32 0.0, %v601
    %v603 = vpop.f32.mrf.mxu0
    %v604 = vadd.f32 0.0, %v603
    %605 = vmatprep.mubr.f32.mxu0 0.0
    %606 = vmatmul.mubr.f32.gmra.mxu0 %v318
    %v607 = vpop.f32.mrf.mxu0
    %v608 = vadd.f32 0.0, %v607
    %v609 = vpop.f32.mrf.mxu0
    %v610 = vadd.f32 0.0, %v609
    %611 = vmatprep.mubr.f32.mxu0 0.0
    %612 = vmatmul.mubr.f32.gmra.mxu0 %v321
    %v613 = vpop.f32.mrf.mxu0
    %v614 = vadd.f32 0.0, %v613
    %v615 = vpop.f32.mrf.mxu0
    %v616 = vadd.f32 0.0, %v615
    %617 = vmatprep.mubr.f32.mxu0 0.0
    %618 = vmatmul.mubr.f32.gmra.mxu0 %v324
    %v619 = vpop.f32.mrf.mxu0
    %v620 = vadd.f32 0.0, %v619
    %v621 = vpop.f32.mrf.mxu0
    %v622 = vadd.f32 0.0, %v621
    %623 = vmatprep.mubr.f32.mxu0 0.0
    %624 = vmatmul.mubr.f32.gmra.mxu0 %v327
    %v625 = vpop.f32.mrf.mxu0
    %v626 = vadd.f32 0.0, %v625
    %v627 = vpop.f32.mrf.mxu0
    %v628 = vadd.f32 0.0, %v627
    %629 = vmatprep.mubr.f32.mxu0 0.0
    %630 = vmatmul.mubr.f32.gmra.mxu0 %v330
    %v631 = vpop.f32.mrf.mxu0
    %v632 = vadd.f32 0.0, %v631
    %v633 = vpop.f32.mrf.mxu0
    %v634 = vadd.f32 0.0, %v633
    %635 = vmatprep.mubr.f32.mxu0 0.0
    %636 = vmatmul.mubr.f32.gmra.mxu0 %v333
    %v637 = vpop.f32.mrf.mxu0
    %v638 = vadd.f32 0.0, %v637
    %v639 = vpop.f32.mrf.mxu0
    %v640 = vadd.f32 0.0, %v639
    %641 = vmatprep.mubr.f32.mxu0 0.0
    %642 = vmatmul.mubr.f32.gmra.mxu0 %v336
    %v643 = vpop.f32.mrf.mxu0
    %v644 = vadd.f32 0.0, %v643
    %v645 = vpop.f32.mrf.mxu0
    %v646 = vadd.f32 0.0, %v645
    %647 = vmatprep.mubr.f32.mxu0 0.0
    %648 = vmatmul.mubr.f32.gmra.mxu0 %v339
    %v649 = vpop.f32.mrf.mxu0
    %v650 = vadd.f32 0.0, %v649
    %v651 = vpop.f32.mrf.mxu0
    %v652 = vadd.f32 0.0, %v651
    %653 = vmatprep.mubr.f32.mxu0 0.0
    %654 = vmatmul.mubr.f32.gmra.mxu0 %v342
    %v655 = vpop.f32.mrf.mxu0
    %v656 = vadd.f32 0.0, %v655
    %v657 = vpop.f32.mrf.mxu0
    %v658 = vadd.f32 0.0, %v657
    %659 = vmatprep.mubr.f32.mxu0 0.0
    %660 = vmatmul.mubr.f32.gmra.mxu0 %v345
    %v661 = vpop.f32.mrf.mxu0
    %v662 = vadd.f32 0.0, %v661
    %v663 = vpop.f32.mrf.mxu0
    %v664 = vadd.f32 0.0, %v663
    %665 = vmatprep.mubr.f32.mxu0 0.0
    %666 = vmatmul.mubr.f32.gmra.mxu0 %v348
    %v667 = vpop.f32.mrf.mxu0
    %v668 = vadd.f32 0.0, %v667
    %v669 = vpop.f32.mrf.mxu0
    %v670 = vadd.f32 0.0, %v669
    %671 = vmatprep.mubr.f32.mxu0 0.0
    %672 = vmatmul.mubr.f32.gmra.mxu0 %v351
    %v673 = vpop.f32.mrf.mxu0
    %v674 = vadd.f32 0.0, %v673
    %v675 = vpop.f32.mrf.mxu0
    %v676 = vadd.f32 0.0, %v675
    %677 = vmatprep.mubr.f32.mxu0 0.0
    %678 = vmatmul.mubr.f32.gmra.mxu0 %v354
    %v679 = vpop.f32.mrf.mxu0
    %v680 = vadd.f32 0.0, %v679
    %v681 = vpop.f32.mrf.mxu0
    %v682 = vadd.f32 0.0, %v681
    %683 = vmatprep.mubr.f32.mxu0 0.0
    %684 = vmatmul.mubr.f32.gmra.mxu0 %v357
    %v685 = vpop.f32.mrf.mxu0
    %v686 = vadd.f32 0.0, %v685
    %v687 = vpop.f32.mrf.mxu0
    %v688 = vadd.f32 0.0, %v687
    %689 = vmatprep.mubr.f32.mxu0 0.0
    %690 = vmatmul.mubr.f32.gmra.mxu0 %v360
    %v691 = vpop.f32.mrf.mxu0
    %v692 = vadd.f32 0.0, %v691
    %v693 = vpop.f32.mrf.mxu0
    %v694 = vadd.f32 0.0, %v693
    %695 = vmatprep.mubr.f32.mxu0 0.0
    %696 = vmatmul.mubr.f32.gmra.mxu0 %v363
    %v697 = vpop.f32.mrf.mxu0
    %v698 = vadd.f32 0.0, %v697
    %v699 = vpop.f32.mrf.mxu0
    %v700 = vadd.f32 0.0, %v699
    %701 = vmatprep.mubr.f32.mxu0 0.0
    %702 = vmatmul.mubr.f32.gmra.mxu0 %v366
    %v703 = vpop.f32.mrf.mxu0
    %v704 = vadd.f32 0.0, %v703
    %v705 = vpop.f32.mrf.mxu0
    %v706 = vadd.f32 0.0, %v705
    %707 = vmatprep.mubr.f32.mxu0 0.0
    %708 = vmatmul.mubr.f32.gmra.mxu0 %v369
    %v709 = vpop.f32.mrf.mxu0
    %v710 = vadd.f32 0.0, %v709
    %v711 = vpop.f32.mrf.mxu0
    %v712 = vadd.f32 0.0, %v711
    %713 = vmatprep.mubr.f32.mxu0 0.0
    %714 = vmatmul.mubr.f32.gmra.mxu0 %v372
    %v715 = vpop.f32.mrf.mxu0
    %v716 = vadd.f32 0.0, %v715
    %v717 = vpop.f32.mrf.mxu0
    %v718 = vadd.f32 0.0, %v717
    %719 = vmatprep.mubr.f32.mxu0 0.0
    %720 = vmatmul.mubr.f32.gmra.mxu0 %v375
    %v721 = vpop.f32.mrf.mxu0
    %v722 = vadd.f32 0.0, %v721
    %v723 = vpop.f32.mrf.mxu0
    %v724 = vadd.f32 0.0, %v723
    %725 = vmatprep.mubr.f32.mxu0 0.0
    %726 = vmatmul.mubr.f32.gmra.mxu0 %v378
    %v727 = vpop.f32.mrf.mxu0
    %v728 = vadd.f32 0.0, %v727
    %v729 = vpop.f32.mrf.mxu0
    %v730 = vadd.f32 0.0, %v729
    %731 = vmatprep.mubr.f32.mxu0 0.0
    %732 = vmatmul.mubr.f32.gmra.mxu0 %v381
    %v733 = vpop.f32.mrf.mxu0
    %v734 = vadd.f32 0.0, %v733
    %v735 = vpop.f32.mrf.mxu0
    %v736 = vadd.f32 0.0, %v735
    %737 = vmatprep.mubr.f32.mxu0 0.0
    %738 = vmatmul.mubr.f32.gmra.mxu0 %v384
    %v739 = vpop.f32.mrf.mxu0
    %v740 = vadd.f32 0.0, %v739
    %v741 = vpop.f32.mrf.mxu0
    %v742 = vadd.f32 0.0, %v741
    %743 = vmatprep.mubr.f32.mxu0 0.0
    %744 = vmatmul.mubr.f32.gmra.mxu0 %v387
    %v745 = vpop.f32.mrf.mxu0
    %v746 = vadd.f32 0.0, %v745
    %v747 = vpop.f32.mrf.mxu0
    %v748 = vadd.f32 0.0, %v747
    %749 = vmatprep.mubr.f32.mxu0 0.0
    %750 = vmatmul.mubr.f32.gmra.mxu0 %v390
    %v751 = vpop.f32.mrf.mxu0
    %v752 = vadd.f32 0.0, %v751
    %v753 = vpop.f32.mrf.mxu0
    %v754 = vadd.f32 0.0, %v753
    %755 = vmatprep.mubr.f32.mxu0 0.0
    %756 = vmatmul.mubr.f32.gmra.mxu0 %v393
    %v757 = vpop.f32.mrf.mxu0
    %v758 = vadd.f32 0.0, %v757
    %v759 = vpop.f32.mrf.mxu0
    %v760 = vadd.f32 0.0, %v759
    %761 = vmatprep.mubr.f32.mxu0 0.0
    %762 = vmatmul.mubr.f32.gmra.mxu0 %v396
    %v763 = vpop.f32.mrf.mxu0
    %v764 = vadd.f32 0.0, %v763
    %v765 = vpop.f32.mrf.mxu0
    %v766 = vadd.f32 0.0, %v765
    %767 = vmatprep.mubr.f32.mxu0 0.0
    %768 = vmatmul.mubr.f32.gmra.mxu0 %v399
    %v769 = vpop.f32.mrf.mxu0
    %v770 = vadd.f32 0.0, %v769
    %v771 = vpop.f32.mrf.mxu0
    %v772 = vadd.f32 0.0, %v771
    %773 = vmatprep.mubr.f32.mxu0 0.0
    %774 = vmatmul.mubr.f32.gmra.mxu0 %v402
    %v775 = vpop.f32.mrf.mxu0
    %v776 = vadd.f32 0.0, %v775
    %v777 = vpop.f32.mrf.mxu0
    %v778 = vadd.f32 0.0, %v777
    %779 = vmatprep.mubr.f32.mxu0 0.0
    %780 = vmatmul.mubr.f32.gmra.mxu0 %v405
    %v781 = vpop.f32.mrf.mxu0
    %v782 = vadd.f32 0.0, %v781
    %v783 = vpop.f32.mrf.mxu0
    %v784 = vadd.f32 0.0, %v783
    %785 = vmatprep.mubr.f32.mxu0 0.0
    %786 = vmatmul.mubr.f32.gmra.mxu0 %v408
    %v787 = vpop.f32.mrf.mxu0
    %v788 = vadd.f32 0.0, %v787
    %v789 = vpop.f32.mrf.mxu0
    %v790 = vadd.f32 0.0, %v789
    %791 = vmatprep.mubr.f32.mxu0 0.0
    %792 = vmatmul.mubr.f32.gmra.mxu0 %v411
    %v793 = vpop.f32.mrf.mxu0
    %v794 = vadd.f32 0.0, %v793
    %v795 = vpop.f32.mrf.mxu0
    %v796 = vadd.f32 0.0, %v795
    %797 = vmatprep.mubr.f32.mxu0 0.0
    %798 = vmatmul.mubr.f32.gmra.mxu0 %v414
    %v799 = vpop.f32.mrf.mxu0
    %v800 = vadd.f32 0.0, %v799
    %v801 = vpop.f32.mrf.mxu0
    %v802 = vadd.f32 0.0, %v801
    %803 = vmatprep.mubr.f32.mxu0 0.0
    %804 = vmatmul.mubr.f32.gmra.mxu0 %v417
    %v805 = vpop.f32.mrf.mxu0
    %v806 = vadd.f32 0.0, %v805
    %v807 = vpop.f32.mrf.mxu0
    %v808 = vadd.f32 0.0, %v807
    %809 = vmatprep.mubr.f32.mxu0 0.0
    %810 = vmatmul.mubr.f32.gmra.mxu0 %v420
    %v811 = vpop.f32.mrf.mxu0
    %v812 = vadd.f32 0.0, %v811
    %v813 = vpop.f32.mrf.mxu0
    %v814 = vadd.f32 0.0, %v813
    %815 = vmatprep.mubr.f32.mxu0 0.0
    %816 = vmatmul.mubr.f32.gmra.mxu0 %v423
    %v817 = vpop.f32.mrf.mxu0
    %v818 = vadd.f32 0.0, %v817
    %v819 = vpop.f32.mrf.mxu0
    %v820 = vadd.f32 0.0, %v819
    %821 = vmatprep.mubr.f32.mxu0 0.0
    %822 = vmatmul.mubr.f32.gmra.mxu0 %v426
    %v823 = vpop.f32.mrf.mxu0
    %v824 = vadd.f32 0.0, %v823
    %v825 = vpop.f32.mrf.mxu0
    %v826 = vadd.f32 0.0, %v825
    %827 = vmatprep.mubr.f32.mxu0 0.0
    %828 = vmatmul.mubr.f32.gmra.mxu0 %v429
    %v829 = vpop.f32.mrf.mxu0
    %v830 = vadd.f32 0.0, %v829
    %v831 = vpop.f32.mrf.mxu0
    %v832 = vadd.f32 0.0, %v831
    %833 = vmatprep.mubr.f32.mxu0 0.0
    %834 = vmatmul.mubr.f32.gmra.mxu0 %v432
    %v835 = vpop.f32.mrf.mxu0
    %v836 = vadd.f32 0.0, %v835
    %v837 = vpop.f32.mrf.mxu0
    %v838 = vadd.f32 0.0, %v837
    %839 = vmatprep.mubr.f32.mxu0 0.0
    %840 = vmatmul.mubr.f32.gmra.mxu0 %v435
    %v841 = vpop.f32.mrf.mxu0
    %v842 = vadd.f32 0.0, %v841
    %v843 = vpop.f32.mrf.mxu0
    %v844 = vadd.f32 0.0, %v843
    %845 = vmatprep.mubr.f32.mxu0 0.0
    %846 = vmatmul.mubr.f32.gmra.mxu0 %v438
    %v847 = vpop.f32.mrf.mxu0
    %v848 = vadd.f32 0.0, %v847
    %v849 = vpop.f32.mrf.mxu0
    %v850 = vadd.f32 0.0, %v849
    %851 = vmatprep.mubr.f32.mxu0 0.0
    %852 = vmatmul.mubr.f32.gmra.mxu0 %v441
    %v853 = vpop.f32.mrf.mxu0
    %v854 = vadd.f32 0.0, %v853
    %v855 = vpop.f32.mrf.mxu0
    %v856 = vadd.f32 0.0, %v855
    %857 = vmatprep.mubr.f32.mxu0 0.0
    %858 = vmatmul.mubr.f32.gmra.mxu0 %v444
    %v859 = vpop.f32.mrf.mxu0
    %v860 = vadd.f32 0.0, %v859
    %v861 = vpop.f32.mrf.mxu0
    %v862 = vadd.f32 0.0, %v861
    %863 = vmatprep.mubr.f32.mxu0 0.0
    %864 = vmatmul.mubr.f32.gmra.mxu0 %v447
    %v865 = vpop.f32.mrf.mxu0
    %v866 = vadd.f32 0.0, %v865
    %v867 = vpop.f32.mrf.mxu0
    %v868 = vadd.f32 0.0, %v867
    %869 = vmatprep.mubr.f32.mxu0 0.0
    %870 = vmatmul.mubr.f32.gmra.mxu0 %v450
    %v871 = vpop.f32.mrf.mxu0
    %v872 = vadd.f32 0.0, %v871
    %v873 = vpop.f32.mrf.mxu0
    %v874 = vadd.f32 0.0, %v873
    %875 = vmatprep.mubr.f32.mxu0 0.0
    %876 = vmatmul.mubr.f32.gmra.mxu0 %v453
    %v877 = vpop.f32.mrf.mxu0
    %v878 = vadd.f32 0.0, %v877
    %v879 = vpop.f32.mrf.mxu0
    %v880 = vadd.f32 0.0, %v879
    %881 = vmatprep.mubr.f32.mxu0 0.0
    %882 = vmatmul.mubr.f32.gmra.mxu0 %v456
    %v883 = vpop.f32.mrf.mxu0
    %v884 = vadd.f32 0.0, %v883
    %v885 = vpop.f32.mrf.mxu0
    %v886 = vadd.f32 0.0, %v885
    %887 = vmatprep.mubr.f32.mxu0 0.0
    %888 = vmatmul.mubr.f32.gmra.mxu0 %v459
    %v889 = vpop.f32.mrf.mxu0
    %v890 = vadd.f32 0.0, %v889
    %v891 = vpop.f32.mrf.mxu0
    %v892 = vadd.f32 0.0, %v891
    %893 = vmatprep.mubr.f32.mxu0 0.0
    %894 = vmatmul.mubr.f32.gmra.mxu0 %v462
    %v895 = vpop.f32.mrf.mxu0
    %v896 = vadd.f32 0.0, %v895
    %v897 = vpop.f32.mrf.mxu0
    %v898 = vadd.f32 0.0, %v897
    %899 = vmatprep.mubr.f32.mxu0 0.0
    %900 = vmatmul.mubr.f32.gmra.mxu0 %v465
    %v901 = vpop.f32.mrf.mxu0
    %v902 = vadd.f32 0.0, %v901
    %v903 = vpop.f32.mrf.mxu0
    %v904 = vadd.f32 0.0, %v903
    %905 = vmatprep.mubr.f32.mxu0 0.0
    %906 = vmatmul.mubr.f32.gmra.mxu0 %v468
    %v907 = vpop.f32.mrf.mxu0
    %v908 = vadd.f32 0.0, %v907
    %v909 = vpop.f32.mrf.mxu0
    %v910 = vadd.f32 0.0, %v909
    %911 = vmatprep.mubr.f32.mxu0 0.0
    %912 = vmatmul.mubr.f32.gmra.mxu0 %v471
    %v913 = vpop.f32.mrf.mxu0
    %v914 = vadd.f32 0.0, %v913
    %v915 = vpop.f32.mrf.mxu0
    %v916 = vadd.f32 0.0, %v915
    %917 = vmatprep.mubr.f32.mxu0 0.0
    %918 = vmatmul.mubr.f32.gmra.mxu0 %v474
    %v919 = vpop.f32.mrf.mxu0
    %v920 = vadd.f32 0.0, %v919
    %v921 = vpop.f32.mrf.mxu0
    %v922 = vadd.f32 0.0, %v921
    %923 = vmatprep.mubr.f32.mxu0 0.0
    %924 = vmatmul.mubr.f32.gmra.mxu0 %v477
    %v925 = vpop.f32.mrf.mxu0
    %v926 = vadd.f32 0.0, %v925
    %v927 = vpop.f32.mrf.mxu0
    %v928 = vadd.f32 0.0, %v927
    %929 = vmatprep.mubr.f32.mxu0 0.0
    %930 = vmatmul.mubr.f32.gmra.mxu0 %v480
    %v931 = vpop.f32.mrf.mxu0
    %v932 = vadd.f32 0.0, %v931
    %v933 = vpop.f32.mrf.mxu0
    %v934 = vadd.f32 0.0, %v933
    %935 = vdwg.mxu0
    %v936 = vld [vmem:[%s3] sm:$0x3]
    %v938 = vlaneseq
    %v939 = vshrl.u32 %v938, 7
    %v940 = vsub.s32 0, %v939
    %v941 = vrot.slane %v936, %v940
    %v942 = vlaneseq
    %v943 = vshrl.u32 %v942, 7
    %v944 = vsub.s32 1, %v943
    %v945 = vrot.slane %v936, %v944
    %v948 = vsub.f32 %v941, %v554
    %v949 = vsub.f32 %v945, %v556
    %v950 = vsub.f32 %v941, %v560
    %v951 = vsub.f32 %v945, %v562
    %v952 = vsub.f32 %v941, %v566
    %v953 = vsub.f32 %v945, %v568
    %v954 = vsub.f32 %v941, %v572
    %v955 = vsub.f32 %v945, %v574
    %v956 = vsub.f32 %v941, %v578
    %v957 = vsub.f32 %v945, %v580
    %v958 = vsub.f32 %v941, %v584
    %v959 = vsub.f32 %v945, %v586
    %v960 = vsub.f32 %v941, %v590
    %v961 = vsub.f32 %v945, %v592
    %v962 = vsub.f32 %v941, %v596
    %v963 = vsub.f32 %v945, %v598
    %v964 = vsub.f32 %v941, %v602
    %v965 = vsub.f32 %v945, %v604
    %v966 = vsub.f32 %v941, %v608
    %v967 = vsub.f32 %v945, %v610
    %v968 = vsub.f32 %v941, %v614
    %v969 = vsub.f32 %v945, %v616
    %v970 = vsub.f32 %v941, %v620
    %v971 = vsub.f32 %v945, %v622
    %v972 = vsub.f32 %v941, %v626
    %v973 = vsub.f32 %v945, %v628
    %v974 = vsub.f32 %v941, %v632
    %v975 = vsub.f32 %v945, %v634
    %v976 = vsub.f32 %v941, %v638
    %v977 = vsub.f32 %v945, %v640
    %v978 = vsub.f32 %v941, %v644
    %v979 = vsub.f32 %v945, %v646
    %v980 = vsub.f32 %v941, %v650
    %v981 = vsub.f32 %v945, %v652
    %v982 = vsub.f32 %v941, %v656
    %v983 = vsub.f32 %v945, %v658
    %v984 = vsub.f32 %v941, %v662
    %v985 = vsub.f32 %v945, %v664
    %v986 = vsub.f32 %v941, %v668
    %v987 = vsub.f32 %v945, %v670
    %v988 = vsub.f32 %v941, %v674
    %v989 = vsub.f32 %v945, %v676
    %v990 = vsub.f32 %v941, %v680
    %v991 = vsub.f32 %v945, %v682
    %v992 = vsub.f32 %v941, %v686
    %v993 = vsub.f32 %v945, %v688
    %v994 = vsub.f32 %v941, %v692
    %v995 = vsub.f32 %v945, %v694
    %v996 = vsub.f32 %v941, %v698
    %v997 = vsub.f32 %v945, %v700
    %v998 = vsub.f32 %v941, %v704
    %v999 = vsub.f32 %v945, %v706
    %v1000 = vsub.f32 %v941, %v710
    %v1001 = vsub.f32 %v945, %v712
    %v1002 = vsub.f32 %v941, %v716
    %v1003 = vsub.f32 %v945, %v718
    %v1004 = vsub.f32 %v941, %v722
    %v1005 = vsub.f32 %v945, %v724
    %v1006 = vsub.f32 %v941, %v728
    %v1007 = vsub.f32 %v945, %v730
    %v1008 = vsub.f32 %v941, %v734
    %v1009 = vsub.f32 %v945, %v736
    %v1010 = vsub.f32 %v941, %v740
    %v1011 = vsub.f32 %v945, %v742
    %v1012 = vsub.f32 %v941, %v746
    %v1013 = vsub.f32 %v945, %v748
    %v1014 = vsub.f32 %v941, %v752
    %v1015 = vsub.f32 %v945, %v754
    %v1016 = vsub.f32 %v941, %v758
    %v1017 = vsub.f32 %v945, %v760
    %v1018 = vsub.f32 %v941, %v764
    %v1019 = vsub.f32 %v945, %v766
    %v1020 = vsub.f32 %v941, %v770
    %v1021 = vsub.f32 %v945, %v772
    %v1022 = vsub.f32 %v941, %v776
    %v1023 = vsub.f32 %v945, %v778
    %v1024 = vsub.f32 %v941, %v782
    %v1025 = vsub.f32 %v945, %v784
    %v1026 = vsub.f32 %v941, %v788
    %v1027 = vsub.f32 %v945, %v790
    %v1028 = vsub.f32 %v941, %v794
    %v1029 = vsub.f32 %v945, %v796
    %v1030 = vsub.f32 %v941, %v800
    %v1031 = vsub.f32 %v945, %v802
    %v1032 = vsub.f32 %v941, %v806
    %v1033 = vsub.f32 %v945, %v808
    %v1034 = vsub.f32 %v941, %v812
    %v1035 = vsub.f32 %v945, %v814
    %v1036 = vsub.f32 %v941, %v818
    %v1037 = vsub.f32 %v945, %v820
    %v1038 = vsub.f32 %v941, %v824
    %v1039 = vsub.f32 %v945, %v826
    %v1040 = vsub.f32 %v941, %v830
    %v1041 = vsub.f32 %v945, %v832
    %v1042 = vsub.f32 %v941, %v836
    %v1043 = vsub.f32 %v945, %v838
    %v1044 = vsub.f32 %v941, %v842
    %v1045 = vsub.f32 %v945, %v844
    %v1046 = vsub.f32 %v941, %v848
    %v1047 = vsub.f32 %v945, %v850
    %v1048 = vsub.f32 %v941, %v854
    %v1049 = vsub.f32 %v945, %v856
    %v1050 = vsub.f32 %v941, %v860
    %v1051 = vsub.f32 %v945, %v862
    %v1052 = vsub.f32 %v941, %v866
    %v1053 = vsub.f32 %v945, %v868
    %v1054 = vsub.f32 %v941, %v872
    %v1055 = vsub.f32 %v945, %v874
    %v1056 = vsub.f32 %v941, %v878
    %v1057 = vsub.f32 %v945, %v880
    %v1058 = vsub.f32 %v941, %v884
    %v1059 = vsub.f32 %v945, %v886
    %v1060 = vsub.f32 %v941, %v890
    %v1061 = vsub.f32 %v945, %v892
    %v1062 = vsub.f32 %v941, %v896
    %v1063 = vsub.f32 %v945, %v898
    %v1064 = vsub.f32 %v941, %v902
    %v1065 = vsub.f32 %v945, %v904
    %v1066 = vsub.f32 %v941, %v908
    %v1067 = vsub.f32 %v945, %v910
    %v1068 = vsub.f32 %v941, %v914
    %v1069 = vsub.f32 %v945, %v916
    %v1070 = vsub.f32 %v941, %v920
    %v1071 = vsub.f32 %v945, %v922
    %v1072 = vsub.f32 %v941, %v926
    %v1073 = vsub.f32 %v945, %v928
    %v1074 = vsub.f32 %v941, %v932
    %v1075 = vsub.f32 %v945, %v934
    %v1076 = vld [vmem:[%s4] sm:$0x3]
    %v1077 = vmin.f32 %v948, %v949
    %1078 = vmin.xlane.f32.xlu0 %v1077
    %v1079 = vpop.xlane.xlu0 %1078
    %v1080 = vmin.f32 %v950, %v951
    %1081 = vmin.xlane.f32.xlu0 %v1080
    %v1082 = vpop.xlane.xlu0 %1081
    %v1083 = vmin.f32 %v952, %v953
    %1084 = vmin.xlane.f32.xlu0 %v1083
    %v1085 = vpop.xlane.xlu0 %1084
    %v1086 = vmin.f32 %v954, %v955
    %1087 = vmin.xlane.f32.xlu0 %v1086
    %v1088 = vpop.xlane.xlu0 %1087
    %v1089 = vmin.f32 %v956, %v957
    %1090 = vmin.xlane.f32.xlu0 %v1089
    %v1091 = vpop.xlane.xlu0 %1090
    %v1092 = vmin.f32 %v958, %v959
    %1093 = vmin.xlane.f32.xlu0 %v1092
    %v1094 = vpop.xlane.xlu0 %1093
    %v1095 = vmin.f32 %v960, %v961
    %1096 = vmin.xlane.f32.xlu0 %v1095
    %v1097 = vpop.xlane.xlu0 %1096
    %v1098 = vmin.f32 %v962, %v963
    %1099 = vmin.xlane.f32.xlu0 %v1098
    %v1100 = vpop.xlane.xlu0 %1099
    %v1101 = vmin.f32 %v964, %v965
    %1102 = vmin.xlane.f32.xlu0 %v1101
    %v1103 = vpop.xlane.xlu0 %1102
    %v1104 = vmin.f32 %v966, %v967
    %1105 = vmin.xlane.f32.xlu0 %v1104
    %v1106 = vpop.xlane.xlu0 %1105
    %v1107 = vmin.f32 %v968, %v969
    %1108 = vmin.xlane.f32.xlu0 %v1107
    %v1109 = vpop.xlane.xlu0 %1108
    %v1110 = vmin.f32 %v970, %v971
    %1111 = vmin.xlane.f32.xlu0 %v1110
    %v1112 = vpop.xlane.xlu0 %1111
    %v1113 = vmin.f32 %v972, %v973
    %1114 = vmin.xlane.f32.xlu0 %v1113
    %v1115 = vpop.xlane.xlu0 %1114
    %v1116 = vmin.f32 %v974, %v975
    %1117 = vmin.xlane.f32.xlu0 %v1116
    %v1118 = vpop.xlane.xlu0 %1117
    %v1119 = vmin.f32 %v976, %v977
    %1120 = vmin.xlane.f32.xlu0 %v1119
    %v1121 = vpop.xlane.xlu0 %1120
    %v1122 = vmin.f32 %v978, %v979
    %1123 = vmin.xlane.f32.xlu0 %v1122
    %v1124 = vpop.xlane.xlu0 %1123
    %v1125 = vmin.f32 %v980, %v981
    %1126 = vmin.xlane.f32.xlu0 %v1125
    %v1127 = vpop.xlane.xlu0 %1126
    %v1128 = vmin.f32 %v982, %v983
    %1129 = vmin.xlane.f32.xlu0 %v1128
    %v1130 = vpop.xlane.xlu0 %1129
    %v1131 = vmin.f32 %v984, %v985
    %1132 = vmin.xlane.f32.xlu0 %v1131
    %v1133 = vpop.xlane.xlu0 %1132
    %v1134 = vmin.f32 %v986, %v987
    %1135 = vmin.xlane.f32.xlu0 %v1134
    %v1136 = vpop.xlane.xlu0 %1135
    %v1137 = vmin.f32 %v988, %v989
    %1138 = vmin.xlane.f32.xlu0 %v1137
    %v1139 = vpop.xlane.xlu0 %1138
    %v1140 = vmin.f32 %v990, %v991
    %1141 = vmin.xlane.f32.xlu0 %v1140
    %v1142 = vpop.xlane.xlu0 %1141
    %v1143 = vmin.f32 %v992, %v993
    %1144 = vmin.xlane.f32.xlu0 %v1143
    %v1145 = vpop.xlane.xlu0 %1144
    %v1146 = vmin.f32 %v994, %v995
    %1147 = vmin.xlane.f32.xlu0 %v1146
    %v1148 = vpop.xlane.xlu0 %1147
    %v1149 = vmin.f32 %v996, %v997
    %1150 = vmin.xlane.f32.xlu0 %v1149
    %v1151 = vpop.xlane.xlu0 %1150
    %v1152 = vmin.f32 %v998, %v999
    %1153 = vmin.xlane.f32.xlu0 %v1152
    %v1154 = vpop.xlane.xlu0 %1153
    %v1155 = vmin.f32 %v1000, %v1001
    %1156 = vmin.xlane.f32.xlu0 %v1155
    %v1157 = vpop.xlane.xlu0 %1156
    %v1158 = vmin.f32 %v1002, %v1003
    %1159 = vmin.xlane.f32.xlu0 %v1158
    %v1160 = vpop.xlane.xlu0 %1159
    %v1161 = vmin.f32 %v1004, %v1005
    %1162 = vmin.xlane.f32.xlu0 %v1161
    %v1163 = vpop.xlane.xlu0 %1162
    %v1164 = vmin.f32 %v1006, %v1007
    %1165 = vmin.xlane.f32.xlu0 %v1164
    %v1166 = vpop.xlane.xlu0 %1165
    %v1167 = vmin.f32 %v1008, %v1009
    %1168 = vmin.xlane.f32.xlu0 %v1167
    %v1169 = vpop.xlane.xlu0 %1168
    %v1170 = vmin.f32 %v1010, %v1011
    %1171 = vmin.xlane.f32.xlu0 %v1170
    %v1172 = vpop.xlane.xlu0 %1171
    %v1173 = vmin.f32 %v1012, %v1013
    %1174 = vmin.xlane.f32.xlu0 %v1173
    %v1175 = vpop.xlane.xlu0 %1174
    %v1176 = vmin.f32 %v1014, %v1015
    %1177 = vmin.xlane.f32.xlu0 %v1176
    %v1178 = vpop.xlane.xlu0 %1177
    %v1179 = vmin.f32 %v1016, %v1017
    %1180 = vmin.xlane.f32.xlu0 %v1179
    %v1181 = vpop.xlane.xlu0 %1180
    %v1182 = vmin.f32 %v1018, %v1019
    %1183 = vmin.xlane.f32.xlu0 %v1182
    %v1184 = vpop.xlane.xlu0 %1183
    %v1185 = vmin.f32 %v1020, %v1021
    %1186 = vmin.xlane.f32.xlu0 %v1185
    %v1187 = vpop.xlane.xlu0 %1186
    %v1188 = vmin.f32 %v1022, %v1023
    %1189 = vmin.xlane.f32.xlu0 %v1188
    %v1190 = vpop.xlane.xlu0 %1189
    %v1191 = vmin.f32 %v1024, %v1025
    %1192 = vmin.xlane.f32.xlu0 %v1191
    %v1193 = vpop.xlane.xlu0 %1192
    %v1194 = vmin.f32 %v1026, %v1027
    %1195 = vmin.xlane.f32.xlu0 %v1194
    %v1196 = vpop.xlane.xlu0 %1195
    %v1197 = vmin.f32 %v1028, %v1029
    %1198 = vmin.xlane.f32.xlu0 %v1197
    %v1199 = vpop.xlane.xlu0 %1198
    %v1200 = vmin.f32 %v1030, %v1031
    %1201 = vmin.xlane.f32.xlu0 %v1200
    %v1202 = vpop.xlane.xlu0 %1201
    %v1203 = vmin.f32 %v1032, %v1033
    %1204 = vmin.xlane.f32.xlu0 %v1203
    %v1205 = vpop.xlane.xlu0 %1204
    %v1206 = vmin.f32 %v1034, %v1035
    %1207 = vmin.xlane.f32.xlu0 %v1206
    %v1208 = vpop.xlane.xlu0 %1207
    %v1209 = vmin.f32 %v1036, %v1037
    %1210 = vmin.xlane.f32.xlu0 %v1209
    %v1211 = vpop.xlane.xlu0 %1210
    %v1212 = vmin.f32 %v1038, %v1039
    %1213 = vmin.xlane.f32.xlu0 %v1212
    %v1214 = vpop.xlane.xlu0 %1213
    %v1215 = vmin.f32 %v1040, %v1041
    %1216 = vmin.xlane.f32.xlu0 %v1215
    %v1217 = vpop.xlane.xlu0 %1216
    %v1218 = vmin.f32 %v1042, %v1043
    %1219 = vmin.xlane.f32.xlu0 %v1218
    %v1220 = vpop.xlane.xlu0 %1219
    %v1221 = vmin.f32 %v1044, %v1045
    %1222 = vmin.xlane.f32.xlu0 %v1221
    %v1223 = vpop.xlane.xlu0 %1222
    %v1224 = vmin.f32 %v1046, %v1047
    %1225 = vmin.xlane.f32.xlu0 %v1224
    %v1226 = vpop.xlane.xlu0 %1225
    %v1227 = vmin.f32 %v1048, %v1049
    %1228 = vmin.xlane.f32.xlu0 %v1227
    %v1229 = vpop.xlane.xlu0 %1228
    %v1230 = vmin.f32 %v1050, %v1051
    %1231 = vmin.xlane.f32.xlu0 %v1230
    %v1232 = vpop.xlane.xlu0 %1231
    %v1233 = vmin.f32 %v1052, %v1053
    %1234 = vmin.xlane.f32.xlu0 %v1233
    %v1235 = vpop.xlane.xlu0 %1234
    %v1236 = vmin.f32 %v1054, %v1055
    %1237 = vmin.xlane.f32.xlu0 %v1236
    %v1238 = vpop.xlane.xlu0 %1237
    %v1239 = vmin.f32 %v1056, %v1057
    %1240 = vmin.xlane.f32.xlu0 %v1239
    %v1241 = vpop.xlane.xlu0 %1240
    %v1242 = vmin.f32 %v1058, %v1059
    %1243 = vmin.xlane.f32.xlu0 %v1242
    %v1244 = vpop.xlane.xlu0 %1243
    %v1245 = vmin.f32 %v1060, %v1061
    %1246 = vmin.xlane.f32.xlu0 %v1245
    %v1247 = vpop.xlane.xlu0 %1246
    %v1248 = vmin.f32 %v1062, %v1063
    %1249 = vmin.xlane.f32.xlu0 %v1248
    %v1250 = vpop.xlane.xlu0 %1249
    %v1251 = vmin.f32 %v1064, %v1065
    %1252 = vmin.xlane.f32.xlu0 %v1251
    %v1253 = vpop.xlane.xlu0 %1252
    %v1254 = vmin.f32 %v1066, %v1067
    %1255 = vmin.xlane.f32.xlu0 %v1254
    %v1256 = vpop.xlane.xlu0 %1255
    %v1257 = vmin.f32 %v1068, %v1069
    %1258 = vmin.xlane.f32.xlu0 %v1257
    %v1259 = vpop.xlane.xlu0 %1258
    %v1260 = vmin.f32 %v1070, %v1071
    %1261 = vmin.xlane.f32.xlu0 %v1260
    %v1262 = vpop.xlane.xlu0 %1261
    %v1263 = vmin.f32 %v1072, %v1073
    %1264 = vmin.xlane.f32.xlu0 %v1263
    %v1265 = vpop.xlane.xlu0 %1264
    %v1266 = vmin.f32 %v1074, %v1075
    %1267 = vmin.xlane.f32.xlu0 %v1266
    %v1268 = vpop.xlane.xlu0 %1267
    %vm1269 = vcmp.le.f32.partialorder %v948, %v1079
    %vm1270 = vcmp.le.f32.partialorder %v949, %v1079
    %vm1271 = vcmp.le.f32.partialorder %v950, %v1082
    %vm1272 = vcmp.le.f32.partialorder %v951, %v1082
    %vm1273 = vcmp.le.f32.partialorder %v952, %v1085
    %vm1274 = vcmp.le.f32.partialorder %v953, %v1085
    %vm1275 = vcmp.le.f32.partialorder %v954, %v1088
    %vm1276 = vcmp.le.f32.partialorder %v955, %v1088
    %vm1277 = vcmp.le.f32.partialorder %v956, %v1091
    %vm1278 = vcmp.le.f32.partialorder %v957, %v1091
    %vm1279 = vcmp.le.f32.partialorder %v958, %v1094
    %vm1280 = vcmp.le.f32.partialorder %v959, %v1094
    %vm1281 = vcmp.le.f32.partialorder %v960, %v1097
    %vm1282 = vcmp.le.f32.partialorder %v961, %v1097
    %vm1283 = vcmp.le.f32.partialorder %v962, %v1100
    %vm1284 = vcmp.le.f32.partialorder %v963, %v1100
    %vm1285 = vcmp.le.f32.partialorder %v964, %v1103
    %vm1286 = vcmp.le.f32.partialorder %v965, %v1103
    %vm1287 = vcmp.le.f32.partialorder %v966, %v1106
    %vm1288 = vcmp.le.f32.partialorder %v967, %v1106
    %vm1289 = vcmp.le.f32.partialorder %v968, %v1109
    %vm1290 = vcmp.le.f32.partialorder %v969, %v1109
    %vm1291 = vcmp.le.f32.partialorder %v970, %v1112
    %vm1292 = vcmp.le.f32.partialorder %v971, %v1112
    %vm1293 = vcmp.le.f32.partialorder %v972, %v1115
    %vm1294 = vcmp.le.f32.partialorder %v973, %v1115
    %vm1295 = vcmp.le.f32.partialorder %v974, %v1118
    %vm1296 = vcmp.le.f32.partialorder %v975, %v1118
    %vm1297 = vcmp.le.f32.partialorder %v976, %v1121
    %vm1298 = vcmp.le.f32.partialorder %v977, %v1121
    %vm1299 = vcmp.le.f32.partialorder %v978, %v1124
    %vm1300 = vcmp.le.f32.partialorder %v979, %v1124
    %vm1301 = vcmp.le.f32.partialorder %v980, %v1127
    %vm1302 = vcmp.le.f32.partialorder %v981, %v1127
    %vm1303 = vcmp.le.f32.partialorder %v982, %v1130
    %vm1304 = vcmp.le.f32.partialorder %v983, %v1130
    %vm1305 = vcmp.le.f32.partialorder %v984, %v1133
    %vm1306 = vcmp.le.f32.partialorder %v985, %v1133
    %vm1307 = vcmp.le.f32.partialorder %v986, %v1136
    %vm1308 = vcmp.le.f32.partialorder %v987, %v1136
    %vm1309 = vcmp.le.f32.partialorder %v988, %v1139
    %vm1310 = vcmp.le.f32.partialorder %v989, %v1139
    %vm1311 = vcmp.le.f32.partialorder %v990, %v1142
    %vm1312 = vcmp.le.f32.partialorder %v991, %v1142
    %vm1313 = vcmp.le.f32.partialorder %v992, %v1145
    %vm1314 = vcmp.le.f32.partialorder %v993, %v1145
    %vm1315 = vcmp.le.f32.partialorder %v994, %v1148
    %vm1316 = vcmp.le.f32.partialorder %v995, %v1148
    %vm1317 = vcmp.le.f32.partialorder %v996, %v1151
    %vm1318 = vcmp.le.f32.partialorder %v997, %v1151
    %vm1319 = vcmp.le.f32.partialorder %v998, %v1154
    %vm1320 = vcmp.le.f32.partialorder %v999, %v1154
    %vm1321 = vcmp.le.f32.partialorder %v1000, %v1157
    %vm1322 = vcmp.le.f32.partialorder %v1001, %v1157
    %vm1323 = vcmp.le.f32.partialorder %v1002, %v1160
    %vm1324 = vcmp.le.f32.partialorder %v1003, %v1160
    %vm1325 = vcmp.le.f32.partialorder %v1004, %v1163
    %vm1326 = vcmp.le.f32.partialorder %v1005, %v1163
    %vm1327 = vcmp.le.f32.partialorder %v1006, %v1166
    %vm1328 = vcmp.le.f32.partialorder %v1007, %v1166
    %vm1329 = vcmp.le.f32.partialorder %v1008, %v1169
    %vm1330 = vcmp.le.f32.partialorder %v1009, %v1169
    %vm1331 = vcmp.le.f32.partialorder %v1010, %v1172
    %vm1332 = vcmp.le.f32.partialorder %v1011, %v1172
    %vm1333 = vcmp.le.f32.partialorder %v1012, %v1175
    %vm1334 = vcmp.le.f32.partialorder %v1013, %v1175
    %vm1335 = vcmp.le.f32.partialorder %v1014, %v1178
    %vm1336 = vcmp.le.f32.partialorder %v1015, %v1178
    %vm1337 = vcmp.le.f32.partialorder %v1016, %v1181
    %vm1338 = vcmp.le.f32.partialorder %v1017, %v1181
    %vm1339 = vcmp.le.f32.partialorder %v1018, %v1184
    %vm1340 = vcmp.le.f32.partialorder %v1019, %v1184
    %vm1341 = vcmp.le.f32.partialorder %v1020, %v1187
    %vm1342 = vcmp.le.f32.partialorder %v1021, %v1187
    %vm1343 = vcmp.le.f32.partialorder %v1022, %v1190
    %vm1344 = vcmp.le.f32.partialorder %v1023, %v1190
    %vm1345 = vcmp.le.f32.partialorder %v1024, %v1193
    %vm1346 = vcmp.le.f32.partialorder %v1025, %v1193
    %vm1347 = vcmp.le.f32.partialorder %v1026, %v1196
    %vm1348 = vcmp.le.f32.partialorder %v1027, %v1196
    %vm1349 = vcmp.le.f32.partialorder %v1028, %v1199
    %vm1350 = vcmp.le.f32.partialorder %v1029, %v1199
    %vm1351 = vcmp.le.f32.partialorder %v1030, %v1202
    %vm1352 = vcmp.le.f32.partialorder %v1031, %v1202
    %vm1353 = vcmp.le.f32.partialorder %v1032, %v1205
    %vm1354 = vcmp.le.f32.partialorder %v1033, %v1205
    %vm1355 = vcmp.le.f32.partialorder %v1034, %v1208
    %vm1356 = vcmp.le.f32.partialorder %v1035, %v1208
    %vm1357 = vcmp.le.f32.partialorder %v1036, %v1211
    %vm1358 = vcmp.le.f32.partialorder %v1037, %v1211
    %vm1359 = vcmp.le.f32.partialorder %v1038, %v1214
    %vm1360 = vcmp.le.f32.partialorder %v1039, %v1214
    %vm1361 = vcmp.le.f32.partialorder %v1040, %v1217
    %vm1362 = vcmp.le.f32.partialorder %v1041, %v1217
    %vm1363 = vcmp.le.f32.partialorder %v1042, %v1220
    %vm1364 = vcmp.le.f32.partialorder %v1043, %v1220
    %vm1365 = vcmp.le.f32.partialorder %v1044, %v1223
    %vm1366 = vcmp.le.f32.partialorder %v1045, %v1223
    %vm1367 = vcmp.le.f32.partialorder %v1046, %v1226
    %vm1368 = vcmp.le.f32.partialorder %v1047, %v1226
    %vm1369 = vcmp.le.f32.partialorder %v1048, %v1229
    %vm1370 = vcmp.le.f32.partialorder %v1049, %v1229
    %vm1371 = vcmp.le.f32.partialorder %v1050, %v1232
    %vm1372 = vcmp.le.f32.partialorder %v1051, %v1232
    %vm1373 = vcmp.le.f32.partialorder %v1052, %v1235
    %vm1374 = vcmp.le.f32.partialorder %v1053, %v1235
    %vm1375 = vcmp.le.f32.partialorder %v1054, %v1238
    %vm1376 = vcmp.le.f32.partialorder %v1055, %v1238
    %vm1377 = vcmp.le.f32.partialorder %v1056, %v1241
    %vm1378 = vcmp.le.f32.partialorder %v1057, %v1241
    %vm1379 = vcmp.le.f32.partialorder %v1058, %v1244
    %vm1380 = vcmp.le.f32.partialorder %v1059, %v1244
    %vm1381 = vcmp.le.f32.partialorder %v1060, %v1247
    %vm1382 = vcmp.le.f32.partialorder %v1061, %v1247
    %vm1383 = vcmp.le.f32.partialorder %v1062, %v1250
    %vm1384 = vcmp.le.f32.partialorder %v1063, %v1250
    %vm1385 = vcmp.le.f32.partialorder %v1064, %v1253
    %vm1386 = vcmp.le.f32.partialorder %v1065, %v1253
    %vm1387 = vcmp.le.f32.partialorder %v1066, %v1256
    %vm1388 = vcmp.le.f32.partialorder %v1067, %v1256
    %vm1389 = vcmp.le.f32.partialorder %v1068, %v1259
    %vm1390 = vcmp.le.f32.partialorder %v1069, %v1259
    %vm1391 = vcmp.le.f32.partialorder %v1070, %v1262
    %vm1392 = vcmp.le.f32.partialorder %v1071, %v1262
    %vm1393 = vcmp.le.f32.partialorder %v1072, %v1265
    %vm1394 = vcmp.le.f32.partialorder %v1073, %v1265
    %vm1395 = vcmp.le.f32.partialorder %v1074, %v1268
    %vm1396 = vcmp.le.f32.partialorder %v1075, %v1268
    %v1398 = vlaneseq
    %v1399 = vshrl.u32 %v1398, 7
    %v1400 = vsub.s32 0, %v1399
    %v1401 = vrot.slane %v1076, %v1400
    %v1402 = vlaneseq
    %v1403 = vshrl.u32 %v1402, 7
    %v1404 = vsub.s32 1, %v1403
    %v1405 = vrot.slane %v1076, %v1404
    %v1408 = vsel %vm1269, %v1401, 256.0
    %v1409 = vsel %vm1270, %v1405, 256.0
    %v1410 = vsel %vm1271, %v1401, 256.0
    %v1411 = vsel %vm1272, %v1405, 256.0
    %v1412 = vsel %vm1273, %v1401, 256.0
    %v1413 = vsel %vm1274, %v1405, 256.0
    %v1414 = vsel %vm1275, %v1401, 256.0
    %v1415 = vsel %vm1276, %v1405, 256.0
    %v1416 = vsel %vm1277, %v1401, 256.0
    %v1417 = vsel %vm1278, %v1405, 256.0
    %v1418 = vsel %vm1279, %v1401, 256.0
    %v1419 = vsel %vm1280, %v1405, 256.0
    %v1420 = vsel %vm1281, %v1401, 256.0
    %v1421 = vsel %vm1282, %v1405, 256.0
    %v1422 = vsel %vm1283, %v1401, 256.0
    %v1423 = vsel %vm1284, %v1405, 256.0
    %v1424 = vsel %vm1285, %v1401, 256.0
    %v1425 = vsel %vm1286, %v1405, 256.0
    %v1426 = vsel %vm1287, %v1401, 256.0
    %v1427 = vsel %vm1288, %v1405, 256.0
    %v1428 = vsel %vm1289, %v1401, 256.0
    %v1429 = vsel %vm1290, %v1405, 256.0
    %v1430 = vsel %vm1291, %v1401, 256.0
    %v1431 = vsel %vm1292, %v1405, 256.0
    %v1432 = vsel %vm1293, %v1401, 256.0
    %v1433 = vsel %vm1294, %v1405, 256.0
    %v1434 = vsel %vm1295, %v1401, 256.0
    %v1435 = vsel %vm1296, %v1405, 256.0
    %v1436 = vsel %vm1297, %v1401, 256.0
    %v1437 = vsel %vm1298, %v1405, 256.0
    %v1438 = vsel %vm1299, %v1401, 256.0
    %v1439 = vsel %vm1300, %v1405, 256.0
    %v1440 = vsel %vm1301, %v1401, 256.0
    %v1441 = vsel %vm1302, %v1405, 256.0
    %v1442 = vsel %vm1303, %v1401, 256.0
    %v1443 = vsel %vm1304, %v1405, 256.0
    %v1444 = vsel %vm1305, %v1401, 256.0
    %v1445 = vsel %vm1306, %v1405, 256.0
    %v1446 = vsel %vm1307, %v1401, 256.0
    %v1447 = vsel %vm1308, %v1405, 256.0
    %v1448 = vsel %vm1309, %v1401, 256.0
    %v1449 = vsel %vm1310, %v1405, 256.0
    %v1450 = vsel %vm1311, %v1401, 256.0
    %v1451 = vsel %vm1312, %v1405, 256.0
    %v1452 = vsel %vm1313, %v1401, 256.0
    %v1453 = vsel %vm1314, %v1405, 256.0
    %v1454 = vsel %vm1315, %v1401, 256.0
    %v1455 = vsel %vm1316, %v1405, 256.0
    %v1456 = vsel %vm1317, %v1401, 256.0
    %v1457 = vsel %vm1318, %v1405, 256.0
    %v1458 = vsel %vm1319, %v1401, 256.0
    %v1459 = vsel %vm1320, %v1405, 256.0
    %v1460 = vsel %vm1321, %v1401, 256.0
    %v1461 = vsel %vm1322, %v1405, 256.0
    %v1462 = vsel %vm1323, %v1401, 256.0
    %v1463 = vsel %vm1324, %v1405, 256.0
    %v1464 = vsel %vm1325, %v1401, 256.0
    %v1465 = vsel %vm1326, %v1405, 256.0
    %v1466 = vsel %vm1327, %v1401, 256.0
    %v1467 = vsel %vm1328, %v1405, 256.0
    %v1468 = vsel %vm1329, %v1401, 256.0
    %v1469 = vsel %vm1330, %v1405, 256.0
    %v1470 = vsel %vm1331, %v1401, 256.0
    %v1471 = vsel %vm1332, %v1405, 256.0
    %v1472 = vsel %vm1333, %v1401, 256.0
    %v1473 = vsel %vm1334, %v1405, 256.0
    %v1474 = vsel %vm1335, %v1401, 256.0
    %v1475 = vsel %vm1336, %v1405, 256.0
    %v1476 = vsel %vm1337, %v1401, 256.0
    %v1477 = vsel %vm1338, %v1405, 256.0
    %v1478 = vsel %vm1339, %v1401, 256.0
    %v1479 = vsel %vm1340, %v1405, 256.0
    %v1480 = vsel %vm1341, %v1401, 256.0
    %v1481 = vsel %vm1342, %v1405, 256.0
    %v1482 = vsel %vm1343, %v1401, 256.0
    %v1483 = vsel %vm1344, %v1405, 256.0
    %v1484 = vsel %vm1345, %v1401, 256.0
    %v1485 = vsel %vm1346, %v1405, 256.0
    %v1486 = vsel %vm1347, %v1401, 256.0
    %v1487 = vsel %vm1348, %v1405, 256.0
    %v1488 = vsel %vm1349, %v1401, 256.0
    %v1489 = vsel %vm1350, %v1405, 256.0
    %v1490 = vsel %vm1351, %v1401, 256.0
    %v1491 = vsel %vm1352, %v1405, 256.0
    %v1492 = vsel %vm1353, %v1401, 256.0
    %v1493 = vsel %vm1354, %v1405, 256.0
    %v1494 = vsel %vm1355, %v1401, 256.0
    %v1495 = vsel %vm1356, %v1405, 256.0
    %v1496 = vsel %vm1357, %v1401, 256.0
    %v1497 = vsel %vm1358, %v1405, 256.0
    %v1498 = vsel %vm1359, %v1401, 256.0
    %v1499 = vsel %vm1360, %v1405, 256.0
    %v1500 = vsel %vm1361, %v1401, 256.0
    %v1501 = vsel %vm1362, %v1405, 256.0
    %v1502 = vsel %vm1363, %v1401, 256.0
    %v1503 = vsel %vm1364, %v1405, 256.0
    %v1504 = vsel %vm1365, %v1401, 256.0
    %v1505 = vsel %vm1366, %v1405, 256.0
    %v1506 = vsel %vm1367, %v1401, 256.0
    %v1507 = vsel %vm1368, %v1405, 256.0
    %v1508 = vsel %vm1369, %v1401, 256.0
    %v1509 = vsel %vm1370, %v1405, 256.0
    %v1510 = vsel %vm1371, %v1401, 256.0
    %v1511 = vsel %vm1372, %v1405, 256.0
    %v1512 = vsel %vm1373, %v1401, 256.0
    %v1513 = vsel %vm1374, %v1405, 256.0
    %v1514 = vsel %vm1375, %v1401, 256.0
    %v1515 = vsel %vm1376, %v1405, 256.0
    %v1516 = vsel %vm1377, %v1401, 256.0
    %v1517 = vsel %vm1378, %v1405, 256.0
    %v1518 = vsel %vm1379, %v1401, 256.0
    %v1519 = vsel %vm1380, %v1405, 256.0
    %v1520 = vsel %vm1381, %v1401, 256.0
    %v1521 = vsel %vm1382, %v1405, 256.0
    %v1522 = vsel %vm1383, %v1401, 256.0
    %v1523 = vsel %vm1384, %v1405, 256.0
    %v1524 = vsel %vm1385, %v1401, 256.0
    %v1525 = vsel %vm1386, %v1405, 256.0
    %v1526 = vsel %vm1387, %v1401, 256.0
    %v1527 = vsel %vm1388, %v1405, 256.0
    %v1528 = vsel %vm1389, %v1401, 256.0
    %v1529 = vsel %vm1390, %v1405, 256.0
    %v1530 = vsel %vm1391, %v1401, 256.0
    %v1531 = vsel %vm1392, %v1405, 256.0
    %v1532 = vsel %vm1393, %v1401, 256.0
    %v1533 = vsel %vm1394, %v1405, 256.0
    %v1534 = vsel %vm1395, %v1401, 256.0
    %v1535 = vsel %vm1396, %v1405, 256.0
    %v1536 = vmin.f32 %v1408, %v1409
    %1537 = vmin.xlane.f32.xlu0 %v1536
    %v1538 = vpop.xlane.xlu0 %1537
    %v1539 = vmin.f32 %v1410, %v1411
    %1540 = vmin.xlane.f32.xlu0 %v1539
    %v1541 = vpop.xlane.xlu0 %1540
    %v1542 = vmin.f32 %v1412, %v1413
    %1543 = vmin.xlane.f32.xlu0 %v1542
    %v1544 = vpop.xlane.xlu0 %1543
    %v1545 = vmin.f32 %v1414, %v1415
    %1546 = vmin.xlane.f32.xlu0 %v1545
    %v1547 = vpop.xlane.xlu0 %1546
    %v1548 = vmin.f32 %v1416, %v1417
    %1549 = vmin.xlane.f32.xlu0 %v1548
    %v1550 = vpop.xlane.xlu0 %1549
    %v1551 = vmin.f32 %v1418, %v1419
    %1552 = vmin.xlane.f32.xlu0 %v1551
    %v1553 = vpop.xlane.xlu0 %1552
    %v1554 = vmin.f32 %v1420, %v1421
    %1555 = vmin.xlane.f32.xlu0 %v1554
    %v1556 = vpop.xlane.xlu0 %1555
    %v1557 = vmin.f32 %v1422, %v1423
    %1558 = vmin.xlane.f32.xlu0 %v1557
    %v1559 = vpop.xlane.xlu0 %1558
    %v1560 = vmin.f32 %v1424, %v1425
    %1561 = vmin.xlane.f32.xlu0 %v1560
    %v1562 = vpop.xlane.xlu0 %1561
    %v1563 = vmin.f32 %v1426, %v1427
    %1564 = vmin.xlane.f32.xlu0 %v1563
    %v1565 = vpop.xlane.xlu0 %1564
    %v1566 = vmin.f32 %v1428, %v1429
    %1567 = vmin.xlane.f32.xlu0 %v1566
    %v1568 = vpop.xlane.xlu0 %1567
    %v1569 = vmin.f32 %v1430, %v1431
    %1570 = vmin.xlane.f32.xlu0 %v1569
    %v1571 = vpop.xlane.xlu0 %1570
    %v1572 = vmin.f32 %v1432, %v1433
    %1573 = vmin.xlane.f32.xlu0 %v1572
    %v1574 = vpop.xlane.xlu0 %1573
    %v1575 = vmin.f32 %v1434, %v1435
    %1576 = vmin.xlane.f32.xlu0 %v1575
    %v1577 = vpop.xlane.xlu0 %1576
    %v1578 = vmin.f32 %v1436, %v1437
    %1579 = vmin.xlane.f32.xlu0 %v1578
    %v1580 = vpop.xlane.xlu0 %1579
    %v1581 = vmin.f32 %v1438, %v1439
    %1582 = vmin.xlane.f32.xlu0 %v1581
    %v1583 = vpop.xlane.xlu0 %1582
    %v1584 = vmin.f32 %v1440, %v1441
    %1585 = vmin.xlane.f32.xlu0 %v1584
    %v1586 = vpop.xlane.xlu0 %1585
    %v1587 = vmin.f32 %v1442, %v1443
    %1588 = vmin.xlane.f32.xlu0 %v1587
    %v1589 = vpop.xlane.xlu0 %1588
    %v1590 = vmin.f32 %v1444, %v1445
    %1591 = vmin.xlane.f32.xlu0 %v1590
    %v1592 = vpop.xlane.xlu0 %1591
    %v1593 = vmin.f32 %v1446, %v1447
    %1594 = vmin.xlane.f32.xlu0 %v1593
    %v1595 = vpop.xlane.xlu0 %1594
    %v1596 = vmin.f32 %v1448, %v1449
    %1597 = vmin.xlane.f32.xlu0 %v1596
    %v1598 = vpop.xlane.xlu0 %1597
    %v1599 = vmin.f32 %v1450, %v1451
    %1600 = vmin.xlane.f32.xlu0 %v1599
    %v1601 = vpop.xlane.xlu0 %1600
    %v1602 = vmin.f32 %v1452, %v1453
    %1603 = vmin.xlane.f32.xlu0 %v1602
    %v1604 = vpop.xlane.xlu0 %1603
    %v1605 = vmin.f32 %v1454, %v1455
    %1606 = vmin.xlane.f32.xlu0 %v1605
    %v1607 = vpop.xlane.xlu0 %1606
    %v1608 = vmin.f32 %v1456, %v1457
    %1609 = vmin.xlane.f32.xlu0 %v1608
    %v1610 = vpop.xlane.xlu0 %1609
    %v1611 = vmin.f32 %v1458, %v1459
    %1612 = vmin.xlane.f32.xlu0 %v1611
    %v1613 = vpop.xlane.xlu0 %1612
    %v1614 = vmin.f32 %v1460, %v1461
    %1615 = vmin.xlane.f32.xlu0 %v1614
    %v1616 = vpop.xlane.xlu0 %1615
    %v1617 = vmin.f32 %v1462, %v1463
    %1618 = vmin.xlane.f32.xlu0 %v1617
    %v1619 = vpop.xlane.xlu0 %1618
    %v1620 = vmin.f32 %v1464, %v1465
    %1621 = vmin.xlane.f32.xlu0 %v1620
    %v1622 = vpop.xlane.xlu0 %1621
    %v1623 = vmin.f32 %v1466, %v1467
    %1624 = vmin.xlane.f32.xlu0 %v1623
    %v1625 = vpop.xlane.xlu0 %1624
    %v1626 = vmin.f32 %v1468, %v1469
    %1627 = vmin.xlane.f32.xlu0 %v1626
    %v1628 = vpop.xlane.xlu0 %1627
    %v1629 = vmin.f32 %v1470, %v1471
    %1630 = vmin.xlane.f32.xlu0 %v1629
    %v1631 = vpop.xlane.xlu0 %1630
    %v1632 = vmin.f32 %v1472, %v1473
    %1633 = vmin.xlane.f32.xlu0 %v1632
    %v1634 = vpop.xlane.xlu0 %1633
    %v1635 = vmin.f32 %v1474, %v1475
    %1636 = vmin.xlane.f32.xlu0 %v1635
    %v1637 = vpop.xlane.xlu0 %1636
    %v1638 = vmin.f32 %v1476, %v1477
    %1639 = vmin.xlane.f32.xlu0 %v1638
    %v1640 = vpop.xlane.xlu0 %1639
    %v1641 = vmin.f32 %v1478, %v1479
    %1642 = vmin.xlane.f32.xlu0 %v1641
    %v1643 = vpop.xlane.xlu0 %1642
    %v1644 = vmin.f32 %v1480, %v1481
    %1645 = vmin.xlane.f32.xlu0 %v1644
    %v1646 = vpop.xlane.xlu0 %1645
    %v1647 = vmin.f32 %v1482, %v1483
    %1648 = vmin.xlane.f32.xlu0 %v1647
    %v1649 = vpop.xlane.xlu0 %1648
    %v1650 = vmin.f32 %v1484, %v1485
    %1651 = vmin.xlane.f32.xlu0 %v1650
    %v1652 = vpop.xlane.xlu0 %1651
    %v1653 = vmin.f32 %v1486, %v1487
    %1654 = vmin.xlane.f32.xlu0 %v1653
    %v1655 = vpop.xlane.xlu0 %1654
    %v1656 = vmin.f32 %v1488, %v1489
    %1657 = vmin.xlane.f32.xlu0 %v1656
    %v1658 = vpop.xlane.xlu0 %1657
    %v1659 = vmin.f32 %v1490, %v1491
    %1660 = vmin.xlane.f32.xlu0 %v1659
    %v1661 = vpop.xlane.xlu0 %1660
    %v1662 = vmin.f32 %v1492, %v1493
    %1663 = vmin.xlane.f32.xlu0 %v1662
    %v1664 = vpop.xlane.xlu0 %1663
    %v1665 = vmin.f32 %v1494, %v1495
    %1666 = vmin.xlane.f32.xlu0 %v1665
    %v1667 = vpop.xlane.xlu0 %1666
    %v1668 = vmin.f32 %v1496, %v1497
    %1669 = vmin.xlane.f32.xlu0 %v1668
    %v1670 = vpop.xlane.xlu0 %1669
    %v1671 = vmin.f32 %v1498, %v1499
    %1672 = vmin.xlane.f32.xlu0 %v1671
    %v1673 = vpop.xlane.xlu0 %1672
    %v1674 = vmin.f32 %v1500, %v1501
    %1675 = vmin.xlane.f32.xlu0 %v1674
    %v1676 = vpop.xlane.xlu0 %1675
    %v1677 = vmin.f32 %v1502, %v1503
    %1678 = vmin.xlane.f32.xlu0 %v1677
    %v1679 = vpop.xlane.xlu0 %1678
    %v1680 = vmin.f32 %v1504, %v1505
    %1681 = vmin.xlane.f32.xlu0 %v1680
    %v1682 = vpop.xlane.xlu0 %1681
    %v1683 = vmin.f32 %v1506, %v1507
    %1684 = vmin.xlane.f32.xlu0 %v1683
    %v1685 = vpop.xlane.xlu0 %1684
    %v1686 = vmin.f32 %v1508, %v1509
    %1687 = vmin.xlane.f32.xlu0 %v1686
    %v1688 = vpop.xlane.xlu0 %1687
    %v1689 = vmin.f32 %v1510, %v1511
    %1690 = vmin.xlane.f32.xlu0 %v1689
    %v1691 = vpop.xlane.xlu0 %1690
    %v1692 = vmin.f32 %v1512, %v1513
    %1693 = vmin.xlane.f32.xlu0 %v1692
    %v1694 = vpop.xlane.xlu0 %1693
    %v1695 = vmin.f32 %v1514, %v1515
    %1696 = vmin.xlane.f32.xlu0 %v1695
    %v1697 = vpop.xlane.xlu0 %1696
    %v1698 = vmin.f32 %v1516, %v1517
    %1699 = vmin.xlane.f32.xlu0 %v1698
    %v1700 = vpop.xlane.xlu0 %1699
    %v1701 = vmin.f32 %v1518, %v1519
    %1702 = vmin.xlane.f32.xlu0 %v1701
    %v1703 = vpop.xlane.xlu0 %1702
    %v1704 = vmin.f32 %v1520, %v1521
    %1705 = vmin.xlane.f32.xlu0 %v1704
    %v1706 = vpop.xlane.xlu0 %1705
    %v1707 = vmin.f32 %v1522, %v1523
    %1708 = vmin.xlane.f32.xlu0 %v1707
    %v1709 = vpop.xlane.xlu0 %1708
    %v1710 = vmin.f32 %v1524, %v1525
    %1711 = vmin.xlane.f32.xlu0 %v1710
    %v1712 = vpop.xlane.xlu0 %1711
    %v1713 = vmin.f32 %v1526, %v1527
    %1714 = vmin.xlane.f32.xlu0 %v1713
    %v1715 = vpop.xlane.xlu0 %1714
    %v1716 = vmin.f32 %v1528, %v1529
    %1717 = vmin.xlane.f32.xlu0 %v1716
    %v1718 = vpop.xlane.xlu0 %1717
    %v1719 = vmin.f32 %v1530, %v1531
    %1720 = vmin.xlane.f32.xlu0 %v1719
    %v1721 = vpop.xlane.xlu0 %1720
    %v1722 = vmin.f32 %v1532, %v1533
    %1723 = vmin.xlane.f32.xlu0 %v1722
    %v1724 = vpop.xlane.xlu0 %1723
    %v1725 = vmin.f32 %v1534, %v1535
    %1726 = vmin.xlane.f32.xlu0 %v1725
    %v1727 = vpop.xlane.xlu0 %1726
    %vm1728 = vcmp.eq.f32.partialorder %v1401, %v1538
    %vm1729 = vcmp.eq.f32.partialorder %v1405, %v1538
    %vm1730 = vcmp.eq.f32.partialorder %v1401, %v1541
    %vm1731 = vcmp.eq.f32.partialorder %v1405, %v1541
    %vm1732 = vcmp.eq.f32.partialorder %v1401, %v1544
    %vm1733 = vcmp.eq.f32.partialorder %v1405, %v1544
    %vm1734 = vcmp.eq.f32.partialorder %v1401, %v1547
    %vm1735 = vcmp.eq.f32.partialorder %v1405, %v1547
    %vm1736 = vcmp.eq.f32.partialorder %v1401, %v1550
    %vm1737 = vcmp.eq.f32.partialorder %v1405, %v1550
    %vm1738 = vcmp.eq.f32.partialorder %v1401, %v1553
    %vm1739 = vcmp.eq.f32.partialorder %v1405, %v1553
    %vm1740 = vcmp.eq.f32.partialorder %v1401, %v1556
    %vm1741 = vcmp.eq.f32.partialorder %v1405, %v1556
    %vm1742 = vcmp.eq.f32.partialorder %v1401, %v1559
    %vm1743 = vcmp.eq.f32.partialorder %v1405, %v1559
    %vm1744 = vcmp.eq.f32.partialorder %v1401, %v1562
    %vm1745 = vcmp.eq.f32.partialorder %v1405, %v1562
    %vm1746 = vcmp.eq.f32.partialorder %v1401, %v1565
    %vm1747 = vcmp.eq.f32.partialorder %v1405, %v1565
    %vm1748 = vcmp.eq.f32.partialorder %v1401, %v1568
    %vm1749 = vcmp.eq.f32.partialorder %v1405, %v1568
    %vm1750 = vcmp.eq.f32.partialorder %v1401, %v1571
    %vm1751 = vcmp.eq.f32.partialorder %v1405, %v1571
    %vm1752 = vcmp.eq.f32.partialorder %v1401, %v1574
    %vm1753 = vcmp.eq.f32.partialorder %v1405, %v1574
    %vm1754 = vcmp.eq.f32.partialorder %v1401, %v1577
    %vm1755 = vcmp.eq.f32.partialorder %v1405, %v1577
    %vm1756 = vcmp.eq.f32.partialorder %v1401, %v1580
    %vm1757 = vcmp.eq.f32.partialorder %v1405, %v1580
    %vm1758 = vcmp.eq.f32.partialorder %v1401, %v1583
    %vm1759 = vcmp.eq.f32.partialorder %v1405, %v1583
    %vm1760 = vcmp.eq.f32.partialorder %v1401, %v1586
    %vm1761 = vcmp.eq.f32.partialorder %v1405, %v1586
    %vm1762 = vcmp.eq.f32.partialorder %v1401, %v1589
    %vm1763 = vcmp.eq.f32.partialorder %v1405, %v1589
    %vm1764 = vcmp.eq.f32.partialorder %v1401, %v1592
    %vm1765 = vcmp.eq.f32.partialorder %v1405, %v1592
    %vm1766 = vcmp.eq.f32.partialorder %v1401, %v1595
    %vm1767 = vcmp.eq.f32.partialorder %v1405, %v1595
    %vm1768 = vcmp.eq.f32.partialorder %v1401, %v1598
    %vm1769 = vcmp.eq.f32.partialorder %v1405, %v1598
    %vm1770 = vcmp.eq.f32.partialorder %v1401, %v1601
    %vm1771 = vcmp.eq.f32.partialorder %v1405, %v1601
    %vm1772 = vcmp.eq.f32.partialorder %v1401, %v1604
    %vm1773 = vcmp.eq.f32.partialorder %v1405, %v1604
    %vm1774 = vcmp.eq.f32.partialorder %v1401, %v1607
    %vm1775 = vcmp.eq.f32.partialorder %v1405, %v1607
    %vm1776 = vcmp.eq.f32.partialorder %v1401, %v1610
    %vm1777 = vcmp.eq.f32.partialorder %v1405, %v1610
    %vm1778 = vcmp.eq.f32.partialorder %v1401, %v1613
    %vm1779 = vcmp.eq.f32.partialorder %v1405, %v1613
    %vm1780 = vcmp.eq.f32.partialorder %v1401, %v1616
    %vm1781 = vcmp.eq.f32.partialorder %v1405, %v1616
    %vm1782 = vcmp.eq.f32.partialorder %v1401, %v1619
    %vm1783 = vcmp.eq.f32.partialorder %v1405, %v1619
    %vm1784 = vcmp.eq.f32.partialorder %v1401, %v1622
    %vm1785 = vcmp.eq.f32.partialorder %v1405, %v1622
    %vm1786 = vcmp.eq.f32.partialorder %v1401, %v1625
    %vm1787 = vcmp.eq.f32.partialorder %v1405, %v1625
    %vm1788 = vcmp.eq.f32.partialorder %v1401, %v1628
    %vm1789 = vcmp.eq.f32.partialorder %v1405, %v1628
    %vm1790 = vcmp.eq.f32.partialorder %v1401, %v1631
    %vm1791 = vcmp.eq.f32.partialorder %v1405, %v1631
    %vm1792 = vcmp.eq.f32.partialorder %v1401, %v1634
    %vm1793 = vcmp.eq.f32.partialorder %v1405, %v1634
    %vm1794 = vcmp.eq.f32.partialorder %v1401, %v1637
    %vm1795 = vcmp.eq.f32.partialorder %v1405, %v1637
    %vm1796 = vcmp.eq.f32.partialorder %v1401, %v1640
    %vm1797 = vcmp.eq.f32.partialorder %v1405, %v1640
    %vm1798 = vcmp.eq.f32.partialorder %v1401, %v1643
    %vm1799 = vcmp.eq.f32.partialorder %v1405, %v1643
    %vm1800 = vcmp.eq.f32.partialorder %v1401, %v1646
    %vm1801 = vcmp.eq.f32.partialorder %v1405, %v1646
    %vm1802 = vcmp.eq.f32.partialorder %v1401, %v1649
    %vm1803 = vcmp.eq.f32.partialorder %v1405, %v1649
    %vm1804 = vcmp.eq.f32.partialorder %v1401, %v1652
    %vm1805 = vcmp.eq.f32.partialorder %v1405, %v1652
    %vm1806 = vcmp.eq.f32.partialorder %v1401, %v1655
    %vm1807 = vcmp.eq.f32.partialorder %v1405, %v1655
    %vm1808 = vcmp.eq.f32.partialorder %v1401, %v1658
    %vm1809 = vcmp.eq.f32.partialorder %v1405, %v1658
    %vm1810 = vcmp.eq.f32.partialorder %v1401, %v1661
    %vm1811 = vcmp.eq.f32.partialorder %v1405, %v1661
    %vm1812 = vcmp.eq.f32.partialorder %v1401, %v1664
    %vm1813 = vcmp.eq.f32.partialorder %v1405, %v1664
    %vm1814 = vcmp.eq.f32.partialorder %v1401, %v1667
    %vm1815 = vcmp.eq.f32.partialorder %v1405, %v1667
    %vm1816 = vcmp.eq.f32.partialorder %v1401, %v1670
    %vm1817 = vcmp.eq.f32.partialorder %v1405, %v1670
    %vm1818 = vcmp.eq.f32.partialorder %v1401, %v1673
    %vm1819 = vcmp.eq.f32.partialorder %v1405, %v1673
    %vm1820 = vcmp.eq.f32.partialorder %v1401, %v1676
    %vm1821 = vcmp.eq.f32.partialorder %v1405, %v1676
    %vm1822 = vcmp.eq.f32.partialorder %v1401, %v1679
    %vm1823 = vcmp.eq.f32.partialorder %v1405, %v1679
    %vm1824 = vcmp.eq.f32.partialorder %v1401, %v1682
    %vm1825 = vcmp.eq.f32.partialorder %v1405, %v1682
    %vm1826 = vcmp.eq.f32.partialorder %v1401, %v1685
    %vm1827 = vcmp.eq.f32.partialorder %v1405, %v1685
    %vm1828 = vcmp.eq.f32.partialorder %v1401, %v1688
    %vm1829 = vcmp.eq.f32.partialorder %v1405, %v1688
    %vm1830 = vcmp.eq.f32.partialorder %v1401, %v1691
    %vm1831 = vcmp.eq.f32.partialorder %v1405, %v1691
    %vm1832 = vcmp.eq.f32.partialorder %v1401, %v1694
    %vm1833 = vcmp.eq.f32.partialorder %v1405, %v1694
    %vm1834 = vcmp.eq.f32.partialorder %v1401, %v1697
    %vm1835 = vcmp.eq.f32.partialorder %v1405, %v1697
    %vm1836 = vcmp.eq.f32.partialorder %v1401, %v1700
    %vm1837 = vcmp.eq.f32.partialorder %v1405, %v1700
    %vm1838 = vcmp.eq.f32.partialorder %v1401, %v1703
    %vm1839 = vcmp.eq.f32.partialorder %v1405, %v1703
    %vm1840 = vcmp.eq.f32.partialorder %v1401, %v1706
    %vm1841 = vcmp.eq.f32.partialorder %v1405, %v1706
    %vm1842 = vcmp.eq.f32.partialorder %v1401, %v1709
    %vm1843 = vcmp.eq.f32.partialorder %v1405, %v1709
    %vm1844 = vcmp.eq.f32.partialorder %v1401, %v1712
    %vm1845 = vcmp.eq.f32.partialorder %v1405, %v1712
    %vm1846 = vcmp.eq.f32.partialorder %v1401, %v1715
    %vm1847 = vcmp.eq.f32.partialorder %v1405, %v1715
    %vm1848 = vcmp.eq.f32.partialorder %v1401, %v1718
    %vm1849 = vcmp.eq.f32.partialorder %v1405, %v1718
    %vm1850 = vcmp.eq.f32.partialorder %v1401, %v1721
    %vm1851 = vcmp.eq.f32.partialorder %v1405, %v1721
    %vm1852 = vcmp.eq.f32.partialorder %v1401, %v1724
    %vm1853 = vcmp.eq.f32.partialorder %v1405, %v1724
    %vm1854 = vcmp.eq.f32.partialorder %v1401, %v1727
    %vm1855 = vcmp.eq.f32.partialorder %v1405, %v1727
    %v1856 = vsel %vm1728, 1, 0
    %v1857 = vsel %vm1729, 1, 0
    %v1858 = vsel %vm1730, 1, 0
    %v1859 = vsel %vm1731, 1, 0
    %v1860 = vsel %vm1732, 1, 0
    %v1861 = vsel %vm1733, 1, 0
    %v1862 = vsel %vm1734, 1, 0
    %v1863 = vsel %vm1735, 1, 0
    %v1864 = vsel %vm1736, 1, 0
    %v1865 = vsel %vm1737, 1, 0
    %v1866 = vsel %vm1738, 1, 0
    %v1867 = vsel %vm1739, 1, 0
    %v1868 = vsel %vm1740, 1, 0
    %v1869 = vsel %vm1741, 1, 0
    %v1870 = vsel %vm1742, 1, 0
    %v1871 = vsel %vm1743, 1, 0
    %v1872 = vsel %vm1744, 1, 0
    %v1873 = vsel %vm1745, 1, 0
    %v1874 = vsel %vm1746, 1, 0
    %v1875 = vsel %vm1747, 1, 0
    %v1876 = vsel %vm1748, 1, 0
    %v1877 = vsel %vm1749, 1, 0
    %v1878 = vsel %vm1750, 1, 0
    %v1879 = vsel %vm1751, 1, 0
    %v1880 = vsel %vm1752, 1, 0
    %v1881 = vsel %vm1753, 1, 0
    %v1882 = vsel %vm1754, 1, 0
    %v1883 = vsel %vm1755, 1, 0
    %v1884 = vsel %vm1756, 1, 0
    %v1885 = vsel %vm1757, 1, 0
    %v1886 = vsel %vm1758, 1, 0
    %v1887 = vsel %vm1759, 1, 0
    %v1888 = vsel %vm1760, 1, 0
    %v1889 = vsel %vm1761, 1, 0
    %v1890 = vsel %vm1762, 1, 0
    %v1891 = vsel %vm1763, 1, 0
    %v1892 = vsel %vm1764, 1, 0
    %v1893 = vsel %vm1765, 1, 0
    %v1894 = vsel %vm1766, 1, 0
    %v1895 = vsel %vm1767, 1, 0
    %v1896 = vsel %vm1768, 1, 0
    %v1897 = vsel %vm1769, 1, 0
    %v1898 = vsel %vm1770, 1, 0
    %v1899 = vsel %vm1771, 1, 0
    %v1900 = vsel %vm1772, 1, 0
    %v1901 = vsel %vm1773, 1, 0
    %v1902 = vsel %vm1774, 1, 0
    %v1903 = vsel %vm1775, 1, 0
    %v1904 = vsel %vm1776, 1, 0
    %v1905 = vsel %vm1777, 1, 0
    %v1906 = vsel %vm1778, 1, 0
    %v1907 = vsel %vm1779, 1, 0
    %v1908 = vsel %vm1780, 1, 0
    %v1909 = vsel %vm1781, 1, 0
    %v1910 = vsel %vm1782, 1, 0
    %v1911 = vsel %vm1783, 1, 0
    %v1912 = vsel %vm1784, 1, 0
    %v1913 = vsel %vm1785, 1, 0
    %v1914 = vsel %vm1786, 1, 0
    %v1915 = vsel %vm1787, 1, 0
    %v1916 = vsel %vm1788, 1, 0
    %v1917 = vsel %vm1789, 1, 0
    %v1918 = vsel %vm1790, 1, 0
    %v1919 = vsel %vm1791, 1, 0
    %v1920 = vsel %vm1792, 1, 0
    %v1921 = vsel %vm1793, 1, 0
    %v1922 = vsel %vm1794, 1, 0
    %v1923 = vsel %vm1795, 1, 0
    %v1924 = vsel %vm1796, 1, 0
    %v1925 = vsel %vm1797, 1, 0
    %v1926 = vsel %vm1798, 1, 0
    %v1927 = vsel %vm1799, 1, 0
    %v1928 = vsel %vm1800, 1, 0
    %v1929 = vsel %vm1801, 1, 0
    %v1930 = vsel %vm1802, 1, 0
    %v1931 = vsel %vm1803, 1, 0
    %v1932 = vsel %vm1804, 1, 0
    %v1933 = vsel %vm1805, 1, 0
    %v1934 = vsel %vm1806, 1, 0
    %v1935 = vsel %vm1807, 1, 0
    %v1936 = vsel %vm1808, 1, 0
    %v1937 = vsel %vm1809, 1, 0
    %v1938 = vsel %vm1810, 1, 0
    %v1939 = vsel %vm1811, 1, 0
    %v1940 = vsel %vm1812, 1, 0
    %v1941 = vsel %vm1813, 1, 0
    %v1942 = vsel %vm1814, 1, 0
    %v1943 = vsel %vm1815, 1, 0
    %v1944 = vsel %vm1816, 1, 0
    %v1945 = vsel %vm1817, 1, 0
    %v1946 = vsel %vm1818, 1, 0
    %v1947 = vsel %vm1819, 1, 0
    %v1948 = vsel %vm1820, 1, 0
    %v1949 = vsel %vm1821, 1, 0
    %v1950 = vsel %vm1822, 1, 0
    %v1951 = vsel %vm1823, 1, 0
    %v1952 = vsel %vm1824, 1, 0
    %v1953 = vsel %vm1825, 1, 0
    %v1954 = vsel %vm1826, 1, 0
    %v1955 = vsel %vm1827, 1, 0
    %v1956 = vsel %vm1828, 1, 0
    %v1957 = vsel %vm1829, 1, 0
    %v1958 = vsel %vm1830, 1, 0
    %v1959 = vsel %vm1831, 1, 0
    %v1960 = vsel %vm1832, 1, 0
    %v1961 = vsel %vm1833, 1, 0
    %v1962 = vsel %vm1834, 1, 0
    %v1963 = vsel %vm1835, 1, 0
    %v1964 = vsel %vm1836, 1, 0
    %v1965 = vsel %vm1837, 1, 0
    %v1966 = vsel %vm1838, 1, 0
    %v1967 = vsel %vm1839, 1, 0
    %v1968 = vsel %vm1840, 1, 0
    %v1969 = vsel %vm1841, 1, 0
    %v1970 = vsel %vm1842, 1, 0
    %v1971 = vsel %vm1843, 1, 0
    %v1972 = vsel %vm1844, 1, 0
    %v1973 = vsel %vm1845, 1, 0
    %v1974 = vsel %vm1846, 1, 0
    %v1975 = vsel %vm1847, 1, 0
    %v1976 = vsel %vm1848, 1, 0
    %v1977 = vsel %vm1849, 1, 0
    %v1978 = vsel %vm1850, 1, 0
    %v1979 = vsel %vm1851, 1, 0
    %v1980 = vsel %vm1852, 1, 0
    %v1981 = vsel %vm1853, 1, 0
    %v1982 = vsel %vm1854, 1, 0
    %v1983 = vsel %vm1855, 1, 0
    %v1984 = vcvt.s32.f32 %v1856
    %v1985 = vcvt.s32.f32 %v1857
    %v1986 = vcvt.s32.f32 %v1858
    %v1987 = vcvt.s32.f32 %v1859
    %v1988 = vcvt.s32.f32 %v1860
    %v1989 = vcvt.s32.f32 %v1861
    %v1990 = vcvt.s32.f32 %v1862
    %v1991 = vcvt.s32.f32 %v1863
    %v1992 = vcvt.s32.f32 %v1864
    %v1993 = vcvt.s32.f32 %v1865
    %v1994 = vcvt.s32.f32 %v1866
    %v1995 = vcvt.s32.f32 %v1867
    %v1996 = vcvt.s32.f32 %v1868
    %v1997 = vcvt.s32.f32 %v1869
    %v1998 = vcvt.s32.f32 %v1870
    %v1999 = vcvt.s32.f32 %v1871
    %v2000 = vcvt.s32.f32 %v1872
    %v2001 = vcvt.s32.f32 %v1873
    %v2002 = vcvt.s32.f32 %v1874
    %v2003 = vcvt.s32.f32 %v1875
    %v2004 = vcvt.s32.f32 %v1876
    %v2005 = vcvt.s32.f32 %v1877
    %v2006 = vcvt.s32.f32 %v1878
    %v2007 = vcvt.s32.f32 %v1879
    %v2008 = vcvt.s32.f32 %v1880
    %v2009 = vcvt.s32.f32 %v1881
    %v2010 = vcvt.s32.f32 %v1882
    %v2011 = vcvt.s32.f32 %v1883
    %v2012 = vcvt.s32.f32 %v1884
    %v2013 = vcvt.s32.f32 %v1885
    %v2014 = vcvt.s32.f32 %v1886
    %v2015 = vcvt.s32.f32 %v1887
    %v2016 = vcvt.s32.f32 %v1888
    %v2017 = vcvt.s32.f32 %v1889
    %v2018 = vcvt.s32.f32 %v1890
    %v2019 = vcvt.s32.f32 %v1891
    %v2020 = vcvt.s32.f32 %v1892
    %v2021 = vcvt.s32.f32 %v1893
    %v2022 = vcvt.s32.f32 %v1894
    %v2023 = vcvt.s32.f32 %v1895
    %v2024 = vcvt.s32.f32 %v1896
    %v2025 = vcvt.s32.f32 %v1897
    %v2026 = vcvt.s32.f32 %v1898
    %v2027 = vcvt.s32.f32 %v1899
    %v2028 = vcvt.s32.f32 %v1900
    %v2029 = vcvt.s32.f32 %v1901
    %v2030 = vcvt.s32.f32 %v1902
    %v2031 = vcvt.s32.f32 %v1903
    %v2032 = vcvt.s32.f32 %v1904
    %v2033 = vcvt.s32.f32 %v1905
    %v2034 = vcvt.s32.f32 %v1906
    %v2035 = vcvt.s32.f32 %v1907
    %v2036 = vcvt.s32.f32 %v1908
    %v2037 = vcvt.s32.f32 %v1909
    %v2038 = vcvt.s32.f32 %v1910
    %v2039 = vcvt.s32.f32 %v1911
    %v2040 = vcvt.s32.f32 %v1912
    %v2041 = vcvt.s32.f32 %v1913
    %v2042 = vcvt.s32.f32 %v1914
    %v2043 = vcvt.s32.f32 %v1915
    %v2044 = vcvt.s32.f32 %v1916
    %v2045 = vcvt.s32.f32 %v1917
    %v2046 = vcvt.s32.f32 %v1918
    %v2047 = vcvt.s32.f32 %v1919
    %v2048 = vcvt.s32.f32 %v1920
    %v2049 = vcvt.s32.f32 %v1921
    %v2050 = vcvt.s32.f32 %v1922
    %v2051 = vcvt.s32.f32 %v1923
    %v2052 = vcvt.s32.f32 %v1924
    %v2053 = vcvt.s32.f32 %v1925
    %v2054 = vcvt.s32.f32 %v1926
    %v2055 = vcvt.s32.f32 %v1927
    %v2056 = vcvt.s32.f32 %v1928
    %v2057 = vcvt.s32.f32 %v1929
    %v2058 = vcvt.s32.f32 %v1930
    %v2059 = vcvt.s32.f32 %v1931
    %v2060 = vcvt.s32.f32 %v1932
    %v2061 = vcvt.s32.f32 %v1933
    %v2062 = vcvt.s32.f32 %v1934
    %v2063 = vcvt.s32.f32 %v1935
    %v2064 = vcvt.s32.f32 %v1936
    %v2065 = vcvt.s32.f32 %v1937
    %v2066 = vcvt.s32.f32 %v1938
    %v2067 = vcvt.s32.f32 %v1939
    %v2068 = vcvt.s32.f32 %v1940
    %v2069 = vcvt.s32.f32 %v1941
    %v2070 = vcvt.s32.f32 %v1942
    %v2071 = vcvt.s32.f32 %v1943
    %v2072 = vcvt.s32.f32 %v1944
    %v2073 = vcvt.s32.f32 %v1945
    %v2074 = vcvt.s32.f32 %v1946
    %v2075 = vcvt.s32.f32 %v1947
    %v2076 = vcvt.s32.f32 %v1948
    %v2077 = vcvt.s32.f32 %v1949
    %v2078 = vcvt.s32.f32 %v1950
    %v2079 = vcvt.s32.f32 %v1951
    %v2080 = vcvt.s32.f32 %v1952
    %v2081 = vcvt.s32.f32 %v1953
    %v2082 = vcvt.s32.f32 %v1954
    %v2083 = vcvt.s32.f32 %v1955
    %v2084 = vcvt.s32.f32 %v1956
    %v2085 = vcvt.s32.f32 %v1957
    %v2086 = vcvt.s32.f32 %v1958
    %v2087 = vcvt.s32.f32 %v1959
    %v2088 = vcvt.s32.f32 %v1960
    %v2089 = vcvt.s32.f32 %v1961
    %v2090 = vcvt.s32.f32 %v1962
    %v2091 = vcvt.s32.f32 %v1963
    %v2092 = vcvt.s32.f32 %v1964
    %v2093 = vcvt.s32.f32 %v1965
    %v2094 = vcvt.s32.f32 %v1966
    %v2095 = vcvt.s32.f32 %v1967
    %v2096 = vcvt.s32.f32 %v1968
    %v2097 = vcvt.s32.f32 %v1969
    %v2098 = vcvt.s32.f32 %v1970
    %v2099 = vcvt.s32.f32 %v1971
    %v2100 = vcvt.s32.f32 %v1972
    %v2101 = vcvt.s32.f32 %v1973
    %v2102 = vcvt.s32.f32 %v1974
    %v2103 = vcvt.s32.f32 %v1975
    %v2104 = vcvt.s32.f32 %v1976
    %v2105 = vcvt.s32.f32 %v1977
    %v2106 = vcvt.s32.f32 %v1978
    %v2107 = vcvt.s32.f32 %v1979
    %v2108 = vcvt.s32.f32 %v1980
    %v2109 = vcvt.s32.f32 %v1981
    %v2110 = vcvt.s32.f32 %v1982
    %v2111 = vcvt.s32.f32 %v1983
    %v2112 = vld [vmem:[%s2] sm:$0xff]
    %v2113 = vld [vmem:[%s2 + $0x8] sm:$0xff]
    %v2114 = vld [vmem:[%s2 + $0x10] sm:$0xff]
    %v2115 = vld [vmem:[%s2 + $0x18] sm:$0xff]
    %v2116 = vld [vmem:[%s2 + $0x20] sm:$0xff]
    %v2117 = vld [vmem:[%s2 + $0x28] sm:$0xff]
    %v2118 = vld [vmem:[%s2 + $0x30] sm:$0xff]
    %v2119 = vld [vmem:[%s2 + $0x38] sm:$0xff]
    %v2120 = vld [vmem:[%s2 + $0x40] sm:$0xff]
    %v2121 = vld [vmem:[%s2 + $0x48] sm:$0xff]
    %v2122 = vld [vmem:[%s2 + $0x50] sm:$0xff]
    %v2123 = vld [vmem:[%s2 + $0x58] sm:$0xff]
    %v2124 = vld [vmem:[%s2 + $0x60] sm:$0xff]
    %v2125 = vld [vmem:[%s2 + $0x68] sm:$0xff]
    %v2126 = vld [vmem:[%s2 + $0x70] sm:$0xff]
    %v2127 = vld [vmem:[%s2 + $0x78] sm:$0xff]
    %v2128 = vld [vmem:[%s2 + $0x80] sm:$0xff]
    %v2129 = vld [vmem:[%s2 + $0x88] sm:$0xff]
    %v2130 = vld [vmem:[%s2 + $0x90] sm:$0xff]
    %v2131 = vld [vmem:[%s2 + $0x98] sm:$0xff]
    %v2132 = vld [vmem:[%s2 + $0xa0] sm:$0xff]
    %v2133 = vld [vmem:[%s2 + $0xa8] sm:$0xff]
    %v2134 = vld [vmem:[%s2 + $0xb0] sm:$0xff]
    %v2135 = vld [vmem:[%s2 + $0xb8] sm:$0xff]
    %v2136 = vld [vmem:[%s2 + $0xc0] sm:$0xff]
    %v2137 = vld [vmem:[%s2 + $0xc8] sm:$0xff]
    %v2138 = vld [vmem:[%s2 + $0xd0] sm:$0xff]
    %v2139 = vld [vmem:[%s2 + $0xd8] sm:$0xff]
    %v2140 = vld [vmem:[%s2 + $0xe0] sm:$0xff]
    %v2141 = vld [vmem:[%s2 + $0xe8] sm:$0xff]
    %v2142 = vld [vmem:[%s2 + $0xf0] sm:$0xff]
    %v2143 = vld [vmem:[%s2 + $0xf8] sm:$0xff]
    %2144 = vmatprep.subr.mxu0 0.0
    %2145 = vmatpush1.msra.mxu0 %v2127
    %2146 = vmatprep.subr.mxu0 0.0
    %2147 = vmatpush1.msra.mxu0 %v2126
    %2148 = vmatprep.subr.mxu0 0.0
    %2149 = vmatpush1.msra.mxu0 %v2125
    %2150 = vmatprep.subr.mxu0 0.0
    %2151 = vmatpush1.msra.mxu0 %v2124
    %2152 = vmatprep.subr.mxu0 0.0
    %2153 = vmatpush1.msra.mxu0 %v2123
    %2154 = vmatprep.subr.mxu0 0.0
    %2155 = vmatpush1.msra.mxu0 %v2122
    %2156 = vmatprep.subr.mxu0 0.0
    %2157 = vmatpush1.msra.mxu0 %v2121
    %2158 = vmatprep.subr.mxu0 0.0
    %2159 = vmatpush1.msra.mxu0 %v2120
    %2160 = vmatprep.subr.mxu0 0.0
    %2161 = vmatpush1.msra.mxu0 %v2119
    %2162 = vmatprep.subr.mxu0 0.0
    %2163 = vmatpush1.msra.mxu0 %v2118
    %2164 = vmatprep.subr.mxu0 0.0
    %2165 = vmatpush1.msra.mxu0 %v2117
    %2166 = vmatprep.subr.mxu0 0.0
    %2167 = vmatpush1.msra.mxu0 %v2116
    %2168 = vmatprep.subr.mxu0 0.0
    %2169 = vmatpush1.msra.mxu0 %v2115
    %2170 = vmatprep.subr.mxu0 0.0
    %2171 = vmatpush1.msra.mxu0 %v2114
    %2172 = vmatprep.subr.mxu0 0.0
    %2173 = vmatpush1.msra.mxu0 %v2113
    %2174 = vmatprep.subr.mxu0 0.0
    %2175 = vmatpush1.msra.mxu0 %v2112
    %2176 = vmatprep.subr.mxu0 0.0
    %2177 = vmatpush2.msra.mxu0 %v2143
    %2178 = vmatprep.subr.mxu0 0.0
    %2179 = vmatpush2.msra.mxu0 %v2142
    %2180 = vmatprep.subr.mxu0 0.0
    %2181 = vmatpush2.msra.mxu0 %v2141
    %2182 = vmatprep.subr.mxu0 0.0
    %2183 = vmatpush2.msra.mxu0 %v2140
    %2184 = vmatprep.subr.mxu0 0.0
    %2185 = vmatpush2.msra.mxu0 %v2139
    %2186 = vmatprep.subr.mxu0 0.0
    %2187 = vmatpush2.msra.mxu0 %v2138
    %2188 = vmatprep.subr.mxu0 0.0
    %2189 = vmatpush2.msra.mxu0 %v2137
    %2190 = vmatprep.subr.mxu0 0.0
    %2191 = vmatpush2.msra.mxu0 %v2136
    %2192 = vmatprep.subr.mxu0 0.0
    %2193 = vmatpush2.msra.mxu0 %v2135
    %2194 = vmatprep.subr.mxu0 0.0
    %2195 = vmatpush2.msra.mxu0 %v2134
    %2196 = vmatprep.subr.mxu0 0.0
    %2197 = vmatpush2.msra.mxu0 %v2133
    %2198 = vmatprep.subr.mxu0 0.0
    %2199 = vmatpush2.msra.mxu0 %v2132
    %2200 = vmatprep.subr.mxu0 0.0
    %2201 = vmatpush2.msra.mxu0 %v2131
    %2202 = vmatprep.subr.mxu0 0.0
    %2203 = vmatpush2.msra.mxu0 %v2130
    %2204 = vmatprep.subr.mxu0 0.0
    %2205 = vmatpush2.msra.mxu0 %v2129
    %2206 = vmatprep.subr.mxu0 0.0
    %2207 = vmatpush2.msra.mxu0 %v2128
    %2208 = vmatprep.mubr.f32.mxu0 %v1985
    %2209 = vmatmul.mubr.f32.gmra.mxu0 %v1984
    %v2210 = vpop.f32.mrf.mxu0
    %v2211 = vadd.f32 0.0, %v2210
    %v2212 = vpop.f32.mrf.mxu0
    %2213 = vmatprep.mubr.f32.mxu0 %v1987
    %2214 = vmatmul.mubr.f32.gmra.mxu0 %v1986
    %v2215 = vpop.f32.mrf.mxu0
    %v2216 = vadd.f32 0.0, %v2215
    %v2217 = vpop.f32.mrf.mxu0
    %2218 = vmatprep.mubr.f32.mxu0 %v1989
    %2219 = vmatmul.mubr.f32.gmra.mxu0 %v1988
    %v2220 = vpop.f32.mrf.mxu0
    %v2221 = vadd.f32 0.0, %v2220
    %v2222 = vpop.f32.mrf.mxu0
    %2223 = vmatprep.mubr.f32.mxu0 %v1991
    %2224 = vmatmul.mubr.f32.gmra.mxu0 %v1990
    %v2225 = vpop.f32.mrf.mxu0
    %v2226 = vadd.f32 0.0, %v2225
    %v2227 = vpop.f32.mrf.mxu0
    %2228 = vmatprep.mubr.f32.mxu0 %v1993
    %2229 = vmatmul.mubr.f32.gmra.mxu0 %v1992
    %v2230 = vpop.f32.mrf.mxu0
    %v2231 = vadd.f32 0.0, %v2230
    %v2232 = vpop.f32.mrf.mxu0
    %2233 = vmatprep.mubr.f32.mxu0 %v1995
    %2234 = vmatmul.mubr.f32.gmra.mxu0 %v1994
    %v2235 = vpop.f32.mrf.mxu0
    %v2236 = vadd.f32 0.0, %v2235
    %v2237 = vpop.f32.mrf.mxu0
    %2238 = vmatprep.mubr.f32.mxu0 %v1997
    %2239 = vmatmul.mubr.f32.gmra.mxu0 %v1996
    %v2240 = vpop.f32.mrf.mxu0
    %v2241 = vadd.f32 0.0, %v2240
    %v2242 = vpop.f32.mrf.mxu0
    %2243 = vmatprep.mubr.f32.mxu0 %v1999
    %2244 = vmatmul.mubr.f32.gmra.mxu0 %v1998
    %v2245 = vpop.f32.mrf.mxu0
    %v2246 = vadd.f32 0.0, %v2245
    %v2247 = vpop.f32.mrf.mxu0
    %2248 = vmatprep.mubr.f32.mxu0 %v2001
    %2249 = vmatmul.mubr.f32.gmra.mxu0 %v2000
    %v2250 = vpop.f32.mrf.mxu0
    %v2251 = vadd.f32 0.0, %v2250
    %v2252 = vpop.f32.mrf.mxu0
    %2253 = vmatprep.mubr.f32.mxu0 %v2003
    %2254 = vmatmul.mubr.f32.gmra.mxu0 %v2002
    %v2255 = vpop.f32.mrf.mxu0
    %v2256 = vadd.f32 0.0, %v2255
    %v2257 = vpop.f32.mrf.mxu0
    %2258 = vmatprep.mubr.f32.mxu0 %v2005
    %2259 = vmatmul.mubr.f32.gmra.mxu0 %v2004
    %v2260 = vpop.f32.mrf.mxu0
    %v2261 = vadd.f32 0.0, %v2260
    %v2262 = vpop.f32.mrf.mxu0
    %2263 = vmatprep.mubr.f32.mxu0 %v2007
    %2264 = vmatmul.mubr.f32.gmra.mxu0 %v2006
    %v2265 = vpop.f32.mrf.mxu0
    %v2266 = vadd.f32 0.0, %v2265
    %v2267 = vpop.f32.mrf.mxu0
    %2268 = vmatprep.mubr.f32.mxu0 %v2009
    %2269 = vmatmul.mubr.f32.gmra.mxu0 %v2008
    %v2270 = vpop.f32.mrf.mxu0
    %v2271 = vadd.f32 0.0, %v2270
    %v2272 = vpop.f32.mrf.mxu0
    %2273 = vmatprep.mubr.f32.mxu0 %v2011
    %2274 = vmatmul.mubr.f32.gmra.mxu0 %v2010
    %v2275 = vpop.f32.mrf.mxu0
    %v2276 = vadd.f32 0.0, %v2275
    %v2277 = vpop.f32.mrf.mxu0
    %2278 = vmatprep.mubr.f32.mxu0 %v2013
    %2279 = vmatmul.mubr.f32.gmra.mxu0 %v2012
    %v2280 = vpop.f32.mrf.mxu0
    %v2281 = vadd.f32 0.0, %v2280
    %v2282 = vpop.f32.mrf.mxu0
    %2283 = vmatprep.mubr.f32.mxu0 %v2015
    %2284 = vmatmul.mubr.f32.gmra.mxu0 %v2014
    %v2285 = vpop.f32.mrf.mxu0
    %v2286 = vadd.f32 0.0, %v2285
    %v2287 = vpop.f32.mrf.mxu0
    %2288 = vmatprep.mubr.f32.mxu0 %v2017
    %2289 = vmatmul.mubr.f32.gmra.mxu0 %v2016
    %v2290 = vpop.f32.mrf.mxu0
    %v2291 = vadd.f32 0.0, %v2290
    %v2292 = vpop.f32.mrf.mxu0
    %2293 = vmatprep.mubr.f32.mxu0 %v2019
    %2294 = vmatmul.mubr.f32.gmra.mxu0 %v2018
    %v2295 = vpop.f32.mrf.mxu0
    %v2296 = vadd.f32 0.0, %v2295
    %v2297 = vpop.f32.mrf.mxu0
    %2298 = vmatprep.mubr.f32.mxu0 %v2021
    %2299 = vmatmul.mubr.f32.gmra.mxu0 %v2020
    %v2300 = vpop.f32.mrf.mxu0
    %v2301 = vadd.f32 0.0, %v2300
    %v2302 = vpop.f32.mrf.mxu0
    %2303 = vmatprep.mubr.f32.mxu0 %v2023
    %2304 = vmatmul.mubr.f32.gmra.mxu0 %v2022
    %v2305 = vpop.f32.mrf.mxu0
    %v2306 = vadd.f32 0.0, %v2305
    %v2307 = vpop.f32.mrf.mxu0
    %2308 = vmatprep.mubr.f32.mxu0 %v2025
    %2309 = vmatmul.mubr.f32.gmra.mxu0 %v2024
    %v2310 = vpop.f32.mrf.mxu0
    %v2311 = vadd.f32 0.0, %v2310
    %v2312 = vpop.f32.mrf.mxu0
    %2313 = vmatprep.mubr.f32.mxu0 %v2027
    %2314 = vmatmul.mubr.f32.gmra.mxu0 %v2026
    %v2315 = vpop.f32.mrf.mxu0
    %v2316 = vadd.f32 0.0, %v2315
    %v2317 = vpop.f32.mrf.mxu0
    %2318 = vmatprep.mubr.f32.mxu0 %v2029
    %2319 = vmatmul.mubr.f32.gmra.mxu0 %v2028
    %v2320 = vpop.f32.mrf.mxu0
    %v2321 = vadd.f32 0.0, %v2320
    %v2322 = vpop.f32.mrf.mxu0
    %2323 = vmatprep.mubr.f32.mxu0 %v2031
    %2324 = vmatmul.mubr.f32.gmra.mxu0 %v2030
    %v2325 = vpop.f32.mrf.mxu0
    %v2326 = vadd.f32 0.0, %v2325
    %v2327 = vpop.f32.mrf.mxu0
    %2328 = vmatprep.mubr.f32.mxu0 %v2033
    %2329 = vmatmul.mubr.f32.gmra.mxu0 %v2032
    %v2330 = vpop.f32.mrf.mxu0
    %v2331 = vadd.f32 0.0, %v2330
    %v2332 = vpop.f32.mrf.mxu0
    %2333 = vmatprep.mubr.f32.mxu0 %v2035
    %2334 = vmatmul.mubr.f32.gmra.mxu0 %v2034
    %v2335 = vpop.f32.mrf.mxu0
    %v2336 = vadd.f32 0.0, %v2335
    %v2337 = vpop.f32.mrf.mxu0
    %2338 = vmatprep.mubr.f32.mxu0 %v2037
    %2339 = vmatmul.mubr.f32.gmra.mxu0 %v2036
    %v2340 = vpop.f32.mrf.mxu0
    %v2341 = vadd.f32 0.0, %v2340
    %v2342 = vpop.f32.mrf.mxu0
    %2343 = vmatprep.mubr.f32.mxu0 %v2039
    %2344 = vmatmul.mubr.f32.gmra.mxu0 %v2038
    %v2345 = vpop.f32.mrf.mxu0
    %v2346 = vadd.f32 0.0, %v2345
    %v2347 = vpop.f32.mrf.mxu0
    %2348 = vmatprep.mubr.f32.mxu0 %v2041
    %2349 = vmatmul.mubr.f32.gmra.mxu0 %v2040
    %v2350 = vpop.f32.mrf.mxu0
    %v2351 = vadd.f32 0.0, %v2350
    %v2352 = vpop.f32.mrf.mxu0
    %2353 = vmatprep.mubr.f32.mxu0 %v2043
    %2354 = vmatmul.mubr.f32.gmra.mxu0 %v2042
    %v2355 = vpop.f32.mrf.mxu0
    %v2356 = vadd.f32 0.0, %v2355
    %v2357 = vpop.f32.mrf.mxu0
    %2358 = vmatprep.mubr.f32.mxu0 %v2045
    %2359 = vmatmul.mubr.f32.gmra.mxu0 %v2044
    %v2360 = vpop.f32.mrf.mxu0
    %v2361 = vadd.f32 0.0, %v2360
    %v2362 = vpop.f32.mrf.mxu0
    %2363 = vmatprep.mubr.f32.mxu0 %v2047
    %2364 = vmatmul.mubr.f32.gmra.mxu0 %v2046
    %v2365 = vpop.f32.mrf.mxu0
    %v2366 = vadd.f32 0.0, %v2365
    %v2367 = vpop.f32.mrf.mxu0
    %2368 = vmatprep.mubr.f32.mxu0 %v2049
    %2369 = vmatmul.mubr.f32.gmra.mxu0 %v2048
    %v2370 = vpop.f32.mrf.mxu0
    %v2371 = vadd.f32 0.0, %v2370
    %v2372 = vpop.f32.mrf.mxu0
    %2373 = vmatprep.mubr.f32.mxu0 %v2051
    %2374 = vmatmul.mubr.f32.gmra.mxu0 %v2050
    %v2375 = vpop.f32.mrf.mxu0
    %v2376 = vadd.f32 0.0, %v2375
    %v2377 = vpop.f32.mrf.mxu0
    %2378 = vmatprep.mubr.f32.mxu0 %v2053
    %2379 = vmatmul.mubr.f32.gmra.mxu0 %v2052
    %v2380 = vpop.f32.mrf.mxu0
    %v2381 = vadd.f32 0.0, %v2380
    %v2382 = vpop.f32.mrf.mxu0
    %2383 = vmatprep.mubr.f32.mxu0 %v2055
    %2384 = vmatmul.mubr.f32.gmra.mxu0 %v2054
    %v2385 = vpop.f32.mrf.mxu0
    %v2386 = vadd.f32 0.0, %v2385
    %v2387 = vpop.f32.mrf.mxu0
    %2388 = vmatprep.mubr.f32.mxu0 %v2057
    %2389 = vmatmul.mubr.f32.gmra.mxu0 %v2056
    %v2390 = vpop.f32.mrf.mxu0
    %v2391 = vadd.f32 0.0, %v2390
    %v2392 = vpop.f32.mrf.mxu0
    %2393 = vmatprep.mubr.f32.mxu0 %v2059
    %2394 = vmatmul.mubr.f32.gmra.mxu0 %v2058
    %v2395 = vpop.f32.mrf.mxu0
    %v2396 = vadd.f32 0.0, %v2395
    %v2397 = vpop.f32.mrf.mxu0
    %2398 = vmatprep.mubr.f32.mxu0 %v2061
    %2399 = vmatmul.mubr.f32.gmra.mxu0 %v2060
    %v2400 = vpop.f32.mrf.mxu0
    %v2401 = vadd.f32 0.0, %v2400
    %v2402 = vpop.f32.mrf.mxu0
    %2403 = vmatprep.mubr.f32.mxu0 %v2063
    %2404 = vmatmul.mubr.f32.gmra.mxu0 %v2062
    %v2405 = vpop.f32.mrf.mxu0
    %v2406 = vadd.f32 0.0, %v2405
    %v2407 = vpop.f32.mrf.mxu0
    %2408 = vmatprep.mubr.f32.mxu0 %v2065
    %2409 = vmatmul.mubr.f32.gmra.mxu0 %v2064
    %v2410 = vpop.f32.mrf.mxu0
    %v2411 = vadd.f32 0.0, %v2410
    %v2412 = vpop.f32.mrf.mxu0
    %2413 = vmatprep.mubr.f32.mxu0 %v2067
    %2414 = vmatmul.mubr.f32.gmra.mxu0 %v2066
    %v2415 = vpop.f32.mrf.mxu0
    %v2416 = vadd.f32 0.0, %v2415
    %v2417 = vpop.f32.mrf.mxu0
    %2418 = vmatprep.mubr.f32.mxu0 %v2069
    %2419 = vmatmul.mubr.f32.gmra.mxu0 %v2068
    %v2420 = vpop.f32.mrf.mxu0
    %v2421 = vadd.f32 0.0, %v2420
    %v2422 = vpop.f32.mrf.mxu0
    %2423 = vmatprep.mubr.f32.mxu0 %v2071
    %2424 = vmatmul.mubr.f32.gmra.mxu0 %v2070
    %v2425 = vpop.f32.mrf.mxu0
    %v2426 = vadd.f32 0.0, %v2425
    %v2427 = vpop.f32.mrf.mxu0
    %2428 = vmatprep.mubr.f32.mxu0 %v2073
    %2429 = vmatmul.mubr.f32.gmra.mxu0 %v2072
    %v2430 = vpop.f32.mrf.mxu0
    %v2431 = vadd.f32 0.0, %v2430
    %v2432 = vpop.f32.mrf.mxu0
    %2433 = vmatprep.mubr.f32.mxu0 %v2075
    %2434 = vmatmul.mubr.f32.gmra.mxu0 %v2074
    %v2435 = vpop.f32.mrf.mxu0
    %v2436 = vadd.f32 0.0, %v2435
    %v2437 = vpop.f32.mrf.mxu0
    %2438 = vmatprep.mubr.f32.mxu0 %v2077
    %2439 = vmatmul.mubr.f32.gmra.mxu0 %v2076
    %v2440 = vpop.f32.mrf.mxu0
    %v2441 = vadd.f32 0.0, %v2440
    %v2442 = vpop.f32.mrf.mxu0
    %2443 = vmatprep.mubr.f32.mxu0 %v2079
    %2444 = vmatmul.mubr.f32.gmra.mxu0 %v2078
    %v2445 = vpop.f32.mrf.mxu0
    %v2446 = vadd.f32 0.0, %v2445
    %v2447 = vpop.f32.mrf.mxu0
    %2448 = vmatprep.mubr.f32.mxu0 %v2081
    %2449 = vmatmul.mubr.f32.gmra.mxu0 %v2080
    %v2450 = vpop.f32.mrf.mxu0
    %v2451 = vadd.f32 0.0, %v2450
    %v2452 = vpop.f32.mrf.mxu0
    %2453 = vmatprep.mubr.f32.mxu0 %v2083
    %2454 = vmatmul.mubr.f32.gmra.mxu0 %v2082
    %v2455 = vpop.f32.mrf.mxu0
    %v2456 = vadd.f32 0.0, %v2455
    %v2457 = vpop.f32.mrf.mxu0
    %2458 = vmatprep.mubr.f32.mxu0 %v2085
    %2459 = vmatmul.mubr.f32.gmra.mxu0 %v2084
    %v2460 = vpop.f32.mrf.mxu0
    %v2461 = vadd.f32 0.0, %v2460
    %v2462 = vpop.f32.mrf.mxu0
    %2463 = vmatprep.mubr.f32.mxu0 %v2087
    %2464 = vmatmul.mubr.f32.gmra.mxu0 %v2086
    %v2465 = vpop.f32.mrf.mxu0
    %v2466 = vadd.f32 0.0, %v2465
    %v2467 = vpop.f32.mrf.mxu0
    %2468 = vmatprep.mubr.f32.mxu0 %v2089
    %2469 = vmatmul.mubr.f32.gmra.mxu0 %v2088
    %v2470 = vpop.f32.mrf.mxu0
    %v2471 = vadd.f32 0.0, %v2470
    %v2472 = vpop.f32.mrf.mxu0
    %2473 = vmatprep.mubr.f32.mxu0 %v2091
    %2474 = vmatmul.mubr.f32.gmra.mxu0 %v2090
    %v2475 = vpop.f32.mrf.mxu0
    %v2476 = vadd.f32 0.0, %v2475
    %v2477 = vpop.f32.mrf.mxu0
    %2478 = vmatprep.mubr.f32.mxu0 %v2093
    %2479 = vmatmul.mubr.f32.gmra.mxu0 %v2092
    %v2480 = vpop.f32.mrf.mxu0
    %v2481 = vadd.f32 0.0, %v2480
    %v2482 = vpop.f32.mrf.mxu0
    %2483 = vmatprep.mubr.f32.mxu0 %v2095
    %2484 = vmatmul.mubr.f32.gmra.mxu0 %v2094
    %v2485 = vpop.f32.mrf.mxu0
    %v2486 = vadd.f32 0.0, %v2485
    %v2487 = vpop.f32.mrf.mxu0
    %2488 = vmatprep.mubr.f32.mxu0 %v2097
    %2489 = vmatmul.mubr.f32.gmra.mxu0 %v2096
    %v2490 = vpop.f32.mrf.mxu0
    %v2491 = vadd.f32 0.0, %v2490
    %v2492 = vpop.f32.mrf.mxu0
    %2493 = vmatprep.mubr.f32.mxu0 %v2099
    %2494 = vmatmul.mubr.f32.gmra.mxu0 %v2098
    %v2495 = vpop.f32.mrf.mxu0
    %v2496 = vadd.f32 0.0, %v2495
    %v2497 = vpop.f32.mrf.mxu0
    %2498 = vmatprep.mubr.f32.mxu0 %v2101
    %2499 = vmatmul.mubr.f32.gmra.mxu0 %v2100
    %v2500 = vpop.f32.mrf.mxu0
    %v2501 = vadd.f32 0.0, %v2500
    %v2502 = vpop.f32.mrf.mxu0
    %2503 = vmatprep.mubr.f32.mxu0 %v2103
    %2504 = vmatmul.mubr.f32.gmra.mxu0 %v2102
    %v2505 = vpop.f32.mrf.mxu0
    %v2506 = vadd.f32 0.0, %v2505
    %v2507 = vpop.f32.mrf.mxu0
    %2508 = vmatprep.mubr.f32.mxu0 %v2105
    %2509 = vmatmul.mubr.f32.gmra.mxu0 %v2104
    %v2510 = vpop.f32.mrf.mxu0
    %v2511 = vadd.f32 0.0, %v2510
    %v2512 = vpop.f32.mrf.mxu0
    %2513 = vmatprep.mubr.f32.mxu0 %v2107
    %2514 = vmatmul.mubr.f32.gmra.mxu0 %v2106
    %v2515 = vpop.f32.mrf.mxu0
    %v2516 = vadd.f32 0.0, %v2515
    %v2517 = vpop.f32.mrf.mxu0
    %2518 = vmatprep.mubr.f32.mxu0 %v2109
    %2519 = vmatmul.mubr.f32.gmra.mxu0 %v2108
    %v2520 = vpop.f32.mrf.mxu0
    %v2521 = vadd.f32 0.0, %v2520
    %v2522 = vpop.f32.mrf.mxu0
    %2523 = vmatprep.mubr.f32.mxu0 %v2111
    %2524 = vmatmul.mubr.f32.gmra.mxu0 %v2110
    %v2525 = vpop.f32.mrf.mxu0
    %v2526 = vadd.f32 0.0, %v2525
    %v2527 = vpop.f32.mrf.mxu0
    %2528 = vdwg.mxu0
    %v2529 = vcvt.f32.s32.to.zero.pseudo %v1538
    %v2530 = vcvt.f32.s32.to.zero.pseudo %v1541
    %v2531 = vcvt.f32.s32.to.zero.pseudo %v1544
    %v2532 = vcvt.f32.s32.to.zero.pseudo %v1547
    %v2533 = vcvt.f32.s32.to.zero.pseudo %v1550
    %v2534 = vcvt.f32.s32.to.zero.pseudo %v1553
    %v2535 = vcvt.f32.s32.to.zero.pseudo %v1556
    %v2536 = vcvt.f32.s32.to.zero.pseudo %v1559
    %v2537 = vcvt.f32.s32.to.zero.pseudo %v1562
    %v2538 = vcvt.f32.s32.to.zero.pseudo %v1565
    %v2539 = vcvt.f32.s32.to.zero.pseudo %v1568
    %v2540 = vcvt.f32.s32.to.zero.pseudo %v1571
    %v2541 = vcvt.f32.s32.to.zero.pseudo %v1574
    %v2542 = vcvt.f32.s32.to.zero.pseudo %v1577
    %v2543 = vcvt.f32.s32.to.zero.pseudo %v1580
    %v2544 = vcvt.f32.s32.to.zero.pseudo %v1583
    %v2545 = vcvt.f32.s32.to.zero.pseudo %v1586
    %v2546 = vcvt.f32.s32.to.zero.pseudo %v1589
    %v2547 = vcvt.f32.s32.to.zero.pseudo %v1592
    %v2548 = vcvt.f32.s32.to.zero.pseudo %v1595
    %v2549 = vcvt.f32.s32.to.zero.pseudo %v1598
    %v2550 = vcvt.f32.s32.to.zero.pseudo %v1601
    %v2551 = vcvt.f32.s32.to.zero.pseudo %v1604
    %v2552 = vcvt.f32.s32.to.zero.pseudo %v1607
    %v2553 = vcvt.f32.s32.to.zero.pseudo %v1610
    %v2554 = vcvt.f32.s32.to.zero.pseudo %v1613
    %v2555 = vcvt.f32.s32.to.zero.pseudo %v1616
    %v2556 = vcvt.f32.s32.to.zero.pseudo %v1619
    %v2557 = vcvt.f32.s32.to.zero.pseudo %v1622
    %v2558 = vcvt.f32.s32.to.zero.pseudo %v1625
    %v2559 = vcvt.f32.s32.to.zero.pseudo %v1628
    %v2560 = vcvt.f32.s32.to.zero.pseudo %v1631
    %v2561 = vcvt.f32.s32.to.zero.pseudo %v1634
    %v2562 = vcvt.f32.s32.to.zero.pseudo %v1637
    %v2563 = vcvt.f32.s32.to.zero.pseudo %v1640
    %v2564 = vcvt.f32.s32.to.zero.pseudo %v1643
    %v2565 = vcvt.f32.s32.to.zero.pseudo %v1646
    %v2566 = vcvt.f32.s32.to.zero.pseudo %v1649
    %v2567 = vcvt.f32.s32.to.zero.pseudo %v1652
    %v2568 = vcvt.f32.s32.to.zero.pseudo %v1655
    %v2569 = vcvt.f32.s32.to.zero.pseudo %v1658
    %v2570 = vcvt.f32.s32.to.zero.pseudo %v1661
    %v2571 = vcvt.f32.s32.to.zero.pseudo %v1664
    %v2572 = vcvt.f32.s32.to.zero.pseudo %v1667
    %v2573 = vcvt.f32.s32.to.zero.pseudo %v1670
    %v2574 = vcvt.f32.s32.to.zero.pseudo %v1673
    %v2575 = vcvt.f32.s32.to.zero.pseudo %v1676
    %v2576 = vcvt.f32.s32.to.zero.pseudo %v1679
    %v2577 = vcvt.f32.s32.to.zero.pseudo %v1682
    %v2578 = vcvt.f32.s32.to.zero.pseudo %v1685
    %v2579 = vcvt.f32.s32.to.zero.pseudo %v1688
    %v2580 = vcvt.f32.s32.to.zero.pseudo %v1691
    %v2581 = vcvt.f32.s32.to.zero.pseudo %v1694
    %v2582 = vcvt.f32.s32.to.zero.pseudo %v1697
    %v2583 = vcvt.f32.s32.to.zero.pseudo %v1700
    %v2584 = vcvt.f32.s32.to.zero.pseudo %v1703
    %v2585 = vcvt.f32.s32.to.zero.pseudo %v1706
    %v2586 = vcvt.f32.s32.to.zero.pseudo %v1709
    %v2587 = vcvt.f32.s32.to.zero.pseudo %v1712
    %v2588 = vcvt.f32.s32.to.zero.pseudo %v1715
    %v2589 = vcvt.f32.s32.to.zero.pseudo %v1718
    %v2590 = vcvt.f32.s32.to.zero.pseudo %v1721
    %v2591 = vcvt.f32.s32.to.zero.pseudo %v1724
    %v2592 = vcvt.f32.s32.to.zero.pseudo %v1727
    %s2593 = smul.u32 0, 256
    %v2594 = vstv %s2593
    %v2595 = vadd.s32 %v2529, %v2594
    %v2596 = vadd.s32 %v2530, %v2594
    %v2597 = vadd.s32 %v2531, %v2594
    %v2598 = vadd.s32 %v2532, %v2594
    %v2599 = vadd.s32 %v2533, %v2594
    %v2600 = vadd.s32 %v2534, %v2594
    %v2601 = vadd.s32 %v2535, %v2594
    %v2602 = vadd.s32 %v2536, %v2594
    %v2603 = vadd.s32 %v2537, %v2594
    %v2604 = vadd.s32 %v2538, %v2594
    %v2605 = vadd.s32 %v2539, %v2594
    %v2606 = vadd.s32 %v2540, %v2594
    %v2607 = vadd.s32 %v2541, %v2594
    %v2608 = vadd.s32 %v2542, %v2594
    %v2609 = vadd.s32 %v2543, %v2594
    %v2610 = vadd.s32 %v2544, %v2594
    %v2611 = vadd.s32 %v2545, %v2594
    %v2612 = vadd.s32 %v2546, %v2594
    %v2613 = vadd.s32 %v2547, %v2594
    %v2614 = vadd.s32 %v2548, %v2594
    %v2615 = vadd.s32 %v2549, %v2594
    %v2616 = vadd.s32 %v2550, %v2594
    %v2617 = vadd.s32 %v2551, %v2594
    %v2618 = vadd.s32 %v2552, %v2594
    %v2619 = vadd.s32 %v2553, %v2594
    %v2620 = vadd.s32 %v2554, %v2594
    %v2621 = vadd.s32 %v2555, %v2594
    %v2622 = vadd.s32 %v2556, %v2594
    %v2623 = vadd.s32 %v2557, %v2594
    %v2624 = vadd.s32 %v2558, %v2594
    %v2625 = vadd.s32 %v2559, %v2594
    %v2626 = vadd.s32 %v2560, %v2594
    %v2627 = vadd.s32 %v2561, %v2594
    %v2628 = vadd.s32 %v2562, %v2594
    %v2629 = vadd.s32 %v2563, %v2594
    %v2630 = vadd.s32 %v2564, %v2594
    %v2631 = vadd.s32 %v2565, %v2594
    %v2632 = vadd.s32 %v2566, %v2594
    %v2633 = vadd.s32 %v2567, %v2594
    %v2634 = vadd.s32 %v2568, %v2594
    %v2635 = vadd.s32 %v2569, %v2594
    %v2636 = vadd.s32 %v2570, %v2594
    %v2637 = vadd.s32 %v2571, %v2594
    %v2638 = vadd.s32 %v2572, %v2594
    %v2639 = vadd.s32 %v2573, %v2594
    %v2640 = vadd.s32 %v2574, %v2594
    %v2641 = vadd.s32 %v2575, %v2594
    %v2642 = vadd.s32 %v2576, %v2594
    %v2643 = vadd.s32 %v2577, %v2594
    %v2644 = vadd.s32 %v2578, %v2594
    %v2645 = vadd.s32 %v2579, %v2594
    %v2646 = vadd.s32 %v2580, %v2594
    %v2647 = vadd.s32 %v2581, %v2594
    %v2648 = vadd.s32 %v2582, %v2594
    %v2649 = vadd.s32 %v2583, %v2594
    %v2650 = vadd.s32 %v2584, %v2594
    %v2651 = vadd.s32 %v2585, %v2594
    %v2652 = vadd.s32 %v2586, %v2594
    %v2653 = vadd.s32 %v2587, %v2594
    %v2654 = vadd.s32 %v2588, %v2594
    %v2655 = vadd.s32 %v2589, %v2594
    %v2656 = vadd.s32 %v2590, %v2594
    %v2657 = vadd.s32 %v2591, %v2594
    %v2658 = vadd.s32 %v2592, %v2594
    %v2659 = vld [vmem:[#allocation2] sm:$0xff]
    %v2660 = vld [vmem:[#allocation2 + $0x8] sm:$0xff]
    %v2661 = vld [vmem:[#allocation2 + $0x10] sm:$0xff]
    %v2662 = vld [vmem:[#allocation2 + $0x18] sm:$0xff]
    %v2663 = vld [vmem:[#allocation2 + $0x20] sm:$0xff]
    %v2664 = vld [vmem:[#allocation2 + $0x28] sm:$0xff]
    %v2665 = vld [vmem:[#allocation2 + $0x30] sm:$0xff]
    %v2666 = vld [vmem:[#allocation2 + $0x38] sm:$0xff]
    %v2667 = vld [vmem:[#allocation2 + $0x40] sm:$0xff]
    %v2668 = vld [vmem:[#allocation2 + $0x48] sm:$0xff]
    %v2669 = vld [vmem:[#allocation2 + $0x50] sm:$0xff]
    %v2670 = vld [vmem:[#allocation2 + $0x58] sm:$0xff]
    %v2671 = vld [vmem:[#allocation2 + $0x60] sm:$0xff]
    %v2672 = vld [vmem:[#allocation2 + $0x68] sm:$0xff]
    %v2673 = vld [vmem:[#allocation2 + $0x70] sm:$0xff]
    %v2674 = vld [vmem:[#allocation2 + $0x78] sm:$0xff]
    %v2675 = vld [vmem:[#allocation2 + $0x80] sm:$0xff]
    %v2676 = vld [vmem:[#allocation2 + $0x88] sm:$0xff]
    %v2677 = vld [vmem:[#allocation2 + $0x90] sm:$0xff]
    %v2678 = vld [vmem:[#allocation2 + $0x98] sm:$0xff]
    %v2679 = vld [vmem:[#allocation2 + $0xa0] sm:$0xff]
    %v2680 = vld [vmem:[#allocation2 + $0xa8] sm:$0xff]
    %v2681 = vld [vmem:[#allocation2 + $0xb0] sm:$0xff]
    %v2682 = vld [vmem:[#allocation2 + $0xb8] sm:$0xff]
    %v2683 = vld [vmem:[#allocation2 + $0xc0] sm:$0xff]
    %v2684 = vld [vmem:[#allocation2 + $0xc8] sm:$0xff]
    %v2685 = vld [vmem:[#allocation2 + $0xd0] sm:$0xff]
    %v2686 = vld [vmem:[#allocation2 + $0xd8] sm:$0xff]
    %v2687 = vld [vmem:[#allocation2 + $0xe0] sm:$0xff]
    %v2688 = vld [vmem:[#allocation2 + $0xe8] sm:$0xff]
    %v2689 = vld [vmem:[#allocation2 + $0xf0] sm:$0xff]
    %v2690 = vld [vmem:[#allocation2 + $0xf8] sm:$0xff]
    %v2691 = vld [vmem:[#allocation2 + $0x100] sm:$0xff]
    %v2692 = vld [vmem:[#allocation2 + $0x108] sm:$0xff]
    %v2693 = vld [vmem:[#allocation2 + $0x110] sm:$0xff]
    %v2694 = vld [vmem:[#allocation2 + $0x118] sm:$0xff]
    %v2695 = vld [vmem:[#allocation2 + $0x120] sm:$0xff]
    %v2696 = vld [vmem:[#allocation2 + $0x128] sm:$0xff]
    %v2697 = vld [vmem:[#allocation2 + $0x130] sm:$0xff]
    %v2698 = vld [vmem:[#allocation2 + $0x138] sm:$0xff]
    %v2699 = vld [vmem:[#allocation2 + $0x140] sm:$0xff]
    %v2700 = vld [vmem:[#allocation2 + $0x148] sm:$0xff]
    %v2701 = vld [vmem:[#allocation2 + $0x150] sm:$0xff]
    %v2702 = vld [vmem:[#allocation2 + $0x158] sm:$0xff]
    %v2703 = vld [vmem:[#allocation2 + $0x160] sm:$0xff]
    %v2704 = vld [vmem:[#allocation2 + $0x168] sm:$0xff]
    %v2705 = vld [vmem:[#allocation2 + $0x170] sm:$0xff]
    %v2706 = vld [vmem:[#allocation2 + $0x178] sm:$0xff]
    %v2707 = vld [vmem:[#allocation2 + $0x180] sm:$0xff]
    %v2708 = vld [vmem:[#allocation2 + $0x188] sm:$0xff]
    %v2709 = vld [vmem:[#allocation2 + $0x190] sm:$0xff]
    %v2710 = vld [vmem:[#allocation2 + $0x198] sm:$0xff]
    %v2711 = vld [vmem:[#allocation2 + $0x1a0] sm:$0xff]
    %v2712 = vld [vmem:[#allocation2 + $0x1a8] sm:$0xff]
    %v2713 = vld [vmem:[#allocation2 + $0x1b0] sm:$0xff]
    %v2714 = vld [vmem:[#allocation2 + $0x1b8] sm:$0xff]
    %v2715 = vld [vmem:[#allocation2 + $0x1c0] sm:$0xff]
    %v2716 = vld [vmem:[#allocation2 + $0x1c8] sm:$0xff]
    %v2717 = vld [vmem:[#allocation2 + $0x1d0] sm:$0xff]
    %v2718 = vld [vmem:[#allocation2 + $0x1d8] sm:$0xff]
    %v2719 = vld [vmem:[#allocation2 + $0x1e0] sm:$0xff]
    %v2720 = vld [vmem:[#allocation2 + $0x1e8] sm:$0xff]
    %v2721 = vld [vmem:[#allocation2 + $0x1f0] sm:$0xff]
    %v2722 = vld [vmem:[#allocation2 + $0x1f8] sm:$0xff]
    %vm2723 = vcmp.lt.f32.partialorder %v1079, %v2659
    %vm2724 = vcmp.lt.f32.partialorder %v1082, %v2660
    %vm2725 = vcmp.lt.f32.partialorder %v1085, %v2661
    %vm2726 = vcmp.lt.f32.partialorder %v1088, %v2662
    %vm2727 = vcmp.lt.f32.partialorder %v1091, %v2663
    %vm2728 = vcmp.lt.f32.partialorder %v1094, %v2664
    %vm2729 = vcmp.lt.f32.partialorder %v1097, %v2665
    %vm2730 = vcmp.lt.f32.partialorder %v1100, %v2666
    %vm2731 = vcmp.lt.f32.partialorder %v1103, %v2667
    %vm2732 = vcmp.lt.f32.partialorder %v1106, %v2668
    %vm2733 = vcmp.lt.f32.partialorder %v1109, %v2669
    %vm2734 = vcmp.lt.f32.partialorder %v1112, %v2670
    %vm2735 = vcmp.lt.f32.partialorder %v1115, %v2671
    %vm2736 = vcmp.lt.f32.partialorder %v1118, %v2672
    %vm2737 = vcmp.lt.f32.partialorder %v1121, %v2673
    %vm2738 = vcmp.lt.f32.partialorder %v1124, %v2674
    %vm2739 = vcmp.lt.f32.partialorder %v1127, %v2675
    %vm2740 = vcmp.lt.f32.partialorder %v1130, %v2676
    %vm2741 = vcmp.lt.f32.partialorder %v1133, %v2677
    %vm2742 = vcmp.lt.f32.partialorder %v1136, %v2678
    %vm2743 = vcmp.lt.f32.partialorder %v1139, %v2679
    %vm2744 = vcmp.lt.f32.partialorder %v1142, %v2680
    %vm2745 = vcmp.lt.f32.partialorder %v1145, %v2681
    %vm2746 = vcmp.lt.f32.partialorder %v1148, %v2682
    %vm2747 = vcmp.lt.f32.partialorder %v1151, %v2683
    %vm2748 = vcmp.lt.f32.partialorder %v1154, %v2684
    %vm2749 = vcmp.lt.f32.partialorder %v1157, %v2685
    %vm2750 = vcmp.lt.f32.partialorder %v1160, %v2686
    %vm2751 = vcmp.lt.f32.partialorder %v1163, %v2687
    %vm2752 = vcmp.lt.f32.partialorder %v1166, %v2688
    %vm2753 = vcmp.lt.f32.partialorder %v1169, %v2689
    %vm2754 = vcmp.lt.f32.partialorder %v1172, %v2690
    %vm2755 = vcmp.lt.f32.partialorder %v1175, %v2691
    %vm2756 = vcmp.lt.f32.partialorder %v1178, %v2692
    %vm2757 = vcmp.lt.f32.partialorder %v1181, %v2693
    %vm2758 = vcmp.lt.f32.partialorder %v1184, %v2694
    %vm2759 = vcmp.lt.f32.partialorder %v1187, %v2695
    %vm2760 = vcmp.lt.f32.partialorder %v1190, %v2696
    %vm2761 = vcmp.lt.f32.partialorder %v1193, %v2697
    %vm2762 = vcmp.lt.f32.partialorder %v1196, %v2698
    %vm2763 = vcmp.lt.f32.partialorder %v1199, %v2699
    %vm2764 = vcmp.lt.f32.partialorder %v1202, %v2700
    %vm2765 = vcmp.lt.f32.partialorder %v1205, %v2701
    %vm2766 = vcmp.lt.f32.partialorder %v1208, %v2702
    %vm2767 = vcmp.lt.f32.partialorder %v1211, %v2703
    %vm2768 = vcmp.lt.f32.partialorder %v1214, %v2704
    %vm2769 = vcmp.lt.f32.partialorder %v1217, %v2705
    %vm2770 = vcmp.lt.f32.partialorder %v1220, %v2706
    %vm2771 = vcmp.lt.f32.partialorder %v1223, %v2707
    %vm2772 = vcmp.lt.f32.partialorder %v1226, %v2708
    %vm2773 = vcmp.lt.f32.partialorder %v1229, %v2709
    %vm2774 = vcmp.lt.f32.partialorder %v1232, %v2710
    %vm2775 = vcmp.lt.f32.partialorder %v1235, %v2711
    %vm2776 = vcmp.lt.f32.partialorder %v1238, %v2712
    %vm2777 = vcmp.lt.f32.partialorder %v1241, %v2713
    %vm2778 = vcmp.lt.f32.partialorder %v1244, %v2714
    %vm2779 = vcmp.lt.f32.partialorder %v1247, %v2715
    %vm2780 = vcmp.lt.f32.partialorder %v1250, %v2716
    %vm2781 = vcmp.lt.f32.partialorder %v1253, %v2717
    %vm2782 = vcmp.lt.f32.partialorder %v1256, %v2718
    %vm2783 = vcmp.lt.f32.partialorder %v1259, %v2719
    %vm2784 = vcmp.lt.f32.partialorder %v1262, %v2720
    %vm2785 = vcmp.lt.f32.partialorder %v1265, %v2721
    %vm2786 = vcmp.lt.f32.partialorder %v1268, %v2722
    %v2787 = vsel %vm2723, %v1079, %v2659
    %v2788 = vsel %vm2724, %v1082, %v2660
    %v2789 = vsel %vm2725, %v1085, %v2661
    %v2790 = vsel %vm2726, %v1088, %v2662
    %v2791 = vsel %vm2727, %v1091, %v2663
    %v2792 = vsel %vm2728, %v1094, %v2664
    %v2793 = vsel %vm2729, %v1097, %v2665
    %v2794 = vsel %vm2730, %v1100, %v2666
    %v2795 = vsel %vm2731, %v1103, %v2667
    %v2796 = vsel %vm2732, %v1106, %v2668
    %v2797 = vsel %vm2733, %v1109, %v2669
    %v2798 = vsel %vm2734, %v1112, %v2670
    %v2799 = vsel %vm2735, %v1115, %v2671
    %v2800 = vsel %vm2736, %v1118, %v2672
    %v2801 = vsel %vm2737, %v1121, %v2673
    %v2802 = vsel %vm2738, %v1124, %v2674
    %v2803 = vsel %vm2739, %v1127, %v2675
    %v2804 = vsel %vm2740, %v1130, %v2676
    %v2805 = vsel %vm2741, %v1133, %v2677
    %v2806 = vsel %vm2742, %v1136, %v2678
    %v2807 = vsel %vm2743, %v1139, %v2679
    %v2808 = vsel %vm2744, %v1142, %v2680
    %v2809 = vsel %vm2745, %v1145, %v2681
    %v2810 = vsel %vm2746, %v1148, %v2682
    %v2811 = vsel %vm2747, %v1151, %v2683
    %v2812 = vsel %vm2748, %v1154, %v2684
    %v2813 = vsel %vm2749, %v1157, %v2685
    %v2814 = vsel %vm2750, %v1160, %v2686
    %v2815 = vsel %vm2751, %v1163, %v2687
    %v2816 = vsel %vm2752, %v1166, %v2688
    %v2817 = vsel %vm2753, %v1169, %v2689
    %v2818 = vsel %vm2754, %v1172, %v2690
    %v2819 = vsel %vm2755, %v1175, %v2691
    %v2820 = vsel %vm2756, %v1178, %v2692
    %v2821 = vsel %vm2757, %v1181, %v2693
    %v2822 = vsel %vm2758, %v1184, %v2694
    %v2823 = vsel %vm2759, %v1187, %v2695
    %v2824 = vsel %vm2760, %v1190, %v2696
    %v2825 = vsel %vm2761, %v1193, %v2697
    %v2826 = vsel %vm2762, %v1196, %v2698
    %v2827 = vsel %vm2763, %v1199, %v2699
    %v2828 = vsel %vm2764, %v1202, %v2700
    %v2829 = vsel %vm2765, %v1205, %v2701
    %v2830 = vsel %vm2766, %v1208, %v2702
    %v2831 = vsel %vm2767, %v1211, %v2703
    %v2832 = vsel %vm2768, %v1214, %v2704
    %v2833 = vsel %vm2769, %v1217, %v2705
    %v2834 = vsel %vm2770, %v1220, %v2706
    %v2835 = vsel %vm2771, %v1223, %v2707
    %v2836 = vsel %vm2772, %v1226, %v2708
    %v2837 = vsel %vm2773, %v1229, %v2709
    %v2838 = vsel %vm2774, %v1232, %v2710
    %v2839 = vsel %vm2775, %v1235, %v2711
    %v2840 = vsel %vm2776, %v1238, %v2712
    %v2841 = vsel %vm2777, %v1241, %v2713
    %v2842 = vsel %vm2778, %v1244, %v2714
    %v2843 = vsel %vm2779, %v1247, %v2715
    %v2844 = vsel %vm2780, %v1250, %v2716
    %v2845 = vsel %vm2781, %v1253, %v2717
    %v2846 = vsel %vm2782, %v1256, %v2718
    %v2847 = vsel %vm2783, %v1259, %v2719
    %v2848 = vsel %vm2784, %v1262, %v2720
    %v2849 = vsel %vm2785, %v1265, %v2721
    %v2850 = vsel %vm2786, %v1268, %v2722
    %vm2851 = vcmask 7168
    %2852 = vst.msk [vmem:[#allocation2] sm:$0xff] %vm2851, %v2787
    %2853 = vst.msk [vmem:[#allocation2 + $0x8] sm:$0xff] %vm2851, %v2788
    %2854 = vst.msk [vmem:[#allocation2 + $0x10] sm:$0xff] %vm2851, %v2789
    %2855 = vst.msk [vmem:[#allocation2 + $0x18] sm:$0xff] %vm2851, %v2790
    %2856 = vst.msk [vmem:[#allocation2 + $0x20] sm:$0xff] %vm2851, %v2791
    %2857 = vst.msk [vmem:[#allocation2 + $0x28] sm:$0xff] %vm2851, %v2792
    %2858 = vst.msk [vmem:[#allocation2 + $0x30] sm:$0xff] %vm2851, %v2793
    %2859 = vst.msk [vmem:[#allocation2 + $0x38] sm:$0xff] %vm2851, %v2794
    %2860 = vst.msk [vmem:[#allocation2 + $0x40] sm:$0xff] %vm2851, %v2795
    %2861 = vst.msk [vmem:[#allocation2 + $0x48] sm:$0xff] %vm2851, %v2796
    %2862 = vst.msk [vmem:[#allocation2 + $0x50] sm:$0xff] %vm2851, %v2797
    %2863 = vst.msk [vmem:[#allocation2 + $0x58] sm:$0xff] %vm2851, %v2798
    %2864 = vst.msk [vmem:[#allocation2 + $0x60] sm:$0xff] %vm2851, %v2799
    %2865 = vst.msk [vmem:[#allocation2 + $0x68] sm:$0xff] %vm2851, %v2800
    %2866 = vst.msk [vmem:[#allocation2 + $0x70] sm:$0xff] %vm2851, %v2801
    %2867 = vst.msk [vmem:[#allocation2 + $0x78] sm:$0xff] %vm2851, %v2802
    %2868 = vst.msk [vmem:[#allocation2 + $0x80] sm:$0xff] %vm2851, %v2803
    %2869 = vst.msk [vmem:[#allocation2 + $0x88] sm:$0xff] %vm2851, %v2804
    %2870 = vst.msk [vmem:[#allocation2 + $0x90] sm:$0xff] %vm2851, %v2805
    %2871 = vst.msk [vmem:[#allocation2 + $0x98] sm:$0xff] %vm2851, %v2806
    %2872 = vst.msk [vmem:[#allocation2 + $0xa0] sm:$0xff] %vm2851, %v2807
    %2873 = vst.msk [vmem:[#allocation2 + $0xa8] sm:$0xff] %vm2851, %v2808
    %2874 = vst.msk [vmem:[#allocation2 + $0xb0] sm:$0xff] %vm2851, %v2809
    %2875 = vst.msk [vmem:[#allocation2 + $0xb8] sm:$0xff] %vm2851, %v2810
    %2876 = vst.msk [vmem:[#allocation2 + $0xc0] sm:$0xff] %vm2851, %v2811
    %2877 = vst.msk [vmem:[#allocation2 + $0xc8] sm:$0xff] %vm2851, %v2812
    %2878 = vst.msk [vmem:[#allocation2 + $0xd0] sm:$0xff] %vm2851, %v2813
    %2879 = vst.msk [vmem:[#allocation2 + $0xd8] sm:$0xff] %vm2851, %v2814
    %2880 = vst.msk [vmem:[#allocation2 + $0xe0] sm:$0xff] %vm2851, %v2815
    %2881 = vst.msk [vmem:[#allocation2 + $0xe8] sm:$0xff] %vm2851, %v2816
    %2882 = vst.msk [vmem:[#allocation2 + $0xf0] sm:$0xff] %vm2851, %v2817
    %2883 = vst.msk [vmem:[#allocation2 + $0xf8] sm:$0xff] %vm2851, %v2818
    %2884 = vst.msk [vmem:[#allocation2 + $0x100] sm:$0xff] %vm2851, %v2819
    %2885 = vst.msk [vmem:[#allocation2 + $0x108] sm:$0xff] %vm2851, %v2820
    %2886 = vst.msk [vmem:[#allocation2 + $0x110] sm:$0xff] %vm2851, %v2821
    %2887 = vst.msk [vmem:[#allocation2 + $0x118] sm:$0xff] %vm2851, %v2822
    %2888 = vst.msk [vmem:[#allocation2 + $0x120] sm:$0xff] %vm2851, %v2823
    %2889 = vst.msk [vmem:[#allocation2 + $0x128] sm:$0xff] %vm2851, %v2824
    %2890 = vst.msk [vmem:[#allocation2 + $0x130] sm:$0xff] %vm2851, %v2825
    %2891 = vst.msk [vmem:[#allocation2 + $0x138] sm:$0xff] %vm2851, %v2826
    %2892 = vst.msk [vmem:[#allocation2 + $0x140] sm:$0xff] %vm2851, %v2827
    %2893 = vst.msk [vmem:[#allocation2 + $0x148] sm:$0xff] %vm2851, %v2828
    %2894 = vst.msk [vmem:[#allocation2 + $0x150] sm:$0xff] %vm2851, %v2829
    %2895 = vst.msk [vmem:[#allocation2 + $0x158] sm:$0xff] %vm2851, %v2830
    %2896 = vst.msk [vmem:[#allocation2 + $0x160] sm:$0xff] %vm2851, %v2831
    %2897 = vst.msk [vmem:[#allocation2 + $0x168] sm:$0xff] %vm2851, %v2832
    %2898 = vst.msk [vmem:[#allocation2 + $0x170] sm:$0xff] %vm2851, %v2833
    %2899 = vst.msk [vmem:[#allocation2 + $0x178] sm:$0xff] %vm2851, %v2834
    %2900 = vst.msk [vmem:[#allocation2 + $0x180] sm:$0xff] %vm2851, %v2835
    %2901 = vst.msk [vmem:[#allocation2 + $0x188] sm:$0xff] %vm2851, %v2836
    %2902 = vst.msk [vmem:[#allocation2 + $0x190] sm:$0xff] %vm2851, %v2837
    %2903 = vst.msk [vmem:[#allocation2 + $0x198] sm:$0xff] %vm2851, %v2838
    %2904 = vst.msk [vmem:[#allocation2 + $0x1a0] sm:$0xff] %vm2851, %v2839
    %2905 = vst.msk [vmem:[#allocation2 + $0x1a8] sm:$0xff] %vm2851, %v2840
    %2906 = vst.msk [vmem:[#allocation2 + $0x1b0] sm:$0xff] %vm2851, %v2841
    %2907 = vst.msk [vmem:[#allocation2 + $0x1b8] sm:$0xff] %vm2851, %v2842
    %2908 = vst.msk [vmem:[#allocation2 + $0x1c0] sm:$0xff] %vm2851, %v2843
    %2909 = vst.msk [vmem:[#allocation2 + $0x1c8] sm:$0xff] %vm2851, %v2844
    %2910 = vst.msk [vmem:[#allocation2 + $0x1d0] sm:$0xff] %vm2851, %v2845
    %2911 = vst.msk [vmem:[#allocation2 + $0x1d8] sm:$0xff] %vm2851, %v2846
    %2912 = vst.msk [vmem:[#allocation2 + $0x1e0] sm:$0xff] %vm2851, %v2847
    %2913 = vst.msk [vmem:[#allocation2 + $0x1e8] sm:$0xff] %vm2851, %v2848
    %2914 = vst.msk [vmem:[#allocation2 + $0x1f0] sm:$0xff] %vm2851, %v2849
    %2915 = vst.msk [vmem:[#allocation2 + $0x1f8] sm:$0xff] %vm2851, %v2850
    %v2916 = vld [vmem:[#allocation3] sm:$0xff]
    %v2917 = vld [vmem:[#allocation3 + $0x8] sm:$0xff]
    %v2918 = vld [vmem:[#allocation3 + $0x10] sm:$0xff]
    %v2919 = vld [vmem:[#allocation3 + $0x18] sm:$0xff]
    %v2920 = vld [vmem:[#allocation3 + $0x20] sm:$0xff]
    %v2921 = vld [vmem:[#allocation3 + $0x28] sm:$0xff]
    %v2922 = vld [vmem:[#allocation3 + $0x30] sm:$0xff]
    %v2923 = vld [vmem:[#allocation3 + $0x38] sm:$0xff]
    %v2924 = vld [vmem:[#allocation3 + $0x40] sm:$0xff]
    %v2925 = vld [vmem:[#allocation3 + $0x48] sm:$0xff]
    %v2926 = vld [vmem:[#allocation3 + $0x50] sm:$0xff]
    %v2927 = vld [vmem:[#allocation3 + $0x58] sm:$0xff]
    %v2928 = vld [vmem:[#allocation3 + $0x60] sm:$0xff]
    %v2929 = vld [vmem:[#allocation3 + $0x68] sm:$0xff]
    %v2930 = vld [vmem:[#allocation3 + $0x70] sm:$0xff]
    %v2931 = vld [vmem:[#allocation3 + $0x78] sm:$0xff]
    %v2932 = vld [vmem:[#allocation3 + $0x80] sm:$0xff]
    %v2933 = vld [vmem:[#allocation3 + $0x88] sm:$0xff]
    %v2934 = vld [vmem:[#allocation3 + $0x90] sm:$0xff]
    %v2935 = vld [vmem:[#allocation3 + $0x98] sm:$0xff]
    %v2936 = vld [vmem:[#allocation3 + $0xa0] sm:$0xff]
    %v2937 = vld [vmem:[#allocation3 + $0xa8] sm:$0xff]
    %v2938 = vld [vmem:[#allocation3 + $0xb0] sm:$0xff]
    %v2939 = vld [vmem:[#allocation3 + $0xb8] sm:$0xff]
    %v2940 = vld [vmem:[#allocation3 + $0xc0] sm:$0xff]
    %v2941 = vld [vmem:[#allocation3 + $0xc8] sm:$0xff]
    %v2942 = vld [vmem:[#allocation3 + $0xd0] sm:$0xff]
    %v2943 = vld [vmem:[#allocation3 + $0xd8] sm:$0xff]
    %v2944 = vld [vmem:[#allocation3 + $0xe0] sm:$0xff]
    %v2945 = vld [vmem:[#allocation3 + $0xe8] sm:$0xff]
    %v2946 = vld [vmem:[#allocation3 + $0xf0] sm:$0xff]
    %v2947 = vld [vmem:[#allocation3 + $0xf8] sm:$0xff]
    %v2948 = vld [vmem:[#allocation3 + $0x100] sm:$0xff]
    %v2949 = vld [vmem:[#allocation3 + $0x108] sm:$0xff]
    %v2950 = vld [vmem:[#allocation3 + $0x110] sm:$0xff]
    %v2951 = vld [vmem:[#allocation3 + $0x118] sm:$0xff]
    %v2952 = vld [vmem:[#allocation3 + $0x120] sm:$0xff]
    %v2953 = vld [vmem:[#allocation3 + $0x128] sm:$0xff]
    %v2954 = vld [vmem:[#allocation3 + $0x130] sm:$0xff]
    %v2955 = vld [vmem:[#allocation3 + $0x138] sm:$0xff]
    %v2956 = vld [vmem:[#allocation3 + $0x140] sm:$0xff]
    %v2957 = vld [vmem:[#allocation3 + $0x148] sm:$0xff]
    %v2958 = vld [vmem:[#allocation3 + $0x150] sm:$0xff]
    %v2959 = vld [vmem:[#allocation3 + $0x158] sm:$0xff]
    %v2960 = vld [vmem:[#allocation3 + $0x160] sm:$0xff]
    %v2961 = vld [vmem:[#allocation3 + $0x168] sm:$0xff]
    %v2962 = vld [vmem:[#allocation3 + $0x170] sm:$0xff]
    %v2963 = vld [vmem:[#allocation3 + $0x178] sm:$0xff]
    %v2964 = vld [vmem:[#allocation3 + $0x180] sm:$0xff]
    %v2965 = vld [vmem:[#allocation3 + $0x188] sm:$0xff]
    %v2966 = vld [vmem:[#allocation3 + $0x190] sm:$0xff]
    %v2967 = vld [vmem:[#allocation3 + $0x198] sm:$0xff]
    %v2968 = vld [vmem:[#allocation3 + $0x1a0] sm:$0xff]
    %v2969 = vld [vmem:[#allocation3 + $0x1a8] sm:$0xff]
    %v2970 = vld [vmem:[#allocation3 + $0x1b0] sm:$0xff]
    %v2971 = vld [vmem:[#allocation3 + $0x1b8] sm:$0xff]
    %v2972 = vld [vmem:[#allocation3 + $0x1c0] sm:$0xff]
    %v2973 = vld [vmem:[#allocation3 + $0x1c8] sm:$0xff]
    %v2974 = vld [vmem:[#allocation3 + $0x1d0] sm:$0xff]
    %v2975 = vld [vmem:[#allocation3 + $0x1d8] sm:$0xff]
    %v2976 = vld [vmem:[#allocation3 + $0x1e0] sm:$0xff]
    %v2977 = vld [vmem:[#allocation3 + $0x1e8] sm:$0xff]
    %v2978 = vld [vmem:[#allocation3 + $0x1f0] sm:$0xff]
    %v2979 = vld [vmem:[#allocation3 + $0x1f8] sm:$0xff]
    %v2980 = vsel %vm2723, %v2595, %v2916
    %v2981 = vsel %vm2724, %v2596, %v2917
    %v2982 = vsel %vm2725, %v2597, %v2918
    %v2983 = vsel %vm2726, %v2598, %v2919
    %v2984 = vsel %vm2727, %v2599, %v2920
    %v2985 = vsel %vm2728, %v2600, %v2921
    %v2986 = vsel %vm2729, %v2601, %v2922
    %v2987 = vsel %vm2730, %v2602, %v2923
    %v2988 = vsel %vm2731, %v2603, %v2924
    %v2989 = vsel %vm2732, %v2604, %v2925
    %v2990 = vsel %vm2733, %v2605, %v2926
    %v2991 = vsel %vm2734, %v2606, %v2927
    %v2992 = vsel %vm2735, %v2607, %v2928
    %v2993 = vsel %vm2736, %v2608, %v2929
    %v2994 = vsel %vm2737, %v2609, %v2930
    %v2995 = vsel %vm2738, %v2610, %v2931
    %v2996 = vsel %vm2739, %v2611, %v2932
    %v2997 = vsel %vm2740, %v2612, %v2933
    %v2998 = vsel %vm2741, %v2613, %v2934
    %v2999 = vsel %vm2742, %v2614, %v2935
    %v3000 = vsel %vm2743, %v2615, %v2936
    %v3001 = vsel %vm2744, %v2616, %v2937
    %v3002 = vsel %vm2745, %v2617, %v2938
    %v3003 = vsel %vm2746, %v2618, %v2939
    %v3004 = vsel %vm2747, %v2619, %v2940
    %v3005 = vsel %vm2748, %v2620, %v2941
    %v3006 = vsel %vm2749, %v2621, %v2942
    %v3007 = vsel %vm2750, %v2622, %v2943
    %v3008 = vsel %vm2751, %v2623, %v2944
    %v3009 = vsel %vm2752, %v2624, %v2945
    %v3010 = vsel %vm2753, %v2625, %v2946
    %v3011 = vsel %vm2754, %v2626, %v2947
    %v3012 = vsel %vm2755, %v2627, %v2948
    %v3013 = vsel %vm2756, %v2628, %v2949
    %v3014 = vsel %vm2757, %v2629, %v2950
    %v3015 = vsel %vm2758, %v2630, %v2951
    %v3016 = vsel %vm2759, %v2631, %v2952
    %v3017 = vsel %vm2760, %v2632, %v2953
    %v3018 = vsel %vm2761, %v2633, %v2954
    %v3019 = vsel %vm2762, %v2634, %v2955
    %v3020 = vsel %vm2763, %v2635, %v2956
    %v3021 = vsel %vm2764, %v2636, %v2957
    %v3022 = vsel %vm2765, %v2637, %v2958
    %v3023 = vsel %vm2766, %v2638, %v2959
    %v3024 = vsel %vm2767, %v2639, %v2960
    %v3025 = vsel %vm2768, %v2640, %v2961
    %v3026 = vsel %vm2769, %v2641, %v2962
    %v3027 = vsel %vm2770, %v2642, %v2963
    %v3028 = vsel %vm2771, %v2643, %v2964
    %v3029 = vsel %vm2772, %v2644, %v2965
    %v3030 = vsel %vm2773, %v2645, %v2966
    %v3031 = vsel %vm2774, %v2646, %v2967
    %v3032 = vsel %vm2775, %v2647, %v2968
    %v3033 = vsel %vm2776, %v2648, %v2969
    %v3034 = vsel %vm2777, %v2649, %v2970
    %v3035 = vsel %vm2778, %v2650, %v2971
    %v3036 = vsel %vm2779, %v2651, %v2972
    %v3037 = vsel %vm2780, %v2652, %v2973
    %v3038 = vsel %vm2781, %v2653, %v2974
    %v3039 = vsel %vm2782, %v2654, %v2975
    %v3040 = vsel %vm2783, %v2655, %v2976
    %v3041 = vsel %vm2784, %v2656, %v2977
    %v3042 = vsel %vm2785, %v2657, %v2978
    %v3043 = vsel %vm2786, %v2658, %v2979
    %3044 = vst.msk [vmem:[#allocation3] sm:$0xff] %vm2851, %v2980
    %3045 = vst.msk [vmem:[#allocation3 + $0x8] sm:$0xff] %vm2851, %v2981
    %3046 = vst.msk [vmem:[#allocation3 + $0x10] sm:$0xff] %vm2851, %v2982
    %3047 = vst.msk [vmem:[#allocation3 + $0x18] sm:$0xff] %vm2851, %v2983
    %3048 = vst.msk [vmem:[#allocation3 + $0x20] sm:$0xff] %vm2851, %v2984
    %3049 = vst.msk [vmem:[#allocation3 + $0x28] sm:$0xff] %vm2851, %v2985
    %3050 = vst.msk [vmem:[#allocation3 + $0x30] sm:$0xff] %vm2851, %v2986
    %3051 = vst.msk [vmem:[#allocation3 + $0x38] sm:$0xff] %vm2851, %v2987
    %3052 = vst.msk [vmem:[#allocation3 + $0x40] sm:$0xff] %vm2851, %v2988
    %3053 = vst.msk [vmem:[#allocation3 + $0x48] sm:$0xff] %vm2851, %v2989
    %3054 = vst.msk [vmem:[#allocation3 + $0x50] sm:$0xff] %vm2851, %v2990
    %3055 = vst.msk [vmem:[#allocation3 + $0x58] sm:$0xff] %vm2851, %v2991
    %3056 = vst.msk [vmem:[#allocation3 + $0x60] sm:$0xff] %vm2851, %v2992
    %3057 = vst.msk [vmem:[#allocation3 + $0x68] sm:$0xff] %vm2851, %v2993
    %3058 = vst.msk [vmem:[#allocation3 + $0x70] sm:$0xff] %vm2851, %v2994
    %3059 = vst.msk [vmem:[#allocation3 + $0x78] sm:$0xff] %vm2851, %v2995
    %3060 = vst.msk [vmem:[#allocation3 + $0x80] sm:$0xff] %vm2851, %v2996
    %3061 = vst.msk [vmem:[#allocation3 + $0x88] sm:$0xff] %vm2851, %v2997
    %3062 = vst.msk [vmem:[#allocation3 + $0x90] sm:$0xff] %vm2851, %v2998
    %3063 = vst.msk [vmem:[#allocation3 + $0x98] sm:$0xff] %vm2851, %v2999
    %3064 = vst.msk [vmem:[#allocation3 + $0xa0] sm:$0xff] %vm2851, %v3000
    %3065 = vst.msk [vmem:[#allocation3 + $0xa8] sm:$0xff] %vm2851, %v3001
    %3066 = vst.msk [vmem:[#allocation3 + $0xb0] sm:$0xff] %vm2851, %v3002
    %3067 = vst.msk [vmem:[#allocation3 + $0xb8] sm:$0xff] %vm2851, %v3003
    %3068 = vst.msk [vmem:[#allocation3 + $0xc0] sm:$0xff] %vm2851, %v3004
    %3069 = vst.msk [vmem:[#allocation3 + $0xc8] sm:$0xff] %vm2851, %v3005
    %3070 = vst.msk [vmem:[#allocation3 + $0xd0] sm:$0xff] %vm2851, %v3006
    %3071 = vst.msk [vmem:[#allocation3 + $0xd8] sm:$0xff] %vm2851, %v3007
    %3072 = vst.msk [vmem:[#allocation3 + $0xe0] sm:$0xff] %vm2851, %v3008
    %3073 = vst.msk [vmem:[#allocation3 + $0xe8] sm:$0xff] %vm2851, %v3009
    %3074 = vst.msk [vmem:[#allocation3 + $0xf0] sm:$0xff] %vm2851, %v3010
    %3075 = vst.msk [vmem:[#allocation3 + $0xf8] sm:$0xff] %vm2851, %v3011
    %3076 = vst.msk [vmem:[#allocation3 + $0x100] sm:$0xff] %vm2851, %v3012
    %3077 = vst.msk [vmem:[#allocation3 + $0x108] sm:$0xff] %vm2851, %v3013
    %3078 = vst.msk [vmem:[#allocation3 + $0x110] sm:$0xff] %vm2851, %v3014
    %3079 = vst.msk [vmem:[#allocation3 + $0x118] sm:$0xff] %vm2851, %v3015
    %3080 = vst.msk [vmem:[#allocation3 + $0x120] sm:$0xff] %vm2851, %v3016
    %3081 = vst.msk [vmem:[#allocation3 + $0x128] sm:$0xff] %vm2851, %v3017
    %3082 = vst.msk [vmem:[#allocation3 + $0x130] sm:$0xff] %vm2851, %v3018
    %3083 = vst.msk [vmem:[#allocation3 + $0x138] sm:$0xff] %vm2851, %v3019
    %3084 = vst.msk [vmem:[#allocation3 + $0x140] sm:$0xff] %vm2851, %v3020
    %3085 = vst.msk [vmem:[#allocation3 + $0x148] sm:$0xff] %vm2851, %v3021
    %3086 = vst.msk [vmem:[#allocation3 + $0x150] sm:$0xff] %vm2851, %v3022
    %3087 = vst.msk [vmem:[#allocation3 + $0x158] sm:$0xff] %vm2851, %v3023
    %3088 = vst.msk [vmem:[#allocation3 + $0x160] sm:$0xff] %vm2851, %v3024
    %3089 = vst.msk [vmem:[#allocation3 + $0x168] sm:$0xff] %vm2851, %v3025
    %3090 = vst.msk [vmem:[#allocation3 + $0x170] sm:$0xff] %vm2851, %v3026
    %3091 = vst.msk [vmem:[#allocation3 + $0x178] sm:$0xff] %vm2851, %v3027
    %3092 = vst.msk [vmem:[#allocation3 + $0x180] sm:$0xff] %vm2851, %v3028
    %3093 = vst.msk [vmem:[#allocation3 + $0x188] sm:$0xff] %vm2851, %v3029
    %3094 = vst.msk [vmem:[#allocation3 + $0x190] sm:$0xff] %vm2851, %v3030
    %3095 = vst.msk [vmem:[#allocation3 + $0x198] sm:$0xff] %vm2851, %v3031
    %3096 = vst.msk [vmem:[#allocation3 + $0x1a0] sm:$0xff] %vm2851, %v3032
    %3097 = vst.msk [vmem:[#allocation3 + $0x1a8] sm:$0xff] %vm2851, %v3033
    %3098 = vst.msk [vmem:[#allocation3 + $0x1b0] sm:$0xff] %vm2851, %v3034
    %3099 = vst.msk [vmem:[#allocation3 + $0x1b8] sm:$0xff] %vm2851, %v3035
    %3100 = vst.msk [vmem:[#allocation3 + $0x1c0] sm:$0xff] %vm2851, %v3036
    %3101 = vst.msk [vmem:[#allocation3 + $0x1c8] sm:$0xff] %vm2851, %v3037
    %3102 = vst.msk [vmem:[#allocation3 + $0x1d0] sm:$0xff] %vm2851, %v3038
    %3103 = vst.msk [vmem:[#allocation3 + $0x1d8] sm:$0xff] %vm2851, %v3039
    %3104 = vst.msk [vmem:[#allocation3 + $0x1e0] sm:$0xff] %vm2851, %v3040
    %3105 = vst.msk [vmem:[#allocation3 + $0x1e8] sm:$0xff] %vm2851, %v3041
    %3106 = vst.msk [vmem:[#allocation3 + $0x1f0] sm:$0xff] %vm2851, %v3042
    %3107 = vst.msk [vmem:[#allocation3 + $0x1f8] sm:$0xff] %vm2851, %v3043
    %v3108 = vld [vmem:[#allocation4] sm:$0xff]
    %v3109 = vld [vmem:[#allocation4 + $0x8] sm:$0xff]
    %v3110 = vld [vmem:[#allocation4 + $0x10] sm:$0xff]
    %v3111 = vld [vmem:[#allocation4 + $0x18] sm:$0xff]
    %v3112 = vld [vmem:[#allocation4 + $0x20] sm:$0xff]
    %v3113 = vld [vmem:[#allocation4 + $0x28] sm:$0xff]
    %v3114 = vld [vmem:[#allocation4 + $0x30] sm:$0xff]
    %v3115 = vld [vmem:[#allocation4 + $0x38] sm:$0xff]
    %v3116 = vld [vmem:[#allocation4 + $0x40] sm:$0xff]
    %v3117 = vld [vmem:[#allocation4 + $0x48] sm:$0xff]
    %v3118 = vld [vmem:[#allocation4 + $0x50] sm:$0xff]
    %v3119 = vld [vmem:[#allocation4 + $0x58] sm:$0xff]
    %v3120 = vld [vmem:[#allocation4 + $0x60] sm:$0xff]
    %v3121 = vld [vmem:[#allocation4 + $0x68] sm:$0xff]
    %v3122 = vld [vmem:[#allocation4 + $0x70] sm:$0xff]
    %v3123 = vld [vmem:[#allocation4 + $0x78] sm:$0xff]
    %v3124 = vld [vmem:[#allocation4 + $0x80] sm:$0xff]
    %v3125 = vld [vmem:[#allocation4 + $0x88] sm:$0xff]
    %v3126 = vld [vmem:[#allocation4 + $0x90] sm:$0xff]
    %v3127 = vld [vmem:[#allocation4 + $0x98] sm:$0xff]
    %v3128 = vld [vmem:[#allocation4 + $0xa0] sm:$0xff]
    %v3129 = vld [vmem:[#allocation4 + $0xa8] sm:$0xff]
    %v3130 = vld [vmem:[#allocation4 + $0xb0] sm:$0xff]
    %v3131 = vld [vmem:[#allocation4 + $0xb8] sm:$0xff]
    %v3132 = vld [vmem:[#allocation4 + $0xc0] sm:$0xff]
    %v3133 = vld [vmem:[#allocation4 + $0xc8] sm:$0xff]
    %v3134 = vld [vmem:[#allocation4 + $0xd0] sm:$0xff]
    %v3135 = vld [vmem:[#allocation4 + $0xd8] sm:$0xff]
    %v3136 = vld [vmem:[#allocation4 + $0xe0] sm:$0xff]
    %v3137 = vld [vmem:[#allocation4 + $0xe8] sm:$0xff]
    %v3138 = vld [vmem:[#allocation4 + $0xf0] sm:$0xff]
    %v3139 = vld [vmem:[#allocation4 + $0xf8] sm:$0xff]
    %v3140 = vld [vmem:[#allocation4 + $0x100] sm:$0xff]
    %v3141 = vld [vmem:[#allocation4 + $0x108] sm:$0xff]
    %v3142 = vld [vmem:[#allocation4 + $0x110] sm:$0xff]
    %v3143 = vld [vmem:[#allocation4 + $0x118] sm:$0xff]
    %v3144 = vld [vmem:[#allocation4 + $0x120] sm:$0xff]
    %v3145 = vld [vmem:[#allocation4 + $0x128] sm:$0xff]
    %v3146 = vld [vmem:[#allocation4 + $0x130] sm:$0xff]
    %v3147 = vld [vmem:[#allocation4 + $0x138] sm:$0xff]
    %v3148 = vld [vmem:[#allocation4 + $0x140] sm:$0xff]
    %v3149 = vld [vmem:[#allocation4 + $0x148] sm:$0xff]
    %v3150 = vld [vmem:[#allocation4 + $0x150] sm:$0xff]
    %v3151 = vld [vmem:[#allocation4 + $0x158] sm:$0xff]
    %v3152 = vld [vmem:[#allocation4 + $0x160] sm:$0xff]
    %v3153 = vld [vmem:[#allocation4 + $0x168] sm:$0xff]
    %v3154 = vld [vmem:[#allocation4 + $0x170] sm:$0xff]
    %v3155 = vld [vmem:[#allocation4 + $0x178] sm:$0xff]
    %v3156 = vld [vmem:[#allocation4 + $0x180] sm:$0xff]
    %v3157 = vld [vmem:[#allocation4 + $0x188] sm:$0xff]
    %v3158 = vld [vmem:[#allocation4 + $0x190] sm:$0xff]
    %v3159 = vld [vmem:[#allocation4 + $0x198] sm:$0xff]
    %v3160 = vld [vmem:[#allocation4 + $0x1a0] sm:$0xff]
    %v3161 = vld [vmem:[#allocation4 + $0x1a8] sm:$0xff]
    %v3162 = vld [vmem:[#allocation4 + $0x1b0] sm:$0xff]
    %v3163 = vld [vmem:[#allocation4 + $0x1b8] sm:$0xff]
    %v3164 = vld [vmem:[#allocation4 + $0x1c0] sm:$0xff]
    %v3165 = vld [vmem:[#allocation4 + $0x1c8] sm:$0xff]
    %v3166 = vld [vmem:[#allocation4 + $0x1d0] sm:$0xff]
    %v3167 = vld [vmem:[#allocation4 + $0x1d8] sm:$0xff]
    %v3168 = vld [vmem:[#allocation4 + $0x1e0] sm:$0xff]
    %v3169 = vld [vmem:[#allocation4 + $0x1e8] sm:$0xff]
    %v3170 = vld [vmem:[#allocation4 + $0x1f0] sm:$0xff]
    %v3171 = vld [vmem:[#allocation4 + $0x1f8] sm:$0xff]
    %v3172 = vsel %vm2723, 1, 0
    %v3173 = vsel %vm2724, 1, 0
    %v3174 = vsel %vm2725, 1, 0
    %v3175 = vsel %vm2726, 1, 0
    %v3176 = vsel %vm2727, 1, 0
    %v3177 = vsel %vm2728, 1, 0
    %v3178 = vsel %vm2729, 1, 0
    %v3179 = vsel %vm2730, 1, 0
    %v3180 = vsel %vm2731, 1, 0
    %v3181 = vsel %vm2732, 1, 0
    %v3182 = vsel %vm2733, 1, 0
    %v3183 = vsel %vm2734, 1, 0
    %v3184 = vsel %vm2735, 1, 0
    %v3185 = vsel %vm2736, 1, 0
    %v3186 = vsel %vm2737, 1, 0
    %v3187 = vsel %vm2738, 1, 0
    %v3188 = vsel %vm2739, 1, 0
    %v3189 = vsel %vm2740, 1, 0
    %v3190 = vsel %vm2741, 1, 0
    %v3191 = vsel %vm2742, 1, 0
    %v3192 = vsel %vm2743, 1, 0
    %v3193 = vsel %vm2744, 1, 0
    %v3194 = vsel %vm2745, 1, 0
    %v3195 = vsel %vm2746, 1, 0
    %v3196 = vsel %vm2747, 1, 0
    %v3197 = vsel %vm2748, 1, 0
    %v3198 = vsel %vm2749, 1, 0
    %v3199 = vsel %vm2750, 1, 0
    %v3200 = vsel %vm2751, 1, 0
    %v3201 = vsel %vm2752, 1, 0
    %v3202 = vsel %vm2753, 1, 0
    %v3203 = vsel %vm2754, 1, 0
    %v3204 = vsel %vm2755, 1, 0
    %v3205 = vsel %vm2756, 1, 0
    %v3206 = vsel %vm2757, 1, 0
    %v3207 = vsel %vm2758, 1, 0
    %v3208 = vsel %vm2759, 1, 0
    %v3209 = vsel %vm2760, 1, 0
    %v3210 = vsel %vm2761, 1, 0
    %v3211 = vsel %vm2762, 1, 0
    %v3212 = vsel %vm2763, 1, 0
    %v3213 = vsel %vm2764, 1, 0
    %v3214 = vsel %vm2765, 1, 0
    %v3215 = vsel %vm2766, 1, 0
    %v3216 = vsel %vm2767, 1, 0
    %v3217 = vsel %vm2768, 1, 0
    %v3218 = vsel %vm2769, 1, 0
    %v3219 = vsel %vm2770, 1, 0
    %v3220 = vsel %vm2771, 1, 0
    %v3221 = vsel %vm2772, 1, 0
    %v3222 = vsel %vm2773, 1, 0
    %v3223 = vsel %vm2774, 1, 0
    %v3224 = vsel %vm2775, 1, 0
    %v3225 = vsel %vm2776, 1, 0
    %v3226 = vsel %vm2777, 1, 0
    %v3227 = vsel %vm2778, 1, 0
    %v3228 = vsel %vm2779, 1, 0
    %v3229 = vsel %vm2780, 1, 0
    %v3230 = vsel %vm2781, 1, 0
    %v3231 = vsel %vm2782, 1, 0
    %v3232 = vsel %vm2783, 1, 0
    %v3233 = vsel %vm2784, 1, 0
    %v3234 = vsel %vm2785, 1, 0
    %v3235 = vsel %vm2786, 1, 0
    %3236 = vset.pattern.permute.xlu0 0
    %3237 = vperm.xlu0 %3236, %v3172
    %v3238 = vpop.permute.xlu0 %3237
    %3239 = vset.pattern.permute.xlu0 0
    %3240 = vperm.xlu0 %3239, %v3173
    %v3241 = vpop.permute.xlu0 %3240
    %3242 = vset.pattern.permute.xlu0 0
    %3243 = vperm.xlu0 %3242, %v3174
    %v3244 = vpop.permute.xlu0 %3243
    %3245 = vset.pattern.permute.xlu0 0
    %3246 = vperm.xlu0 %3245, %v3175
    %v3247 = vpop.permute.xlu0 %3246
    %3248 = vset.pattern.permute.xlu0 0
    %3249 = vperm.xlu0 %3248, %v3176
    %v3250 = vpop.permute.xlu0 %3249
    %3251 = vset.pattern.permute.xlu0 0
    %3252 = vperm.xlu0 %3251, %v3177
    %v3253 = vpop.permute.xlu0 %3252
    %3254 = vset.pattern.permute.xlu0 0
    %3255 = vperm.xlu0 %3254, %v3178
    %v3256 = vpop.permute.xlu0 %3255
    %3257 = vset.pattern.permute.xlu0 0
    %3258 = vperm.xlu0 %3257, %v3179
    %v3259 = vpop.permute.xlu0 %3258
    %3260 = vset.pattern.permute.xlu0 0
    %3261 = vperm.xlu0 %3260, %v3180
    %v3262 = vpop.permute.xlu0 %3261
    %3263 = vset.pattern.permute.xlu0 0
    %3264 = vperm.xlu0 %3263, %v3181
    %v3265 = vpop.permute.xlu0 %3264
    %3266 = vset.pattern.permute.xlu0 0
    %3267 = vperm.xlu0 %3266, %v3182
    %v3268 = vpop.permute.xlu0 %3267
    %3269 = vset.pattern.permute.xlu0 0
    %3270 = vperm.xlu0 %3269, %v3183
    %v3271 = vpop.permute.xlu0 %3270
    %3272 = vset.pattern.permute.xlu0 0
    %3273 = vperm.xlu0 %3272, %v3184
    %v3274 = vpop.permute.xlu0 %3273
    %3275 = vset.pattern.permute.xlu0 0
    %3276 = vperm.xlu0 %3275, %v3185
    %v3277 = vpop.permute.xlu0 %3276
    %3278 = vset.pattern.permute.xlu0 0
    %3279 = vperm.xlu0 %3278, %v3186
    %v3280 = vpop.permute.xlu0 %3279
    %3281 = vset.pattern.permute.xlu0 0
    %3282 = vperm.xlu0 %3281, %v3187
    %v3283 = vpop.permute.xlu0 %3282
    %3284 = vset.pattern.permute.xlu0 0
    %3285 = vperm.xlu0 %3284, %v3188
    %v3286 = vpop.permute.xlu0 %3285
    %3287 = vset.pattern.permute.xlu0 0
    %3288 = vperm.xlu0 %3287, %v3189
    %v3289 = vpop.permute.xlu0 %3288
    %3290 = vset.pattern.permute.xlu0 0
    %3291 = vperm.xlu0 %3290, %v3190
    %v3292 = vpop.permute.xlu0 %3291
    %3293 = vset.pattern.permute.xlu0 0
    %3294 = vperm.xlu0 %3293, %v3191
    %v3295 = vpop.permute.xlu0 %3294
    %3296 = vset.pattern.permute.xlu0 0
    %3297 = vperm.xlu0 %3296, %v3192
    %v3298 = vpop.permute.xlu0 %3297
    %3299 = vset.pattern.permute.xlu0 0
    %3300 = vperm.xlu0 %3299, %v3193
    %v3301 = vpop.permute.xlu0 %3300
    %3302 = vset.pattern.permute.xlu0 0
    %3303 = vperm.xlu0 %3302, %v3194
    %v3304 = vpop.permute.xlu0 %3303
    %3305 = vset.pattern.permute.xlu0 0
    %3306 = vperm.xlu0 %3305, %v3195
    %v3307 = vpop.permute.xlu0 %3306
    %3308 = vset.pattern.permute.xlu0 0
    %3309 = vperm.xlu0 %3308, %v3196
    %v3310 = vpop.permute.xlu0 %3309
    %3311 = vset.pattern.permute.xlu0 0
    %3312 = vperm.xlu0 %3311, %v3197
    %v3313 = vpop.permute.xlu0 %3312
    %3314 = vset.pattern.permute.xlu0 0
    %3315 = vperm.xlu0 %3314, %v3198
    %v3316 = vpop.permute.xlu0 %3315
    %3317 = vset.pattern.permute.xlu0 0
    %3318 = vperm.xlu0 %3317, %v3199
    %v3319 = vpop.permute.xlu0 %3318
    %3320 = vset.pattern.permute.xlu0 0
    %3321 = vperm.xlu0 %3320, %v3200
    %v3322 = vpop.permute.xlu0 %3321
    %3323 = vset.pattern.permute.xlu0 0
    %3324 = vperm.xlu0 %3323, %v3201
    %v3325 = vpop.permute.xlu0 %3324
    %3326 = vset.pattern.permute.xlu0 0
    %3327 = vperm.xlu0 %3326, %v3202
    %v3328 = vpop.permute.xlu0 %3327
    %3329 = vset.pattern.permute.xlu0 0
    %3330 = vperm.xlu0 %3329, %v3203
    %v3331 = vpop.permute.xlu0 %3330
    %3332 = vset.pattern.permute.xlu0 0
    %3333 = vperm.xlu0 %3332, %v3204
    %v3334 = vpop.permute.xlu0 %3333
    %3335 = vset.pattern.permute.xlu0 0
    %3336 = vperm.xlu0 %3335, %v3205
    %v3337 = vpop.permute.xlu0 %3336
    %3338 = vset.pattern.permute.xlu0 0
    %3339 = vperm.xlu0 %3338, %v3206
    %v3340 = vpop.permute.xlu0 %3339
    %3341 = vset.pattern.permute.xlu0 0
    %3342 = vperm.xlu0 %3341, %v3207
    %v3343 = vpop.permute.xlu0 %3342
    %3344 = vset.pattern.permute.xlu0 0
    %3345 = vperm.xlu0 %3344, %v3208
    %v3346 = vpop.permute.xlu0 %3345
    %3347 = vset.pattern.permute.xlu0 0
    %3348 = vperm.xlu0 %3347, %v3209
    %v3349 = vpop.permute.xlu0 %3348
    %3350 = vset.pattern.permute.xlu0 0
    %3351 = vperm.xlu0 %3350, %v3210
    %v3352 = vpop.permute.xlu0 %3351
    %3353 = vset.pattern.permute.xlu0 0
    %3354 = vperm.xlu0 %3353, %v3211
    %v3355 = vpop.permute.xlu0 %3354
    %3356 = vset.pattern.permute.xlu0 0
    %3357 = vperm.xlu0 %3356, %v3212
    %v3358 = vpop.permute.xlu0 %3357
    %3359 = vset.pattern.permute.xlu0 0
    %3360 = vperm.xlu0 %3359, %v3213
    %v3361 = vpop.permute.xlu0 %3360
    %3362 = vset.pattern.permute.xlu0 0
    %3363 = vperm.xlu0 %3362, %v3214
    %v3364 = vpop.permute.xlu0 %3363
    %3365 = vset.pattern.permute.xlu0 0
    %3366 = vperm.xlu0 %3365, %v3215
    %v3367 = vpop.permute.xlu0 %3366
    %3368 = vset.pattern.permute.xlu0 0
    %3369 = vperm.xlu0 %3368, %v3216
    %v3370 = vpop.permute.xlu0 %3369
    %3371 = vset.pattern.permute.xlu0 0
    %3372 = vperm.xlu0 %3371, %v3217
    %v3373 = vpop.permute.xlu0 %3372
    %3374 = vset.pattern.permute.xlu0 0
    %3375 = vperm.xlu0 %3374, %v3218
    %v3376 = vpop.permute.xlu0 %3375
    %3377 = vset.pattern.permute.xlu0 0
    %3378 = vperm.xlu0 %3377, %v3219
    %v3379 = vpop.permute.xlu0 %3378
    %3380 = vset.pattern.permute.xlu0 0
    %3381 = vperm.xlu0 %3380, %v3220
    %v3382 = vpop.permute.xlu0 %3381
    %3383 = vset.pattern.permute.xlu0 0
    %3384 = vperm.xlu0 %3383, %v3221
    %v3385 = vpop.permute.xlu0 %3384
    %3386 = vset.pattern.permute.xlu0 0
    %3387 = vperm.xlu0 %3386, %v3222
    %v3388 = vpop.permute.xlu0 %3387
    %3389 = vset.pattern.permute.xlu0 0
    %3390 = vperm.xlu0 %3389, %v3223
    %v3391 = vpop.permute.xlu0 %3390
    %3392 = vset.pattern.permute.xlu0 0
    %3393 = vperm.xlu0 %3392, %v3224
    %v3394 = vpop.permute.xlu0 %3393
    %3395 = vset.pattern.permute.xlu0 0
    %3396 = vperm.xlu0 %3395, %v3225
    %v3397 = vpop.permute.xlu0 %3396
    %3398 = vset.pattern.permute.xlu0 0
    %3399 = vperm.xlu0 %3398, %v3226
    %v3400 = vpop.permute.xlu0 %3399
    %3401 = vset.pattern.permute.xlu0 0
    %3402 = vperm.xlu0 %3401, %v3227
    %v3403 = vpop.permute.xlu0 %3402
    %3404 = vset.pattern.permute.xlu0 0
    %3405 = vperm.xlu0 %3404, %v3228
    %v3406 = vpop.permute.xlu0 %3405
    %3407 = vset.pattern.permute.xlu0 0
    %3408 = vperm.xlu0 %3407, %v3229
    %v3409 = vpop.permute.xlu0 %3408
    %3410 = vset.pattern.permute.xlu0 0
    %3411 = vperm.xlu0 %3410, %v3230
    %v3412 = vpop.permute.xlu0 %3411
    %3413 = vset.pattern.permute.xlu0 0
    %3414 = vperm.xlu0 %3413, %v3231
    %v3415 = vpop.permute.xlu0 %3414
    %3416 = vset.pattern.permute.xlu0 0
    %3417 = vperm.xlu0 %3416, %v3232
    %v3418 = vpop.permute.xlu0 %3417
    %3419 = vset.pattern.permute.xlu0 0
    %3420 = vperm.xlu0 %3419, %v3233
    %v3421 = vpop.permute.xlu0 %3420
    %3422 = vset.pattern.permute.xlu0 0
    %3423 = vperm.xlu0 %3422, %v3234
    %v3424 = vpop.permute.xlu0 %3423
    %3425 = vset.pattern.permute.xlu0 0
    %3426 = vperm.xlu0 %3425, %v3235
    %v3427 = vpop.permute.xlu0 %3426
    %vm3428 = vcmp.eq.s32.totalorder %v3238, 1
    %vm3429 = vcmp.eq.s32.totalorder %v3241, 1
    %vm3430 = vcmp.eq.s32.totalorder %v3244, 1
    %vm3431 = vcmp.eq.s32.totalorder %v3247, 1
    %vm3432 = vcmp.eq.s32.totalorder %v3250, 1
    %vm3433 = vcmp.eq.s32.totalorder %v3253, 1
    %vm3434 = vcmp.eq.s32.totalorder %v3256, 1
    %vm3435 = vcmp.eq.s32.totalorder %v3259, 1
    %vm3436 = vcmp.eq.s32.totalorder %v3262, 1
    %vm3437 = vcmp.eq.s32.totalorder %v3265, 1
    %vm3438 = vcmp.eq.s32.totalorder %v3268, 1
    %vm3439 = vcmp.eq.s32.totalorder %v3271, 1
    %vm3440 = vcmp.eq.s32.totalorder %v3274, 1
    %vm3441 = vcmp.eq.s32.totalorder %v3277, 1
    %vm3442 = vcmp.eq.s32.totalorder %v3280, 1
    %vm3443 = vcmp.eq.s32.totalorder %v3283, 1
    %vm3444 = vcmp.eq.s32.totalorder %v3286, 1
    %vm3445 = vcmp.eq.s32.totalorder %v3289, 1
    %vm3446 = vcmp.eq.s32.totalorder %v3292, 1
    %vm3447 = vcmp.eq.s32.totalorder %v3295, 1
    %vm3448 = vcmp.eq.s32.totalorder %v3298, 1
    %vm3449 = vcmp.eq.s32.totalorder %v3301, 1
    %vm3450 = vcmp.eq.s32.totalorder %v3304, 1
    %vm3451 = vcmp.eq.s32.totalorder %v3307, 1
    %vm3452 = vcmp.eq.s32.totalorder %v3310, 1
    %vm3453 = vcmp.eq.s32.totalorder %v3313, 1
    %vm3454 = vcmp.eq.s32.totalorder %v3316, 1
    %vm3455 = vcmp.eq.s32.totalorder %v3319, 1
    %vm3456 = vcmp.eq.s32.totalorder %v3322, 1
    %vm3457 = vcmp.eq.s32.totalorder %v3325, 1
    %vm3458 = vcmp.eq.s32.totalorder %v3328, 1
    %vm3459 = vcmp.eq.s32.totalorder %v3331, 1
    %vm3460 = vcmp.eq.s32.totalorder %v3334, 1
    %vm3461 = vcmp.eq.s32.totalorder %v3337, 1
    %vm3462 = vcmp.eq.s32.totalorder %v3340, 1
    %vm3463 = vcmp.eq.s32.totalorder %v3343, 1
    %vm3464 = vcmp.eq.s32.totalorder %v3346, 1
    %vm3465 = vcmp.eq.s32.totalorder %v3349, 1
    %vm3466 = vcmp.eq.s32.totalorder %v3352, 1
    %vm3467 = vcmp.eq.s32.totalorder %v3355, 1
    %vm3468 = vcmp.eq.s32.totalorder %v3358, 1
    %vm3469 = vcmp.eq.s32.totalorder %v3361, 1
    %vm3470 = vcmp.eq.s32.totalorder %v3364, 1
    %vm3471 = vcmp.eq.s32.totalorder %v3367, 1
    %vm3472 = vcmp.eq.s32.totalorder %v3370, 1
    %vm3473 = vcmp.eq.s32.totalorder %v3373, 1
    %vm3474 = vcmp.eq.s32.totalorder %v3376, 1
    %vm3475 = vcmp.eq.s32.totalorder %v3379, 1
    %vm3476 = vcmp.eq.s32.totalorder %v3382, 1
    %vm3477 = vcmp.eq.s32.totalorder %v3385, 1
    %vm3478 = vcmp.eq.s32.totalorder %v3388, 1
    %vm3479 = vcmp.eq.s32.totalorder %v3391, 1
    %vm3480 = vcmp.eq.s32.totalorder %v3394, 1
    %vm3481 = vcmp.eq.s32.totalorder %v3397, 1
    %vm3482 = vcmp.eq.s32.totalorder %v3400, 1
    %vm3483 = vcmp.eq.s32.totalorder %v3403, 1
    %vm3484 = vcmp.eq.s32.totalorder %v3406, 1
    %vm3485 = vcmp.eq.s32.totalorder %v3409, 1
    %vm3486 = vcmp.eq.s32.totalorder %v3412, 1
    %vm3487 = vcmp.eq.s32.totalorder %v3415, 1
    %vm3488 = vcmp.eq.s32.totalorder %v3418, 1
    %vm3489 = vcmp.eq.s32.totalorder %v3421, 1
    %vm3490 = vcmp.eq.s32.totalorder %v3424, 1
    %vm3491 = vcmp.eq.s32.totalorder %v3427, 1
    %v3492 = vsel %vm3428, %v2211, %v3108
    %v3493 = vsel %vm3429, %v2216, %v3109
    %v3494 = vsel %vm3430, %v2221, %v3110
    %v3495 = vsel %vm3431, %v2226, %v3111
    %v3496 = vsel %vm3432, %v2231, %v3112
    %v3497 = vsel %vm3433, %v2236, %v3113
    %v3498 = vsel %vm3434, %v2241, %v3114
    %v3499 = vsel %vm3435, %v2246, %v3115
    %v3500 = vsel %vm3436, %v2251, %v3116
    %v3501 = vsel %vm3437, %v2256, %v3117
    %v3502 = vsel %vm3438, %v2261, %v3118
    %v3503 = vsel %vm3439, %v2266, %v3119
    %v3504 = vsel %vm3440, %v2271, %v3120
    %v3505 = vsel %vm3441, %v2276, %v3121
    %v3506 = vsel %vm3442, %v2281, %v3122
    %v3507 = vsel %vm3443, %v2286, %v3123
    %v3508 = vsel %vm3444, %v2291, %v3124
    %v3509 = vsel %vm3445, %v2296, %v3125
    %v3510 = vsel %vm3446, %v2301, %v3126
    %v3511 = vsel %vm3447, %v2306, %v3127
    %v3512 = vsel %vm3448, %v2311, %v3128
    %v3513 = vsel %vm3449, %v2316, %v3129
    %v3514 = vsel %vm3450, %v2321, %v3130
    %v3515 = vsel %vm3451, %v2326, %v3131
    %v3516 = vsel %vm3452, %v2331, %v3132
    %v3517 = vsel %vm3453, %v2336, %v3133
    %v3518 = vsel %vm3454, %v2341, %v3134
    %v3519 = vsel %vm3455, %v2346, %v3135
    %v3520 = vsel %vm3456, %v2351, %v3136
    %v3521 = vsel %vm3457, %v2356, %v3137
    %v3522 = vsel %vm3458, %v2361, %v3138
    %v3523 = vsel %vm3459, %v2366, %v3139
    %v3524 = vsel %vm3460, %v2371, %v3140
    %v3525 = vsel %vm3461, %v2376, %v3141
    %v3526 = vsel %vm3462, %v2381, %v3142
    %v3527 = vsel %vm3463, %v2386, %v3143
    %v3528 = vsel %vm3464, %v2391, %v3144
    %v3529 = vsel %vm3465, %v2396, %v3145
    %v3530 = vsel %vm3466, %v2401, %v3146
    %v3531 = vsel %vm3467, %v2406, %v3147
    %v3532 = vsel %vm3468, %v2411, %v3148
    %v3533 = vsel %vm3469, %v2416, %v3149
    %v3534 = vsel %vm3470, %v2421, %v3150
    %v3535 = vsel %vm3471, %v2426, %v3151
    %v3536 = vsel %vm3472, %v2431, %v3152
    %v3537 = vsel %vm3473, %v2436, %v3153
    %v3538 = vsel %vm3474, %v2441, %v3154
    %v3539 = vsel %vm3475, %v2446, %v3155
    %v3540 = vsel %vm3476, %v2451, %v3156
    %v3541 = vsel %vm3477, %v2456, %v3157
    %v3542 = vsel %vm3478, %v2461, %v3158
    %v3543 = vsel %vm3479, %v2466, %v3159
    %v3544 = vsel %vm3480, %v2471, %v3160
    %v3545 = vsel %vm3481, %v2476, %v3161
    %v3546 = vsel %vm3482, %v2481, %v3162
    %v3547 = vsel %vm3483, %v2486, %v3163
    %v3548 = vsel %vm3484, %v2491, %v3164
    %v3549 = vsel %vm3485, %v2496, %v3165
    %v3550 = vsel %vm3486, %v2501, %v3166
    %v3551 = vsel %vm3487, %v2506, %v3167
    %v3552 = vsel %vm3488, %v2511, %v3168
    %v3553 = vsel %vm3489, %v2516, %v3169
    %v3554 = vsel %vm3490, %v2521, %v3170
    %v3555 = vsel %vm3491, %v2526, %v3171
    %3556 = vst.msk [vmem:[#allocation4] sm:$0xff] %vm289, %v3492
    %3557 = vst.msk [vmem:[#allocation4 + $0x8] sm:$0xff] %vm289, %v3493
    %3558 = vst.msk [vmem:[#allocation4 + $0x10] sm:$0xff] %vm289, %v3494
    %3559 = vst.msk [vmem:[#allocation4 + $0x18] sm:$0xff] %vm289, %v3495
    %3560 = vst.msk [vmem:[#allocation4 + $0x20] sm:$0xff] %vm289, %v3496
    %3561 = vst.msk [vmem:[#allocation4 + $0x28] sm:$0xff] %vm289, %v3497
    %3562 = vst.msk [vmem:[#allocation4 + $0x30] sm:$0xff] %vm289, %v3498
    %3563 = vst.msk [vmem:[#allocation4 + $0x38] sm:$0xff] %vm289, %v3499
    %3564 = vst.msk [vmem:[#allocation4 + $0x40] sm:$0xff] %vm289, %v3500
    %3565 = vst.msk [vmem:[#allocation4 + $0x48] sm:$0xff] %vm289, %v3501
    %3566 = vst.msk [vmem:[#allocation4 + $0x50] sm:$0xff] %vm289, %v3502
    %3567 = vst.msk [vmem:[#allocation4 + $0x58] sm:$0xff] %vm289, %v3503
    %3568 = vst.msk [vmem:[#allocation4 + $0x60] sm:$0xff] %vm289, %v3504
    %3569 = vst.msk [vmem:[#allocation4 + $0x68] sm:$0xff] %vm289, %v3505
    %3570 = vst.msk [vmem:[#allocation4 + $0x70] sm:$0xff] %vm289, %v3506
    %3571 = vst.msk [vmem:[#allocation4 + $0x78] sm:$0xff] %vm289, %v3507
    %3572 = vst.msk [vmem:[#allocation4 + $0x80] sm:$0xff] %vm289, %v3508
    %3573 = vst.msk [vmem:[#allocation4 + $0x88] sm:$0xff] %vm289, %v3509
    %3574 = vst.msk [vmem:[#allocation4 + $0x90] sm:$0xff] %vm289, %v3510
    %3575 = vst.msk [vmem:[#allocation4 + $0x98] sm:$0xff] %vm289, %v3511
    %3576 = vst.msk [vmem:[#allocation4 + $0xa0] sm:$0xff] %vm289, %v3512
    %3577 = vst.msk [vmem:[#allocation4 + $0xa8] sm:$0xff] %vm289, %v3513
    %3578 = vst.msk [vmem:[#allocation4 + $0xb0] sm:$0xff] %vm289, %v3514
    %3579 = vst.msk [vmem:[#allocation4 + $0xb8] sm:$0xff] %vm289, %v3515
    %3580 = vst.msk [vmem:[#allocation4 + $0xc0] sm:$0xff] %vm289, %v3516
    %3581 = vst.msk [vmem:[#allocation4 + $0xc8] sm:$0xff] %vm289, %v3517
    %3582 = vst.msk [vmem:[#allocation4 + $0xd0] sm:$0xff] %vm289, %v3518
    %3583 = vst.msk [vmem:[#allocation4 + $0xd8] sm:$0xff] %vm289, %v3519
    %3584 = vst.msk [vmem:[#allocation4 + $0xe0] sm:$0xff] %vm289, %v3520
    %3585 = vst.msk [vmem:[#allocation4 + $0xe8] sm:$0xff] %vm289, %v3521
    %3586 = vst.msk [vmem:[#allocation4 + $0xf0] sm:$0xff] %vm289, %v3522
    %3587 = vst.msk [vmem:[#allocation4 + $0xf8] sm:$0xff] %vm289, %v3523
    %3588 = vst.msk [vmem:[#allocation4 + $0x100] sm:$0xff] %vm289, %v3524
    %3589 = vst.msk [vmem:[#allocation4 + $0x108] sm:$0xff] %vm289, %v3525
    %3590 = vst.msk [vmem:[#allocation4 + $0x110] sm:$0xff] %vm289, %v3526
    %3591 = vst.msk [vmem:[#allocation4 + $0x118] sm:$0xff] %vm289, %v3527
    %3592 = vst.msk [vmem:[#allocation4 + $0x120] sm:$0xff] %vm289, %v3528
    %3593 = vst.msk [vmem:[#allocation4 + $0x128] sm:$0xff] %vm289, %v3529
    %3594 = vst.msk [vmem:[#allocation4 + $0x130] sm:$0xff] %vm289, %v3530
    %3595 = vst.msk [vmem:[#allocation4 + $0x138] sm:$0xff] %vm289, %v3531
    %3596 = vst.msk [vmem:[#allocation4 + $0x140] sm:$0xff] %vm289, %v3532
    %3597 = vst.msk [vmem:[#allocation4 + $0x148] sm:$0xff] %vm289, %v3533
    %3598 = vst.msk [vmem:[#allocation4 + $0x150] sm:$0xff] %vm289, %v3534
    %3599 = vst.msk [vmem:[#allocation4 + $0x158] sm:$0xff] %vm289, %v3535
    %3600 = vst.msk [vmem:[#allocation4 + $0x160] sm:$0xff] %vm289, %v3536
    %3601 = vst.msk [vmem:[#allocation4 + $0x168] sm:$0xff] %vm289, %v3537
    %3602 = vst.msk [vmem:[#allocation4 + $0x170] sm:$0xff] %vm289, %v3538
    %3603 = vst.msk [vmem:[#allocation4 + $0x178] sm:$0xff] %vm289, %v3539
    %3604 = vst.msk [vmem:[#allocation4 + $0x180] sm:$0xff] %vm289, %v3540
    %3605 = vst.msk [vmem:[#allocation4 + $0x188] sm:$0xff] %vm289, %v3541
    %3606 = vst.msk [vmem:[#allocation4 + $0x190] sm:$0xff] %vm289, %v3542
    %3607 = vst.msk [vmem:[#allocation4 + $0x198] sm:$0xff] %vm289, %v3543
    %3608 = vst.msk [vmem:[#allocation4 + $0x1a0] sm:$0xff] %vm289, %v3544
    %3609 = vst.msk [vmem:[#allocation4 + $0x1a8] sm:$0xff] %vm289, %v3545
    %3610 = vst.msk [vmem:[#allocation4 + $0x1b0] sm:$0xff] %vm289, %v3546
    %3611 = vst.msk [vmem:[#allocation4 + $0x1b8] sm:$0xff] %vm289, %v3547
    %3612 = vst.msk [vmem:[#allocation4 + $0x1c0] sm:$0xff] %vm289, %v3548
    %3613 = vst.msk [vmem:[#allocation4 + $0x1c8] sm:$0xff] %vm289, %v3549
    %3614 = vst.msk [vmem:[#allocation4 + $0x1d0] sm:$0xff] %vm289, %v3550
    %3615 = vst.msk [vmem:[#allocation4 + $0x1d8] sm:$0xff] %vm289, %v3551
    %3616 = vst.msk [vmem:[#allocation4 + $0x1e0] sm:$0xff] %vm289, %v3552
    %3617 = vst.msk [vmem:[#allocation4 + $0x1e8] sm:$0xff] %vm289, %v3553
    %3618 = vst.msk [vmem:[#allocation4 + $0x1f0] sm:$0xff] %vm289, %v3554
    %3619 = vst.msk [vmem:[#allocation4 + $0x1f8] sm:$0xff] %vm289, %v3555
    // Predicated region
    $region26: #{quantize_forward.1} parent=1 // pred_check
      %p3620 = pneg %p24
    $region27: #{quantize_forward.1} parent=1 // pred_check_branch
      %3622 = sbr.rel (%p3620) target = $region29
    $region28: #{quantize_forward.1} parent=1 // pred_region
      %v3623 = vld [vmem:[#allocation4] sm:$0xff]
      %v3624 = vld [vmem:[#allocation4 + $0x8] sm:$0xff]
      %v3625 = vld [vmem:[#allocation4 + $0x10] sm:$0xff]
      %v3626 = vld [vmem:[#allocation4 + $0x18] sm:$0xff]
      %v3627 = vld [vmem:[#allocation4 + $0x20] sm:$0xff]
      %v3628 = vld [vmem:[#allocation4 + $0x28] sm:$0xff]
      %v3629 = vld [vmem:[#allocation4 + $0x30] sm:$0xff]
      %v3630 = vld [vmem:[#allocation4 + $0x38] sm:$0xff]
      %v3631 = vld [vmem:[#allocation4 + $0x40] sm:$0xff]
      %v3632 = vld [vmem:[#allocation4 + $0x48] sm:$0xff]
      %v3633 = vld [vmem:[#allocation4 + $0x50] sm:$0xff]
      %v3634 = vld [vmem:[#allocation4 + $0x58] sm:$0xff]
      %v3635 = vld [vmem:[#allocation4 + $0x60] sm:$0xff]
      %v3636 = vld [vmem:[#allocation4 + $0x68] sm:$0xff]
      %v3637 = vld [vmem:[#allocation4 + $0x70] sm:$0xff]
      %v3638 = vld [vmem:[#allocation4 + $0x78] sm:$0xff]
      %v3639 = vld [vmem:[#allocation4 + $0x80] sm:$0xff]
      %v3640 = vld [vmem:[#allocation4 + $0x88] sm:$0xff]
      %v3641 = vld [vmem:[#allocation4 + $0x90] sm:$0xff]
      %v3642 = vld [vmem:[#allocation4 + $0x98] sm:$0xff]
      %v3643 = vld [vmem:[#allocation4 + $0xa0] sm:$0xff]
      %v3644 = vld [vmem:[#allocation4 + $0xa8] sm:$0xff]
      %v3645 = vld [vmem:[#allocation4 + $0xb0] sm:$0xff]
      %v3646 = vld [vmem:[#allocation4 + $0xb8] sm:$0xff]
      %v3647 = vld [vmem:[#allocation4 + $0xc0] sm:$0xff]
      %v3648 = vld [vmem:[#allocation4 + $0xc8] sm:$0xff]
      %v3649 = vld [vmem:[#allocation4 + $0xd0] sm:$0xff]
      %v3650 = vld [vmem:[#allocation4 + $0xd8] sm:$0xff]
      %v3651 = vld [vmem:[#allocation4 + $0xe0] sm:$0xff]
      %v3652 = vld [vmem:[#allocation4 + $0xe8] sm:$0xff]
      %v3653 = vld [vmem:[#allocation4 + $0xf0] sm:$0xff]
      %v3654 = vld [vmem:[#allocation4 + $0xf8] sm:$0xff]
      %v3655 = vld [vmem:[#allocation4 + $0x100] sm:$0xff]
      %v3656 = vld [vmem:[#allocation4 + $0x108] sm:$0xff]
      %v3657 = vld [vmem:[#allocation4 + $0x110] sm:$0xff]
      %v3658 = vld [vmem:[#allocation4 + $0x118] sm:$0xff]
      %v3659 = vld [vmem:[#allocation4 + $0x120] sm:$0xff]
      %v3660 = vld [vmem:[#allocation4 + $0x128] sm:$0xff]
      %v3661 = vld [vmem:[#allocation4 + $0x130] sm:$0xff]
      %v3662 = vld [vmem:[#allocation4 + $0x138] sm:$0xff]
      %v3663 = vld [vmem:[#allocation4 + $0x140] sm:$0xff]
      %v3664 = vld [vmem:[#allocation4 + $0x148] sm:$0xff]
      %v3665 = vld [vmem:[#allocation4 + $0x150] sm:$0xff]
      %v3666 = vld [vmem:[#allocation4 + $0x158] sm:$0xff]
      %v3667 = vld [vmem:[#allocation4 + $0x160] sm:$0xff]
      %v3668 = vld [vmem:[#allocation4 + $0x168] sm:$0xff]
      %v3669 = vld [vmem:[#allocation4 + $0x170] sm:$0xff]
      %v3670 = vld [vmem:[#allocation4 + $0x178] sm:$0xff]
      %v3671 = vld [vmem:[#allocation4 + $0x180] sm:$0xff]
      %v3672 = vld [vmem:[#allocation4 + $0x188] sm:$0xff]
      %v3673 = vld [vmem:[#allocation4 + $0x190] sm:$0xff]
      %v3674 = vld [vmem:[#allocation4 + $0x198] sm:$0xff]
      %v3675 = vld [vmem:[#allocation4 + $0x1a0] sm:$0xff]
      %v3676 = vld [vmem:[#allocation4 + $0x1a8] sm:$0xff]
      %v3677 = vld [vmem:[#allocation4 + $0x1b0] sm:$0xff]
      %v3678 = vld [vmem:[#allocation4 + $0x1b8] sm:$0xff]
      %v3679 = vld [vmem:[#allocation4 + $0x1c0] sm:$0xff]
      %v3680 = vld [vmem:[#allocation4 + $0x1c8] sm:$0xff]
      %v3681 = vld [vmem:[#allocation4 + $0x1d0] sm:$0xff]
      %v3682 = vld [vmem:[#allocation4 + $0x1d8] sm:$0xff]
      %v3683 = vld [vmem:[#allocation4 + $0x1e0] sm:$0xff]
      %v3684 = vld [vmem:[#allocation4 + $0x1e8] sm:$0xff]
      %v3685 = vld [vmem:[#allocation4 + $0x1f0] sm:$0xff]
      %v3686 = vld [vmem:[#allocation4 + $0x1f8] sm:$0xff]
      %3687 = vst.msk [vmem:[%s5] sm:$0xff] %vm289, %v3623
      %3688 = vst.msk [vmem:[%s5 + $0x8] sm:$0xff] %vm289, %v3624
      %3689 = vst.msk [vmem:[%s5 + $0x10] sm:$0xff] %vm289, %v3625
      %3690 = vst.msk [vmem:[%s5 + $0x18] sm:$0xff] %vm289, %v3626
      %3691 = vst.msk [vmem:[%s5 + $0x20] sm:$0xff] %vm289, %v3627
      %3692 = vst.msk [vmem:[%s5 + $0x28] sm:$0xff] %vm289, %v3628
      %3693 = vst.msk [vmem:[%s5 + $0x30] sm:$0xff] %vm289, %v3629
      %3694 = vst.msk [vmem:[%s5 + $0x38] sm:$0xff] %vm289, %v3630
      %3695 = vst.msk [vmem:[%s5 + $0x40] sm:$0xff] %vm289, %v3631
      %3696 = vst.msk [vmem:[%s5 + $0x48] sm:$0xff] %vm289, %v3632
      %3697 = vst.msk [vmem:[%s5 + $0x50] sm:$0xff] %vm289, %v3633
      %3698 = vst.msk [vmem:[%s5 + $0x58] sm:$0xff] %vm289, %v3634
      %3699 = vst.msk [vmem:[%s5 + $0x60] sm:$0xff] %vm289, %v3635
      %3700 = vst.msk [vmem:[%s5 + $0x68] sm:$0xff] %vm289, %v3636
      %3701 = vst.msk [vmem:[%s5 + $0x70] sm:$0xff] %vm289, %v3637
      %3702 = vst.msk [vmem:[%s5 + $0x78] sm:$0xff] %vm289, %v3638
      %3703 = vst.msk [vmem:[%s5 + $0x80] sm:$0xff] %vm289, %v3639
      %3704 = vst.msk [vmem:[%s5 + $0x88] sm:$0xff] %vm289, %v3640
      %3705 = vst.msk [vmem:[%s5 + $0x90] sm:$0xff] %vm289, %v3641
      %3706 = vst.msk [vmem:[%s5 + $0x98] sm:$0xff] %vm289, %v3642
      %3707 = vst.msk [vmem:[%s5 + $0xa0] sm:$0xff] %vm289, %v3643
      %3708 = vst.msk [vmem:[%s5 + $0xa8] sm:$0xff] %vm289, %v3644
      %3709 = vst.msk [vmem:[%s5 + $0xb0] sm:$0xff] %vm289, %v3645
      %3710 = vst.msk [vmem:[%s5 + $0xb8] sm:$0xff] %vm289, %v3646
      %3711 = vst.msk [vmem:[%s5 + $0xc0] sm:$0xff] %vm289, %v3647
      %3712 = vst.msk [vmem:[%s5 + $0xc8] sm:$0xff] %vm289, %v3648
      %3713 = vst.msk [vmem:[%s5 + $0xd0] sm:$0xff] %vm289, %v3649
      %3714 = vst.msk [vmem:[%s5 + $0xd8] sm:$0xff] %vm289, %v3650
      %3715 = vst.msk [vmem:[%s5 + $0xe0] sm:$0xff] %vm289, %v3651
      %3716 = vst.msk [vmem:[%s5 + $0xe8] sm:$0xff] %vm289, %v3652
      %3717 = vst.msk [vmem:[%s5 + $0xf0] sm:$0xff] %vm289, %v3653
      %3718 = vst.msk [vmem:[%s5 + $0xf8] sm:$0xff] %vm289, %v3654
      %3719 = vst.msk [vmem:[%s5 + $0x100] sm:$0xff] %vm289, %v3655
      %3720 = vst.msk [vmem:[%s5 + $0x108] sm:$0xff] %vm289, %v3656
      %3721 = vst.msk [vmem:[%s5 + $0x110] sm:$0xff] %vm289, %v3657
      %3722 = vst.msk [vmem:[%s5 + $0x118] sm:$0xff] %vm289, %v3658
      %3723 = vst.msk [vmem:[%s5 + $0x120] sm:$0xff] %vm289, %v3659
      %3724 = vst.msk [vmem:[%s5 + $0x128] sm:$0xff] %vm289, %v3660
      %3725 = vst.msk [vmem:[%s5 + $0x130] sm:$0xff] %vm289, %v3661
      %3726 = vst.msk [vmem:[%s5 + $0x138] sm:$0xff] %vm289, %v3662
      %3727 = vst.msk [vmem:[%s5 + $0x140] sm:$0xff] %vm289, %v3663
      %3728 = vst.msk [vmem:[%s5 + $0x148] sm:$0xff] %vm289, %v3664
      %3729 = vst.msk [vmem:[%s5 + $0x150] sm:$0xff] %vm289, %v3665
      %3730 = vst.msk [vmem:[%s5 + $0x158] sm:$0xff] %vm289, %v3666
      %3731 = vst.msk [vmem:[%s5 + $0x160] sm:$0xff] %vm289, %v3667
      %3732 = vst.msk [vmem:[%s5 + $0x168] sm:$0xff] %vm289, %v3668
      %3733 = vst.msk [vmem:[%s5 + $0x170] sm:$0xff] %vm289, %v3669
      %3734 = vst.msk [vmem:[%s5 + $0x178] sm:$0xff] %vm289, %v3670
      %3735 = vst.msk [vmem:[%s5 + $0x180] sm:$0xff] %vm289, %v3671
      %3736 = vst.msk [vmem:[%s5 + $0x188] sm:$0xff] %vm289, %v3672
      %3737 = vst.msk [vmem:[%s5 + $0x190] sm:$0xff] %vm289, %v3673
      %3738 = vst.msk [vmem:[%s5 + $0x198] sm:$0xff] %vm289, %v3674
      %3739 = vst.msk [vmem:[%s5 + $0x1a0] sm:$0xff] %vm289, %v3675
      %3740 = vst.msk [vmem:[%s5 + $0x1a8] sm:$0xff] %vm289, %v3676
      %3741 = vst.msk [vmem:[%s5 + $0x1b0] sm:$0xff] %vm289, %v3677
      %3742 = vst.msk [vmem:[%s5 + $0x1b8] sm:$0xff] %vm289, %v3678
      %3743 = vst.msk [vmem:[%s5 + $0x1c0] sm:$0xff] %vm289, %v3679
      %3744 = vst.msk [vmem:[%s5 + $0x1c8] sm:$0xff] %vm289, %v3680
      %3745 = vst.msk [vmem:[%s5 + $0x1d0] sm:$0xff] %vm289, %v3681
      %3746 = vst.msk [vmem:[%s5 + $0x1d8] sm:$0xff] %vm289, %v3682
      %3747 = vst.msk [vmem:[%s5 + $0x1e0] sm:$0xff] %vm289, %v3683
      %3748 = vst.msk [vmem:[%s5 + $0x1e8] sm:$0xff] %vm289, %v3684
      %3749 = vst.msk [vmem:[%s5 + $0x1f0] sm:$0xff] %vm289, %v3685
      %3750 = vst.msk [vmem:[%s5 + $0x1f8] sm:$0xff] %vm289, %v3686
      %v3751 = vld [vmem:[#allocation3] sm:$0xff]
      %v3752 = vld [vmem:[#allocation3 + $0x8] sm:$0xff]
      %v3753 = vld [vmem:[#allocation3 + $0x10] sm:$0xff]
      %v3754 = vld [vmem:[#allocation3 + $0x18] sm:$0xff]
      %v3755 = vld [vmem:[#allocation3 + $0x20] sm:$0xff]
      %v3756 = vld [vmem:[#allocation3 + $0x28] sm:$0xff]
      %v3757 = vld [vmem:[#allocation3 + $0x30] sm:$0xff]
      %v3758 = vld [vmem:[#allocation3 + $0x38] sm:$0xff]
      %v3759 = vld [vmem:[#allocation3 + $0x40] sm:$0xff]
      %v3760 = vld [vmem:[#allocation3 + $0x48] sm:$0xff]
      %v3761 = vld [vmem:[#allocation3 + $0x50] sm:$0xff]
      %v3762 = vld [vmem:[#allocation3 + $0x58] sm:$0xff]
      %v3763 = vld [vmem:[#allocation3 + $0x60] sm:$0xff]
      %v3764 = vld [vmem:[#allocation3 + $0x68] sm:$0xff]
      %v3765 = vld [vmem:[#allocation3 + $0x70] sm:$0xff]
      %v3766 = vld [vmem:[#allocation3 + $0x78] sm:$0xff]
      %v3767 = vld [vmem:[#allocation3 + $0x80] sm:$0xff]
      %v3768 = vld [vmem:[#allocation3 + $0x88] sm:$0xff]
      %v3769 = vld [vmem:[#allocation3 + $0x90] sm:$0xff]
      %v3770 = vld [vmem:[#allocation3 + $0x98] sm:$0xff]
      %v3771 = vld [vmem:[#allocation3 + $0xa0] sm:$0xff]
      %v3772 = vld [vmem:[#allocation3 + $0xa8] sm:$0xff]
      %v3773 = vld [vmem:[#allocation3 + $0xb0] sm:$0xff]
      %v3774 = vld [vmem:[#allocation3 + $0xb8] sm:$0xff]
      %v3775 = vld [vmem:[#allocation3 + $0xc0] sm:$0xff]
      %v3776 = vld [vmem:[#allocation3 + $0xc8] sm:$0xff]
      %v3777 = vld [vmem:[#allocation3 + $0xd0] sm:$0xff]
      %v3778 = vld [vmem:[#allocation3 + $0xd8] sm:$0xff]
      %v3779 = vld [vmem:[#allocation3 + $0xe0] sm:$0xff]
      %v3780 = vld [vmem:[#allocation3 + $0xe8] sm:$0xff]
      %v3781 = vld [vmem:[#allocation3 + $0xf0] sm:$0xff]
      %v3782 = vld [vmem:[#allocation3 + $0xf8] sm:$0xff]
      %v3783 = vld [vmem:[#allocation3 + $0x100] sm:$0xff]
      %v3784 = vld [vmem:[#allocation3 + $0x108] sm:$0xff]
      %v3785 = vld [vmem:[#allocation3 + $0x110] sm:$0xff]
      %v3786 = vld [vmem:[#allocation3 + $0x118] sm:$0xff]
      %v3787 = vld [vmem:[#allocation3 + $0x120] sm:$0xff]
      %v3788 = vld [vmem:[#allocation3 + $0x128] sm:$0xff]
      %v3789 = vld [vmem:[#allocation3 + $0x130] sm:$0xff]
      %v3790 = vld [vmem:[#allocation3 + $0x138] sm:$0xff]
      %v3791 = vld [vmem:[#allocation3 + $0x140] sm:$0xff]
      %v3792 = vld [vmem:[#allocation3 + $0x148] sm:$0xff]
      %v3793 = vld [vmem:[#allocation3 + $0x150] sm:$0xff]
      %v3794 = vld [vmem:[#allocation3 + $0x158] sm:$0xff]
      %v3795 = vld [vmem:[#allocation3 + $0x160] sm:$0xff]
      %v3796 = vld [vmem:[#allocation3 + $0x168] sm:$0xff]
      %v3797 = vld [vmem:[#allocation3 + $0x170] sm:$0xff]
      %v3798 = vld [vmem:[#allocation3 + $0x178] sm:$0xff]
      %v3799 = vld [vmem:[#allocation3 + $0x180] sm:$0xff]
      %v3800 = vld [vmem:[#allocation3 + $0x188] sm:$0xff]
      %v3801 = vld [vmem:[#allocation3 + $0x190] sm:$0xff]
      %v3802 = vld [vmem:[#allocation3 + $0x198] sm:$0xff]
      %v3803 = vld [vmem:[#allocation3 + $0x1a0] sm:$0xff]
      %v3804 = vld [vmem:[#allocation3 + $0x1a8] sm:$0xff]
      %v3805 = vld [vmem:[#allocation3 + $0x1b0] sm:$0xff]
      %v3806 = vld [vmem:[#allocation3 + $0x1b8] sm:$0xff]
      %v3807 = vld [vmem:[#allocation3 + $0x1c0] sm:$0xff]
      %v3808 = vld [vmem:[#allocation3 + $0x1c8] sm:$0xff]
      %v3809 = vld [vmem:[#allocation3 + $0x1d0] sm:$0xff]
      %v3810 = vld [vmem:[#allocation3 + $0x1d8] sm:$0xff]
      %v3811 = vld [vmem:[#allocation3 + $0x1e0] sm:$0xff]
      %v3812 = vld [vmem:[#allocation3 + $0x1e8] sm:$0xff]
      %v3813 = vld [vmem:[#allocation3 + $0x1f0] sm:$0xff]
      %v3814 = vld [vmem:[#allocation3 + $0x1f8] sm:$0xff]
      %3815 = vst.msk [vmem:[%s6] sm:$0xff] %vm2851, %v3751
      %3816 = vst.msk [vmem:[%s6 + $0x8] sm:$0xff] %vm2851, %v3752
      %3817 = vst.msk [vmem:[%s6 + $0x10] sm:$0xff] %vm2851, %v3753
      %3818 = vst.msk [vmem:[%s6 + $0x18] sm:$0xff] %vm2851, %v3754
      %3819 = vst.msk [vmem:[%s6 + $0x20] sm:$0xff] %vm2851, %v3755
      %3820 = vst.msk [vmem:[%s6 + $0x28] sm:$0xff] %vm2851, %v3756
      %3821 = vst.msk [vmem:[%s6 + $0x30] sm:$0xff] %vm2851, %v3757
      %3822 = vst.msk [vmem:[%s6 + $0x38] sm:$0xff] %vm2851, %v3758
      %3823 = vst.msk [vmem:[%s6 + $0x40] sm:$0xff] %vm2851, %v3759
      %3824 = vst.msk [vmem:[%s6 + $0x48] sm:$0xff] %vm2851, %v3760
      %3825 = vst.msk [vmem:[%s6 + $0x50] sm:$0xff] %vm2851, %v3761
      %3826 = vst.msk [vmem:[%s6 + $0x58] sm:$0xff] %vm2851, %v3762
      %3827 = vst.msk [vmem:[%s6 + $0x60] sm:$0xff] %vm2851, %v3763
      %3828 = vst.msk [vmem:[%s6 + $0x68] sm:$0xff] %vm2851, %v3764
      %3829 = vst.msk [vmem:[%s6 + $0x70] sm:$0xff] %vm2851, %v3765
      %3830 = vst.msk [vmem:[%s6 + $0x78] sm:$0xff] %vm2851, %v3766
      %3831 = vst.msk [vmem:[%s6 + $0x80] sm:$0xff] %vm2851, %v3767
      %3832 = vst.msk [vmem:[%s6 + $0x88] sm:$0xff] %vm2851, %v3768
      %3833 = vst.msk [vmem:[%s6 + $0x90] sm:$0xff] %vm2851, %v3769
      %3834 = vst.msk [vmem:[%s6 + $0x98] sm:$0xff] %vm2851, %v3770
      %3835 = vst.msk [vmem:[%s6 + $0xa0] sm:$0xff] %vm2851, %v3771
      %3836 = vst.msk [vmem:[%s6 + $0xa8] sm:$0xff] %vm2851, %v3772
      %3837 = vst.msk [vmem:[%s6 + $0xb0] sm:$0xff] %vm2851, %v3773
      %3838 = vst.msk [vmem:[%s6 + $0xb8] sm:$0xff] %vm2851, %v3774
      %3839 = vst.msk [vmem:[%s6 + $0xc0] sm:$0xff] %vm2851, %v3775
      %3840 = vst.msk [vmem:[%s6 + $0xc8] sm:$0xff] %vm2851, %v3776
      %3841 = vst.msk [vmem:[%s6 + $0xd0] sm:$0xff] %vm2851, %v3777
      %3842 = vst.msk [vmem:[%s6 + $0xd8] sm:$0xff] %vm2851, %v3778
      %3843 = vst.msk [vmem:[%s6 + $0xe0] sm:$0xff] %vm2851, %v3779
      %3844 = vst.msk [vmem:[%s6 + $0xe8] sm:$0xff] %vm2851, %v3780
      %3845 = vst.msk [vmem:[%s6 + $0xf0] sm:$0xff] %vm2851, %v3781
      %3846 = vst.msk [vmem:[%s6 + $0xf8] sm:$0xff] %vm2851, %v3782
      %3847 = vst.msk [vmem:[%s6 + $0x100] sm:$0xff] %vm2851, %v3783
      %3848 = vst.msk [vmem:[%s6 + $0x108] sm:$0xff] %vm2851, %v3784
      %3849 = vst.msk [vmem:[%s6 + $0x110] sm:$0xff] %vm2851, %v3785
      %3850 = vst.msk [vmem:[%s6 + $0x118] sm:$0xff] %vm2851, %v3786
      %3851 = vst.msk [vmem:[%s6 + $0x120] sm:$0xff] %vm2851, %v3787
      %3852 = vst.msk [vmem:[%s6 + $0x128] sm:$0xff] %vm2851, %v3788
      %3853 = vst.msk [vmem:[%s6 + $0x130] sm:$0xff] %vm2851, %v3789
      %3854 = vst.msk [vmem:[%s6 + $0x138] sm:$0xff] %vm2851, %v3790
      %3855 = vst.msk [vmem:[%s6 + $0x140] sm:$0xff] %vm2851, %v3791
      %3856 = vst.msk [vmem:[%s6 + $0x148] sm:$0xff] %vm2851, %v3792
      %3857 = vst.msk [vmem:[%s6 + $0x150] sm:$0xff] %vm2851, %v3793
      %3858 = vst.msk [vmem:[%s6 + $0x158] sm:$0xff] %vm2851, %v3794
      %3859 = vst.msk [vmem:[%s6 + $0x160] sm:$0xff] %vm2851, %v3795
      %3860 = vst.msk [vmem:[%s6 + $0x168] sm:$0xff] %vm2851, %v3796
      %3861 = vst.msk [vmem:[%s6 + $0x170] sm:$0xff] %vm2851, %v3797
      %3862 = vst.msk [vmem:[%s6 + $0x178] sm:$0xff] %vm2851, %v3798
      %3863 = vst.msk [vmem:[%s6 + $0x180] sm:$0xff] %vm2851, %v3799
      %3864 = vst.msk [vmem:[%s6 + $0x188] sm:$0xff] %vm2851, %v3800
      %3865 = vst.msk [vmem:[%s6 + $0x190] sm:$0xff] %vm2851, %v3801
      %3866 = vst.msk [vmem:[%s6 + $0x198] sm:$0xff] %vm2851, %v3802
      %3867 = vst.msk [vmem:[%s6 + $0x1a0] sm:$0xff] %vm2851, %v3803
      %3868 = vst.msk [vmem:[%s6 + $0x1a8] sm:$0xff] %vm2851, %v3804
      %3869 = vst.msk [vmem:[%s6 + $0x1b0] sm:$0xff] %vm2851, %v3805
      %3870 = vst.msk [vmem:[%s6 + $0x1b8] sm:$0xff] %vm2851, %v3806
      %3871 = vst.msk [vmem:[%s6 + $0x1c0] sm:$0xff] %vm2851, %v3807
      %3872 = vst.msk [vmem:[%s6 + $0x1c8] sm:$0xff] %vm2851, %v3808
      %3873 = vst.msk [vmem:[%s6 + $0x1d0] sm:$0xff] %vm2851, %v3809
      %3874 = vst.msk [vmem:[%s6 + $0x1d8] sm:$0xff] %vm2851, %v3810
      %3875 = vst.msk [vmem:[%s6 + $0x1e0] sm:$0xff] %vm2851, %v3811
      %3876 = vst.msk [vmem:[%s6 + $0x1e8] sm:$0xff] %vm2851, %v3812
      %3877 = vst.msk [vmem:[%s6 + $0x1f0] sm:$0xff] %vm2851, %v3813
      %3878 = vst.msk [vmem:[%s6 + $0x1f8] sm:$0xff] %vm2851, %v3814
      %s3879 = smul.u32 0, 512
      %v3880 = vlaneseq
      %v3881 = vshrl.u32 %v3880, 7
      %v3882 = vadd.s32 %v3881, 8
      %v3883 = vadd.s32 %v3881, 16
      %v3884 = vadd.s32 %v3881, 24
      %v3885 = vadd.s32 %v3881, 32
      %v3886 = vadd.s32 %v3881, 40
      %v3887 = vadd.s32 %v3881, 48
      %v3888 = vadd.s32 %v3881, 56
      %v3889 = vadd.s32 %v3881, 64
      %v3890 = vadd.s32 %v3881, 72
      %v3891 = vadd.s32 %v3881, 80
      %v3892 = vadd.s32 %v3881, 88
      %v3893 = vadd.s32 %v3881, 96
      %v3894 = vadd.s32 %v3881, 104
      %v3895 = vadd.s32 %v3881, 112
      %v3896 = vadd.s32 %v3881, 120
      %v3897 = vadd.s32 %v3881, 128
      %v3898 = vadd.s32 %v3881, 136
      %v3899 = vadd.s32 %v3881, 144
      %v3900 = vadd.s32 %v3881, 152
      %v3901 = vadd.s32 %v3881, 160
      %v3902 = vadd.s32 %v3881, 168
      %v3903 = vadd.s32 %v3881, 176
      %v3904 = vadd.s32 %v3881, 184
      %v3905 = vadd.s32 %v3881, 192
      %v3906 = vadd.s32 %v3881, 200
      %v3907 = vadd.s32 %v3881, 208
      %v3908 = vadd.s32 %v3881, 216
      %v3909 = vadd.s32 %v3881, 224
      %v3910 = vadd.s32 %v3881, 232
      %v3911 = vadd.s32 %v3881, 240
      %v3912 = vadd.s32 %v3881, 248
      %v3913 = vadd.s32 %v3881, 256
      %v3914 = vadd.s32 %v3881, 264
      %v3915 = vadd.s32 %v3881, 272
      %v3916 = vadd.s32 %v3881, 280
      %v3917 = vadd.s32 %v3881, 288
      %v3918 = vadd.s32 %v3881, 296
      %v3919 = vadd.s32 %v3881, 304
      %v3920 = vadd.s32 %v3881, 312
      %v3921 = vadd.s32 %v3881, 320
      %v3922 = vadd.s32 %v3881, 328
      %v3923 = vadd.s32 %v3881, 336
      %v3924 = vadd.s32 %v3881, 344
      %v3925 = vadd.s32 %v3881, 352
      %v3926 = vadd.s32 %v3881, 360
      %v3927 = vadd.s32 %v3881, 368
      %v3928 = vadd.s32 %v3881, 376
      %v3929 = vadd.s32 %v3881, 384
      %v3930 = vadd.s32 %v3881, 392
      %v3931 = vadd.s32 %v3881, 400
      %v3932 = vadd.s32 %v3881, 408
      %v3933 = vadd.s32 %v3881, 416
      %v3934 = vadd.s32 %v3881, 424
      %v3935 = vadd.s32 %v3881, 432
      %v3936 = vadd.s32 %v3881, 440
      %v3937 = vadd.s32 %v3881, 448
      %v3938 = vadd.s32 %v3881, 456
      %v3939 = vadd.s32 %v3881, 464
      %v3940 = vadd.s32 %v3881, 472
      %v3941 = vadd.s32 %v3881, 480
      %v3942 = vadd.s32 %v3881, 488
      %v3943 = vadd.s32 %v3881, 496
      %v3944 = vadd.s32 %v3881, 504
      %v3945 = vstv %s3879
      %v3946 = vadd.s32 %v3945, %v3881
      %v3947 = vadd.s32 %v3945, %v3882
      %v3948 = vadd.s32 %v3945, %v3883
      %v3949 = vadd.s32 %v3945, %v3884
      %v3950 = vadd.s32 %v3945, %v3885
      %v3951 = vadd.s32 %v3945, %v3886
      %v3952 = vadd.s32 %v3945, %v3887
      %v3953 = vadd.s32 %v3945, %v3888
      %v3954 = vadd.s32 %v3945, %v3889
      %v3955 = vadd.s32 %v3945, %v3890
      %v3956 = vadd.s32 %v3945, %v3891
      %v3957 = vadd.s32 %v3945, %v3892
      %v3958 = vadd.s32 %v3945, %v3893
      %v3959 = vadd.s32 %v3945, %v3894
      %v3960 = vadd.s32 %v3945, %v3895
      %v3961 = vadd.s32 %v3945, %v3896
      %v3962 = vadd.s32 %v3945, %v3897
      %v3963 = vadd.s32 %v3945, %v3898
      %v3964 = vadd.s32 %v3945, %v3899
      %v3965 = vadd.s32 %v3945, %v3900
      %v3966 = vadd.s32 %v3945, %v3901
      %v3967 = vadd.s32 %v3945, %v3902
      %v3968 = vadd.s32 %v3945, %v3903
      %v3969 = vadd.s32 %v3945, %v3904
      %v3970 = vadd.s32 %v3945, %v3905
      %v3971 = vadd.s32 %v3945, %v3906
      %v3972 = vadd.s32 %v3945, %v3907
      %v3973 = vadd.s32 %v3945, %v3908
      %v3974 = vadd.s32 %v3945, %v3909
      %v3975 = vadd.s32 %v3945, %v3910
      %v3976 = vadd.s32 %v3945, %v3911
      %v3977 = vadd.s32 %v3945, %v3912
      %v3978 = vadd.s32 %v3945, %v3913
      %v3979 = vadd.s32 %v3945, %v3914
      %v3980 = vadd.s32 %v3945, %v3915
      %v3981 = vadd.s32 %v3945, %v3916
      %v3982 = vadd.s32 %v3945, %v3917
      %v3983 = vadd.s32 %v3945, %v3918
      %v3984 = vadd.s32 %v3945, %v3919
      %v3985 = vadd.s32 %v3945, %v3920
      %v3986 = vadd.s32 %v3945, %v3921
      %v3987 = vadd.s32 %v3945, %v3922
      %v3988 = vadd.s32 %v3945, %v3923
      %v3989 = vadd.s32 %v3945, %v3924
      %v3990 = vadd.s32 %v3945, %v3925
      %v3991 = vadd.s32 %v3945, %v3926
      %v3992 = vadd.s32 %v3945, %v3927
      %v3993 = vadd.s32 %v3945, %v3928
      %v3994 = vadd.s32 %v3945, %v3929
      %v3995 = vadd.s32 %v3945, %v3930
      %v3996 = vadd.s32 %v3945, %v3931
      %v3997 = vadd.s32 %v3945, %v3932
      %v3998 = vadd.s32 %v3945, %v3933
      %v3999 = vadd.s32 %v3945, %v3934
      %v4000 = vadd.s32 %v3945, %v3935
      %v4001 = vadd.s32 %v3945, %v3936
      %v4002 = vadd.s32 %v3945, %v3937
      %v4003 = vadd.s32 %v3945, %v3938
      %v4004 = vadd.s32 %v3945, %v3939
      %v4005 = vadd.s32 %v3945, %v3940
      %v4006 = vadd.s32 %v3945, %v3941
      %v4007 = vadd.s32 %v3945, %v3942
      %v4008 = vadd.s32 %v3945, %v3943
      %v4009 = vadd.s32 %v3945, %v3944
      %vm4010 = vcmp.lt.s32.totalorder %v3946, 512
      %vm4011 = vcmp.lt.s32.totalorder %v3947, 512
      %vm4012 = vcmp.lt.s32.totalorder %v3948, 512
      %vm4013 = vcmp.lt.s32.totalorder %v3949, 512
      %vm4014 = vcmp.lt.s32.totalorder %v3950, 512
      %vm4015 = vcmp.lt.s32.totalorder %v3951, 512
      %vm4016 = vcmp.lt.s32.totalorder %v3952, 512
      %vm4017 = vcmp.lt.s32.totalorder %v3953, 512
      %vm4018 = vcmp.lt.s32.totalorder %v3954, 512
      %vm4019 = vcmp.lt.s32.totalorder %v3955, 512
      %vm4020 = vcmp.lt.s32.totalorder %v3956, 512
      %vm4021 = vcmp.lt.s32.totalorder %v3957, 512
      %vm4022 = vcmp.lt.s32.totalorder %v3958, 512
      %vm4023 = vcmp.lt.s32.totalorder %v3959, 512
      %vm4024 = vcmp.lt.s32.totalorder %v3960, 512
      %vm4025 = vcmp.lt.s32.totalorder %v3961, 512
      %vm4026 = vcmp.lt.s32.totalorder %v3962, 512
      %vm4027 = vcmp.lt.s32.totalorder %v3963, 512
      %vm4028 = vcmp.lt.s32.totalorder %v3964, 512
      %vm4029 = vcmp.lt.s32.totalorder %v3965, 512
      %vm4030 = vcmp.lt.s32.totalorder %v3966, 512
      %vm4031 = vcmp.lt.s32.totalorder %v3967, 512
      %vm4032 = vcmp.lt.s32.totalorder %v3968, 512
      %vm4033 = vcmp.lt.s32.totalorder %v3969, 512
      %vm4034 = vcmp.lt.s32.totalorder %v3970, 512
      %vm4035 = vcmp.lt.s32.totalorder %v3971, 512
      %vm4036 = vcmp.lt.s32.totalorder %v3972, 512
      %vm4037 = vcmp.lt.s32.totalorder %v3973, 512
      %vm4038 = vcmp.lt.s32.totalorder %v3974, 512
      %vm4039 = vcmp.lt.s32.totalorder %v3975, 512
      %vm4040 = vcmp.lt.s32.totalorder %v3976, 512
      %vm4041 = vcmp.lt.s32.totalorder %v3977, 512
      %vm4042 = vcmp.lt.s32.totalorder %v3978, 512
      %vm4043 = vcmp.lt.s32.totalorder %v3979, 512
      %vm4044 = vcmp.lt.s32.totalorder %v3980, 512
      %vm4045 = vcmp.lt.s32.totalorder %v3981, 512
      %vm4046 = vcmp.lt.s32.totalorder %v3982, 512
      %vm4047 = vcmp.lt.s32.totalorder %v3983, 512
      %vm4048 = vcmp.lt.s32.totalorder %v3984, 512
      %vm4049 = vcmp.lt.s32.totalorder %v3985, 512
      %vm4050 = vcmp.lt.s32.totalorder %v3986, 512
      %vm4051 = vcmp.lt.s32.totalorder %v3987, 512
      %vm4052 = vcmp.lt.s32.totalorder %v3988, 512
      %vm4053 = vcmp.lt.s32.totalorder %v3989, 512
      %vm4054 = vcmp.lt.s32.totalorder %v3990, 512
      %vm4055 = vcmp.lt.s32.totalorder %v3991, 512
      %vm4056 = vcmp.lt.s32.totalorder %v3992, 512
      %vm4057 = vcmp.lt.s32.totalorder %v3993, 512
      %vm4058 = vcmp.lt.s32.totalorder %v3994, 512
      %vm4059 = vcmp.lt.s32.totalorder %v3995, 512
      %vm4060 = vcmp.lt.s32.totalorder %v3996, 512
      %vm4061 = vcmp.lt.s32.totalorder %v3997, 512
      %vm4062 = vcmp.lt.s32.totalorder %v3998, 512
      %vm4063 = vcmp.lt.s32.totalorder %v3999, 512
      %vm4064 = vcmp.lt.s32.totalorder %v4000, 512
      %vm4065 = vcmp.lt.s32.totalorder %v4001, 512
      %vm4066 = vcmp.lt.s32.totalorder %v4002, 512
      %vm4067 = vcmp.lt.s32.totalorder %v4003, 512
      %vm4068 = vcmp.lt.s32.totalorder %v4004, 512
      %vm4069 = vcmp.lt.s32.totalorder %v4005, 512
      %vm4070 = vcmp.lt.s32.totalorder %v4006, 512
      %vm4071 = vcmp.lt.s32.totalorder %v4007, 512
      %vm4072 = vcmp.lt.s32.totalorder %v4008, 512
      %vm4073 = vcmp.lt.s32.totalorder %v4009, 512
      %v4074 = vsel %vm4010, 1, 0
      %v4075 = vsel %vm4011, 1, 0
      %v4076 = vsel %vm4012, 1, 0
      %v4077 = vsel %vm4013, 1, 0
      %v4078 = vsel %vm4014, 1, 0
      %v4079 = vsel %vm4015, 1, 0
      %v4080 = vsel %vm4016, 1, 0
      %v4081 = vsel %vm4017, 1, 0
      %v4082 = vsel %vm4018, 1, 0
      %v4083 = vsel %vm4019, 1, 0
      %v4084 = vsel %vm4020, 1, 0
      %v4085 = vsel %vm4021, 1, 0
      %v4086 = vsel %vm4022, 1, 0
      %v4087 = vsel %vm4023, 1, 0
      %v4088 = vsel %vm4024, 1, 0
      %v4089 = vsel %vm4025, 1, 0
      %v4090 = vsel %vm4026, 1, 0
      %v4091 = vsel %vm4027, 1, 0
      %v4092 = vsel %vm4028, 1, 0
      %v4093 = vsel %vm4029, 1, 0
      %v4094 = vsel %vm4030, 1, 0
      %v4095 = vsel %vm4031, 1, 0
      %v4096 = vsel %vm4032, 1, 0
      %v4097 = vsel %vm4033, 1, 0
      %v4098 = vsel %vm4034, 1, 0
      %v4099 = vsel %vm4035, 1, 0
      %v4100 = vsel %vm4036, 1, 0
      %v4101 = vsel %vm4037, 1, 0
      %v4102 = vsel %vm4038, 1, 0
      %v4103 = vsel %vm4039, 1, 0
      %v4104 = vsel %vm4040, 1, 0
      %v4105 = vsel %vm4041, 1, 0
      %v4106 = vsel %vm4042, 1, 0
      %v4107 = vsel %vm4043, 1, 0
      %v4108 = vsel %vm4044, 1, 0
      %v4109 = vsel %vm4045, 1, 0
      %v4110 = vsel %vm4046, 1, 0
      %v4111 = vsel %vm4047, 1, 0
      %v4112 = vsel %vm4048, 1, 0
      %v4113 = vsel %vm4049, 1, 0
      %v4114 = vsel %vm4050, 1, 0
      %v4115 = vsel %vm4051, 1, 0
      %v4116 = vsel %vm4052, 1, 0
      %v4117 = vsel %vm4053, 1, 0
      %v4118 = vsel %vm4054, 1, 0
      %v4119 = vsel %vm4055, 1, 0
      %v4120 = vsel %vm4056, 1, 0
      %v4121 = vsel %vm4057, 1, 0
      %v4122 = vsel %vm4058, 1, 0
      %v4123 = vsel %vm4059, 1, 0
      %v4124 = vsel %vm4060, 1, 0
      %v4125 = vsel %vm4061, 1, 0
      %v4126 = vsel %vm4062, 1, 0
      %v4127 = vsel %vm4063, 1, 0
      %v4128 = vsel %vm4064, 1, 0
      %v4129 = vsel %vm4065, 1, 0
      %v4130 = vsel %vm4066, 1, 0
      %v4131 = vsel %vm4067, 1, 0
      %v4132 = vsel %vm4068, 1, 0
      %v4133 = vsel %vm4069, 1, 0
      %v4134 = vsel %vm4070, 1, 0
      %v4135 = vsel %vm4071, 1, 0
      %v4136 = vsel %vm4072, 1, 0
      %v4137 = vsel %vm4073, 1, 0
      %v4138 = vcvt.s32.f32 %v4074
      %v4139 = vcvt.s32.f32 %v4075
      %v4140 = vcvt.s32.f32 %v4076
      %v4141 = vcvt.s32.f32 %v4077
      %v4142 = vcvt.s32.f32 %v4078
      %v4143 = vcvt.s32.f32 %v4079
      %v4144 = vcvt.s32.f32 %v4080
      %v4145 = vcvt.s32.f32 %v4081
      %v4146 = vcvt.s32.f32 %v4082
      %v4147 = vcvt.s32.f32 %v4083
      %v4148 = vcvt.s32.f32 %v4084
      %v4149 = vcvt.s32.f32 %v4085
      %v4150 = vcvt.s32.f32 %v4086
      %v4151 = vcvt.s32.f32 %v4087
      %v4152 = vcvt.s32.f32 %v4088
      %v4153 = vcvt.s32.f32 %v4089
      %v4154 = vcvt.s32.f32 %v4090
      %v4155 = vcvt.s32.f32 %v4091
      %v4156 = vcvt.s32.f32 %v4092
      %v4157 = vcvt.s32.f32 %v4093
      %v4158 = vcvt.s32.f32 %v4094
      %v4159 = vcvt.s32.f32 %v4095
      %v4160 = vcvt.s32.f32 %v4096
      %v4161 = vcvt.s32.f32 %v4097
      %v4162 = vcvt.s32.f32 %v4098
      %v4163 = vcvt.s32.f32 %v4099
      %v4164 = vcvt.s32.f32 %v4100
      %v4165 = vcvt.s32.f32 %v4101
      %v4166 = vcvt.s32.f32 %v4102
      %v4167 = vcvt.s32.f32 %v4103
      %v4168 = vcvt.s32.f32 %v4104
      %v4169 = vcvt.s32.f32 %v4105
      %v4170 = vcvt.s32.f32 %v4106
      %v4171 = vcvt.s32.f32 %v4107
      %v4172 = vcvt.s32.f32 %v4108
      %v4173 = vcvt.s32.f32 %v4109
      %v4174 = vcvt.s32.f32 %v4110
      %v4175 = vcvt.s32.f32 %v4111
      %v4176 = vcvt.s32.f32 %v4112
      %v4177 = vcvt.s32.f32 %v4113
      %v4178 = vcvt.s32.f32 %v4114
      %v4179 = vcvt.s32.f32 %v4115
      %v4180 = vcvt.s32.f32 %v4116
      %v4181 = vcvt.s32.f32 %v4117
      %v4182 = vcvt.s32.f32 %v4118
      %v4183 = vcvt.s32.f32 %v4119
      %v4184 = vcvt.s32.f32 %v4120
      %v4185 = vcvt.s32.f32 %v4121
      %v4186 = vcvt.s32.f32 %v4122
      %v4187 = vcvt.s32.f32 %v4123
      %v4188 = vcvt.s32.f32 %v4124
      %v4189 = vcvt.s32.f32 %v4125
      %v4190 = vcvt.s32.f32 %v4126
      %v4191 = vcvt.s32.f32 %v4127
      %v4192 = vcvt.s32.f32 %v4128
      %v4193 = vcvt.s32.f32 %v4129
      %v4194 = vcvt.s32.f32 %v4130
      %v4195 = vcvt.s32.f32 %v4131
      %v4196 = vcvt.s32.f32 %v4132
      %v4197 = vcvt.s32.f32 %v4133
      %v4198 = vcvt.s32.f32 %v4134
      %v4199 = vcvt.s32.f32 %v4135
      %v4200 = vcvt.s32.f32 %v4136
      %v4201 = vcvt.s32.f32 %v4137
      %v4202 = vsub.f32 %v3623, %v222
      %v4203 = vsub.f32 %v3624, %v223
      %v4204 = vsub.f32 %v3625, %v224
      %v4205 = vsub.f32 %v3626, %v225
      %v4206 = vsub.f32 %v3627, %v226
      %v4207 = vsub.f32 %v3628, %v227
      %v4208 = vsub.f32 %v3629, %v228
      %v4209 = vsub.f32 %v3630, %v229
      %v4210 = vsub.f32 %v3631, %v230
      %v4211 = vsub.f32 %v3632, %v231
      %v4212 = vsub.f32 %v3633, %v232
      %v4213 = vsub.f32 %v3634, %v233
      %v4214 = vsub.f32 %v3635, %v234
      %v4215 = vsub.f32 %v3636, %v235
      %v4216 = vsub.f32 %v3637, %v236
      %v4217 = vsub.f32 %v3638, %v237
      %v4218 = vsub.f32 %v3639, %v238
      %v4219 = vsub.f32 %v3640, %v239
      %v4220 = vsub.f32 %v3641, %v240
      %v4221 = vsub.f32 %v3642, %v241
      %v4222 = vsub.f32 %v3643, %v242
      %v4223 = vsub.f32 %v3644, %v243
      %v4224 = vsub.f32 %v3645, %v244
      %v4225 = vsub.f32 %v3646, %v245
      %v4226 = vsub.f32 %v3647, %v246
      %v4227 = vsub.f32 %v3648, %v247
      %v4228 = vsub.f32 %v3649, %v248
      %v4229 = vsub.f32 %v3650, %v249
      %v4230 = vsub.f32 %v3651, %v250
      %v4231 = vsub.f32 %v3652, %v251
      %v4232 = vsub.f32 %v3653, %v252
      %v4233 = vsub.f32 %v3654, %v253
      %v4234 = vsub.f32 %v3655, %v254
      %v4235 = vsub.f32 %v3656, %v255
      %v4236 = vsub.f32 %v3657, %v256
      %v4237 = vsub.f32 %v3658, %v257
      %v4238 = vsub.f32 %v3659, %v258
      %v4239 = vsub.f32 %v3660, %v259
      %v4240 = vsub.f32 %v3661, %v260
      %v4241 = vsub.f32 %v3662, %v261
      %v4242 = vsub.f32 %v3663, %v262
      %v4243 = vsub.f32 %v3664, %v263
      %v4244 = vsub.f32 %v3665, %v264
      %v4245 = vsub.f32 %v3666, %v265
      %v4246 = vsub.f32 %v3667, %v266
      %v4247 = vsub.f32 %v3668, %v267
      %v4248 = vsub.f32 %v3669, %v268
      %v4249 = vsub.f32 %v3670, %v269
      %v4250 = vsub.f32 %v3671, %v270
      %v4251 = vsub.f32 %v3672, %v271
      %v4252 = vsub.f32 %v3673, %v272
      %v4253 = vsub.f32 %v3674, %v273
      %v4254 = vsub.f32 %v3675, %v274
      %v4255 = vsub.f32 %v3676, %v275
      %v4256 = vsub.f32 %v3677, %v276
      %v4257 = vsub.f32 %v3678, %v277
      %v4258 = vsub.f32 %v3679, %v278
      %v4259 = vsub.f32 %v3680, %v279
      %v4260 = vsub.f32 %v3681, %v280
      %v4261 = vsub.f32 %v3682, %v281
      %v4262 = vsub.f32 %v3683, %v282
      %v4263 = vsub.f32 %v3684, %v283
      %v4264 = vsub.f32 %v3685, %v284
      %v4265 = vsub.f32 %v3686, %v285
      %v4266 = vmul.f32 %v4202, %v4202
      %v4267 = vmul.f32 %v4203, %v4203
      %v4268 = vmul.f32 %v4204, %v4204
      %v4269 = vmul.f32 %v4205, %v4205
      %v4270 = vmul.f32 %v4206, %v4206
      %v4271 = vmul.f32 %v4207, %v4207
      %v4272 = vmul.f32 %v4208, %v4208
      %v4273 = vmul.f32 %v4209, %v4209
      %v4274 = vmul.f32 %v4210, %v4210
      %v4275 = vmul.f32 %v4211, %v4211
      %v4276 = vmul.f32 %v4212, %v4212
      %v4277 = vmul.f32 %v4213, %v4213
      %v4278 = vmul.f32 %v4214, %v4214
      %v4279 = vmul.f32 %v4215, %v4215
      %v4280 = vmul.f32 %v4216, %v4216
      %v4281 = vmul.f32 %v4217, %v4217
      %v4282 = vmul.f32 %v4218, %v4218
      %v4283 = vmul.f32 %v4219, %v4219
      %v4284 = vmul.f32 %v4220, %v4220
      %v4285 = vmul.f32 %v4221, %v4221
      %v4286 = vmul.f32 %v4222, %v4222
      %v4287 = vmul.f32 %v4223, %v4223
      %v4288 = vmul.f32 %v4224, %v4224
      %v4289 = vmul.f32 %v4225, %v4225
      %v4290 = vmul.f32 %v4226, %v4226
      %v4291 = vmul.f32 %v4227, %v4227
      %v4292 = vmul.f32 %v4228, %v4228
      %v4293 = vmul.f32 %v4229, %v4229
      %v4294 = vmul.f32 %v4230, %v4230
      %v4295 = vmul.f32 %v4231, %v4231
      %v4296 = vmul.f32 %v4232, %v4232
      %v4297 = vmul.f32 %v4233, %v4233
      %v4298 = vmul.f32 %v4234, %v4234
      %v4299 = vmul.f32 %v4235, %v4235
      %v4300 = vmul.f32 %v4236, %v4236
      %v4301 = vmul.f32 %v4237, %v4237
      %v4302 = vmul.f32 %v4238, %v4238
      %v4303 = vmul.f32 %v4239, %v4239
      %v4304 = vmul.f32 %v4240, %v4240
      %v4305 = vmul.f32 %v4241, %v4241
      %v4306 = vmul.f32 %v4242, %v4242
      %v4307 = vmul.f32 %v4243, %v4243
      %v4308 = vmul.f32 %v4244, %v4244
      %v4309 = vmul.f32 %v4245, %v4245
      %v4310 = vmul.f32 %v4246, %v4246
      %v4311 = vmul.f32 %v4247, %v4247
      %v4312 = vmul.f32 %v4248, %v4248
      %v4313 = vmul.f32 %v4249, %v4249
      %v4314 = vmul.f32 %v4250, %v4250
      %v4315 = vmul.f32 %v4251, %v4251
      %v4316 = vmul.f32 %v4252, %v4252
      %v4317 = vmul.f32 %v4253, %v4253
      %v4318 = vmul.f32 %v4254, %v4254
      %v4319 = vmul.f32 %v4255, %v4255
      %v4320 = vmul.f32 %v4256, %v4256
      %v4321 = vmul.f32 %v4257, %v4257
      %v4322 = vmul.f32 %v4258, %v4258
      %v4323 = vmul.f32 %v4259, %v4259
      %v4324 = vmul.f32 %v4260, %v4260
      %v4325 = vmul.f32 %v4261, %v4261
      %v4326 = vmul.f32 %v4262, %v4262
      %v4327 = vmul.f32 %v4263, %v4263
      %v4328 = vmul.f32 %v4264, %v4264
      %v4329 = vmul.f32 %v4265, %v4265
      %v4330 = vmul.f32 %v4266, %v4138
      %v4331 = vmul.f32 %v4267, %v4139
      %v4332 = vmul.f32 %v4268, %v4140
      %v4333 = vmul.f32 %v4269, %v4141
      %v4334 = vmul.f32 %v4270, %v4142
      %v4335 = vmul.f32 %v4271, %v4143
      %v4336 = vmul.f32 %v4272, %v4144
      %v4337 = vmul.f32 %v4273, %v4145
      %v4338 = vmul.f32 %v4274, %v4146
      %v4339 = vmul.f32 %v4275, %v4147
      %v4340 = vmul.f32 %v4276, %v4148
      %v4341 = vmul.f32 %v4277, %v4149
      %v4342 = vmul.f32 %v4278, %v4150
      %v4343 = vmul.f32 %v4279, %v4151
      %v4344 = vmul.f32 %v4280, %v4152
      %v4345 = vmul.f32 %v4281, %v4153
      %v4346 = vmul.f32 %v4282, %v4154
      %v4347 = vmul.f32 %v4283, %v4155
      %v4348 = vmul.f32 %v4284, %v4156
      %v4349 = vmul.f32 %v4285, %v4157
      %v4350 = vmul.f32 %v4286, %v4158
      %v4351 = vmul.f32 %v4287, %v4159
      %v4352 = vmul.f32 %v4288, %v4160
      %v4353 = vmul.f32 %v4289, %v4161
      %v4354 = vmul.f32 %v4290, %v4162
      %v4355 = vmul.f32 %v4291, %v4163
      %v4356 = vmul.f32 %v4292, %v4164
      %v4357 = vmul.f32 %v4293, %v4165
      %v4358 = vmul.f32 %v4294, %v4166
      %v4359 = vmul.f32 %v4295, %v4167
      %v4360 = vmul.f32 %v4296, %v4168
      %v4361 = vmul.f32 %v4297, %v4169
      %v4362 = vmul.f32 %v4298, %v4170
      %v4363 = vmul.f32 %v4299, %v4171
      %v4364 = vmul.f32 %v4300, %v4172
      %v4365 = vmul.f32 %v4301, %v4173
      %v4366 = vmul.f32 %v4302, %v4174
      %v4367 = vmul.f32 %v4303, %v4175
      %v4368 = vmul.f32 %v4304, %v4176
      %v4369 = vmul.f32 %v4305, %v4177
      %v4370 = vmul.f32 %v4306, %v4178
      %v4371 = vmul.f32 %v4307, %v4179
      %v4372 = vmul.f32 %v4308, %v4180
      %v4373 = vmul.f32 %v4309, %v4181
      %v4374 = vmul.f32 %v4310, %v4182
      %v4375 = vmul.f32 %v4311, %v4183
      %v4376 = vmul.f32 %v4312, %v4184
      %v4377 = vmul.f32 %v4313, %v4185
      %v4378 = vmul.f32 %v4314, %v4186
      %v4379 = vmul.f32 %v4315, %v4187
      %v4380 = vmul.f32 %v4316, %v4188
      %v4381 = vmul.f32 %v4317, %v4189
      %v4382 = vmul.f32 %v4318, %v4190
      %v4383 = vmul.f32 %v4319, %v4191
      %v4384 = vmul.f32 %v4320, %v4192
      %v4385 = vmul.f32 %v4321, %v4193
      %v4386 = vmul.f32 %v4322, %v4194
      %v4387 = vmul.f32 %v4323, %v4195
      %v4388 = vmul.f32 %v4324, %v4196
      %v4389 = vmul.f32 %v4325, %v4197
      %v4390 = vmul.f32 %v4326, %v4198
      %v4391 = vmul.f32 %v4327, %v4199
      %v4392 = vmul.f32 %v4328, %v4200
      %v4393 = vmul.f32 %v4329, %v4201
      %v4394 = vsel %vm289, %v4330, 0.0
      %4395 = vadd.xlane.f32.xlu0 %v4394
      %v4396 = vpop.xlane.xlu0 %4395
      %v4397 = vsel %vm289, %v4331, 0.0
      %4398 = vadd.xlane.f32.xlu0 %v4397
      %v4399 = vpop.xlane.xlu0 %4398
      %v4400 = vsel %vm289, %v4332, 0.0
      %4401 = vadd.xlane.f32.xlu0 %v4400
      %v4402 = vpop.xlane.xlu0 %4401
      %v4403 = vsel %vm289, %v4333, 0.0
      %4404 = vadd.xlane.f32.xlu0 %v4403
      %v4405 = vpop.xlane.xlu0 %4404
      %v4406 = vsel %vm289, %v4334, 0.0
      %4407 = vadd.xlane.f32.xlu0 %v4406
      %v4408 = vpop.xlane.xlu0 %4407
      %v4409 = vsel %vm289, %v4335, 0.0
      %4410 = vadd.xlane.f32.xlu0 %v4409
      %v4411 = vpop.xlane.xlu0 %4410
      %v4412 = vsel %vm289, %v4336, 0.0
      %4413 = vadd.xlane.f32.xlu0 %v4412
      %v4414 = vpop.xlane.xlu0 %4413
      %v4415 = vsel %vm289, %v4337, 0.0
      %4416 = vadd.xlane.f32.xlu0 %v4415
      %v4417 = vpop.xlane.xlu0 %4416
      %v4418 = vsel %vm289, %v4338, 0.0
      %4419 = vadd.xlane.f32.xlu0 %v4418
      %v4420 = vpop.xlane.xlu0 %4419
      %v4421 = vsel %vm289, %v4339, 0.0
      %4422 = vadd.xlane.f32.xlu0 %v4421
      %v4423 = vpop.xlane.xlu0 %4422
      %v4424 = vsel %vm289, %v4340, 0.0
      %4425 = vadd.xlane.f32.xlu0 %v4424
      %v4426 = vpop.xlane.xlu0 %4425
      %v4427 = vsel %vm289, %v4341, 0.0
      %4428 = vadd.xlane.f32.xlu0 %v4427
      %v4429 = vpop.xlane.xlu0 %4428
      %v4430 = vsel %vm289, %v4342, 0.0
      %4431 = vadd.xlane.f32.xlu0 %v4430
      %v4432 = vpop.xlane.xlu0 %4431
      %v4433 = vsel %vm289, %v4343, 0.0
      %4434 = vadd.xlane.f32.xlu0 %v4433
      %v4435 = vpop.xlane.xlu0 %4434
      %v4436 = vsel %vm289, %v4344, 0.0
      %4437 = vadd.xlane.f32.xlu0 %v4436
      %v4438 = vpop.xlane.xlu0 %4437
      %v4439 = vsel %vm289, %v4345, 0.0
      %4440 = vadd.xlane.f32.xlu0 %v4439
      %v4441 = vpop.xlane.xlu0 %4440
      %v4442 = vsel %vm289, %v4346, 0.0
      %4443 = vadd.xlane.f32.xlu0 %v4442
      %v4444 = vpop.xlane.xlu0 %4443
      %v4445 = vsel %vm289, %v4347, 0.0
      %4446 = vadd.xlane.f32.xlu0 %v4445
      %v4447 = vpop.xlane.xlu0 %4446
      %v4448 = vsel %vm289, %v4348, 0.0
      %4449 = vadd.xlane.f32.xlu0 %v4448
      %v4450 = vpop.xlane.xlu0 %4449
      %v4451 = vsel %vm289, %v4349, 0.0
      %4452 = vadd.xlane.f32.xlu0 %v4451
      %v4453 = vpop.xlane.xlu0 %4452
      %v4454 = vsel %vm289, %v4350, 0.0
      %4455 = vadd.xlane.f32.xlu0 %v4454
      %v4456 = vpop.xlane.xlu0 %4455
      %v4457 = vsel %vm289, %v4351, 0.0
      %4458 = vadd.xlane.f32.xlu0 %v4457
      %v4459 = vpop.xlane.xlu0 %4458
      %v4460 = vsel %vm289, %v4352, 0.0
      %4461 = vadd.xlane.f32.xlu0 %v4460
      %v4462 = vpop.xlane.xlu0 %4461
      %v4463 = vsel %vm289, %v4353, 0.0
      %4464 = vadd.xlane.f32.xlu0 %v4463
      %v4465 = vpop.xlane.xlu0 %4464
      %v4466 = vsel %vm289, %v4354, 0.0
      %4467 = vadd.xlane.f32.xlu0 %v4466
      %v4468 = vpop.xlane.xlu0 %4467
      %v4469 = vsel %vm289, %v4355, 0.0
      %4470 = vadd.xlane.f32.xlu0 %v4469
      %v4471 = vpop.xlane.xlu0 %4470
      %v4472 = vsel %vm289, %v4356, 0.0
      %4473 = vadd.xlane.f32.xlu0 %v4472
      %v4474 = vpop.xlane.xlu0 %4473
      %v4475 = vsel %vm289, %v4357, 0.0
      %4476 = vadd.xlane.f32.xlu0 %v4475
      %v4477 = vpop.xlane.xlu0 %4476
      %v4478 = vsel %vm289, %v4358, 0.0
      %4479 = vadd.xlane.f32.xlu0 %v4478
      %v4480 = vpop.xlane.xlu0 %4479
      %v4481 = vsel %vm289, %v4359, 0.0
      %4482 = vadd.xlane.f32.xlu0 %v4481
      %v4483 = vpop.xlane.xlu0 %4482
      %v4484 = vsel %vm289, %v4360, 0.0
      %4485 = vadd.xlane.f32.xlu0 %v4484
      %v4486 = vpop.xlane.xlu0 %4485
      %v4487 = vsel %vm289, %v4361, 0.0
      %4488 = vadd.xlane.f32.xlu0 %v4487
      %v4489 = vpop.xlane.xlu0 %4488
      %v4490 = vsel %vm289, %v4362, 0.0
      %4491 = vadd.xlane.f32.xlu0 %v4490
      %v4492 = vpop.xlane.xlu0 %4491
      %v4493 = vsel %vm289, %v4363, 0.0
      %4494 = vadd.xlane.f32.xlu0 %v4493
      %v4495 = vpop.xlane.xlu0 %4494
      %v4496 = vsel %vm289, %v4364, 0.0
      %4497 = vadd.xlane.f32.xlu0 %v4496
      %v4498 = vpop.xlane.xlu0 %4497
      %v4499 = vsel %vm289, %v4365, 0.0
      %4500 = vadd.xlane.f32.xlu0 %v4499
      %v4501 = vpop.xlane.xlu0 %4500
      %v4502 = vsel %vm289, %v4366, 0.0
      %4503 = vadd.xlane.f32.xlu0 %v4502
      %v4504 = vpop.xlane.xlu0 %4503
      %v4505 = vsel %vm289, %v4367, 0.0
      %4506 = vadd.xlane.f32.xlu0 %v4505
      %v4507 = vpop.xlane.xlu0 %4506
      %v4508 = vsel %vm289, %v4368, 0.0
      %4509 = vadd.xlane.f32.xlu0 %v4508
      %v4510 = vpop.xlane.xlu0 %4509
      %v4511 = vsel %vm289, %v4369, 0.0
      %4512 = vadd.xlane.f32.xlu0 %v4511
      %v4513 = vpop.xlane.xlu0 %4512
      %v4514 = vsel %vm289, %v4370, 0.0
      %4515 = vadd.xlane.f32.xlu0 %v4514
      %v4516 = vpop.xlane.xlu0 %4515
      %v4517 = vsel %vm289, %v4371, 0.0
      %4518 = vadd.xlane.f32.xlu0 %v4517
      %v4519 = vpop.xlane.xlu0 %4518
      %v4520 = vsel %vm289, %v4372, 0.0
      %4521 = vadd.xlane.f32.xlu0 %v4520
      %v4522 = vpop.xlane.xlu0 %4521
      %v4523 = vsel %vm289, %v4373, 0.0
      %4524 = vadd.xlane.f32.xlu0 %v4523
      %v4525 = vpop.xlane.xlu0 %4524
      %v4526 = vsel %vm289, %v4374, 0.0
      %4527 = vadd.xlane.f32.xlu0 %v4526
      %v4528 = vpop.xlane.xlu0 %4527
      %v4529 = vsel %vm289, %v4375, 0.0
      %4530 = vadd.xlane.f32.xlu0 %v4529
      %v4531 = vpop.xlane.xlu0 %4530
      %v4532 = vsel %vm289, %v4376, 0.0
      %4533 = vadd.xlane.f32.xlu0 %v4532
      %v4534 = vpop.xlane.xlu0 %4533
      %v4535 = vsel %vm289, %v4377, 0.0
      %4536 = vadd.xlane.f32.xlu0 %v4535
      %v4537 = vpop.xlane.xlu0 %4536
      %v4538 = vsel %vm289, %v4378, 0.0
      %4539 = vadd.xlane.f32.xlu0 %v4538
      %v4540 = vpop.xlane.xlu0 %4539
      %v4541 = vsel %vm289, %v4379, 0.0
      %4542 = vadd.xlane.f32.xlu0 %v4541
      %v4543 = vpop.xlane.xlu0 %4542
      %v4544 = vsel %vm289, %v4380, 0.0
      %4545 = vadd.xlane.f32.xlu0 %v4544
      %v4546 = vpop.xlane.xlu0 %4545
      %v4547 = vsel %vm289, %v4381, 0.0
      %4548 = vadd.xlane.f32.xlu0 %v4547
      %v4549 = vpop.xlane.xlu0 %4548
      %v4550 = vsel %vm289, %v4382, 0.0
      %4551 = vadd.xlane.f32.xlu0 %v4550
      %v4552 = vpop.xlane.xlu0 %4551
      %v4553 = vsel %vm289, %v4383, 0.0
      %4554 = vadd.xlane.f32.xlu0 %v4553
      %v4555 = vpop.xlane.xlu0 %4554
      %v4556 = vsel %vm289, %v4384, 0.0
      %4557 = vadd.xlane.f32.xlu0 %v4556
      %v4558 = vpop.xlane.xlu0 %4557
      %v4559 = vsel %vm289, %v4385, 0.0
      %4560 = vadd.xlane.f32.xlu0 %v4559
      %v4561 = vpop.xlane.xlu0 %4560
      %v4562 = vsel %vm289, %v4386, 0.0
      %4563 = vadd.xlane.f32.xlu0 %v4562
      %v4564 = vpop.xlane.xlu0 %4563
      %v4565 = vsel %vm289, %v4387, 0.0
      %4566 = vadd.xlane.f32.xlu0 %v4565
      %v4567 = vpop.xlane.xlu0 %4566
      %v4568 = vsel %vm289, %v4388, 0.0
      %4569 = vadd.xlane.f32.xlu0 %v4568
      %v4570 = vpop.xlane.xlu0 %4569
      %v4571 = vsel %vm289, %v4389, 0.0
      %4572 = vadd.xlane.f32.xlu0 %v4571
      %v4573 = vpop.xlane.xlu0 %4572
      %v4574 = vsel %vm289, %v4390, 0.0
      %4575 = vadd.xlane.f32.xlu0 %v4574
      %v4576 = vpop.xlane.xlu0 %4575
      %v4577 = vsel %vm289, %v4391, 0.0
      %4578 = vadd.xlane.f32.xlu0 %v4577
      %v4579 = vpop.xlane.xlu0 %4578
      %v4580 = vsel %vm289, %v4392, 0.0
      %4581 = vadd.xlane.f32.xlu0 %v4580
      %v4582 = vpop.xlane.xlu0 %4581
      %v4583 = vsel %vm289, %v4393, 0.0
      %4584 = vadd.xlane.f32.xlu0 %v4583
      %v4585 = vpop.xlane.xlu0 %4584
      %v4586 = vadd.f32 %v4396, %v4399
      %v4587 = vadd.f32 %v4586, %v4402
      %v4588 = vadd.f32 %v4587, %v4405
      %v4589 = vadd.f32 %v4588, %v4408
      %v4590 = vadd.f32 %v4589, %v4411
      %v4591 = vadd.f32 %v4590, %v4414
      %v4592 = vadd.f32 %v4591, %v4417
      %v4593 = vadd.f32 %v4592, %v4420
      %v4594 = vadd.f32 %v4593, %v4423
      %v4595 = vadd.f32 %v4594, %v4426
      %v4596 = vadd.f32 %v4595, %v4429
      %v4597 = vadd.f32 %v4596, %v4432
      %v4598 = vadd.f32 %v4597, %v4435
      %v4599 = vadd.f32 %v4598, %v4438
      %v4600 = vadd.f32 %v4599, %v4441
      %v4601 = vadd.f32 %v4600, %v4444
      %v4602 = vadd.f32 %v4601, %v4447
      %v4603 = vadd.f32 %v4602, %v4450
      %v4604 = vadd.f32 %v4603, %v4453
      %v4605 = vadd.f32 %v4604, %v4456
      %v4606 = vadd.f32 %v4605, %v4459
      %v4607 = vadd.f32 %v4606, %v4462
      %v4608 = vadd.f32 %v4607, %v4465
      %v4609 = vadd.f32 %v4608, %v4468
      %v4610 = vadd.f32 %v4609, %v4471
      %v4611 = vadd.f32 %v4610, %v4474
      %v4612 = vadd.f32 %v4611, %v4477
      %v4613 = vadd.f32 %v4612, %v4480
      %v4614 = vadd.f32 %v4613, %v4483
      %v4615 = vadd.f32 %v4614, %v4486
      %v4616 = vadd.f32 %v4615, %v4489
      %v4617 = vadd.f32 %v4616, %v4492
      %v4618 = vadd.f32 %v4617, %v4495
      %v4619 = vadd.f32 %v4618, %v4498
      %v4620 = vadd.f32 %v4619, %v4501
      %v4621 = vadd.f32 %v4620, %v4504
      %v4622 = vadd.f32 %v4621, %v4507
      %v4623 = vadd.f32 %v4622, %v4510
      %v4624 = vadd.f32 %v4623, %v4513
      %v4625 = vadd.f32 %v4624, %v4516
      %v4626 = vadd.f32 %v4625, %v4519
      %v4627 = vadd.f32 %v4626, %v4522
      %v4628 = vadd.f32 %v4627, %v4525
      %v4629 = vadd.f32 %v4628, %v4528
      %v4630 = vadd.f32 %v4629, %v4531
      %v4631 = vadd.f32 %v4630, %v4534
      %v4632 = vadd.f32 %v4631, %v4537
      %v4633 = vadd.f32 %v4632, %v4540
      %v4634 = vadd.f32 %v4633, %v4543
      %v4635 = vadd.f32 %v4634, %v4546
      %v4636 = vadd.f32 %v4635, %v4549
      %v4637 = vadd.f32 %v4636, %v4552
      %v4638 = vadd.f32 %v4637, %v4555
      %v4639 = vadd.f32 %v4638, %v4558
      %v4640 = vadd.f32 %v4639, %v4561
      %v4641 = vadd.f32 %v4640, %v4564
      %v4642 = vadd.f32 %v4641, %v4567
      %v4643 = vadd.f32 %v4642, %v4570
      %v4644 = vadd.f32 %v4643, %v4573
      %v4645 = vadd.f32 %v4644, %v4576
      %v4646 = vadd.f32 %v4645, %v4579
      %v4647 = vadd.f32 %v4646, %v4582
      %v4648 = vadd.f32 %v4647, %v4585
      %v4649 = vrot.slane %v4648, 4
      %v4650 = vadd.f32 %v4648, %v4649
      %v4651 = vrot.slane %v4650, 2
      %v4652 = vadd.f32 %v4650, %v4651
      %v4653 = vrot.slane %v4652, 1
      %v4654 = vadd.f32 %v4652, %v4653
      %vm4655 = vcmask 0
      %4656 = vst.msk [vmem:[#allocation5] sm:$0x1] %vm4655, %v4654
    $region29: #{quantize_forward.1} parent=1 // pred_fallthru
      _
    // Predicated region
    $region30: #{quantize_forward.1} parent=1 // pred_check
      _
    $region31: #{quantize_forward.1} parent=1 // pred_check_branch
      %4658 = sbr.rel (0) target = $region33
    $region32: #{quantize_forward.1} parent=1 // pred_region
      _
    $region33: #{quantize_forward.1} parent=1 // pred_fallthru
      _
    // Predicated region
    $region34: #{quantize_forward.1} parent=1 // pred_check
      _
    $region35: #{quantize_forward.1} parent=1 // pred_check_branch
      %4660 = sbr.rel (0) target = $region37
    $region36: #{quantize_forward.1} parent=1 // pred_region
      _
    $region37: #{quantize_forward.1} parent=1 // pred_fallthru
      _
    // Predicated region
    $region38: #{quantize_forward.1} parent=1 // pred_check
      _
    $region39: #{quantize_forward.1} parent=1 // pred_check_branch
      %4662 = sbr.rel (0) target = $region41
    $region40: #{quantize_forward.1} parent=1 // pred_region
      %s4664 = ssub.s32 16, 16
      %4665 = vsyncadd [#allocation6], %s4664
      %s4667 = sshll.u32 [#allocation5], 4
      %s4668 = int_to_ptr.vmem [resolvable:$true] %s4667
      %4670 = dma.vmem_to_hbm [thread:$0]  %s4668, 16, %s7, [#allocation6]
    $region41: #{quantize_forward.1} parent=1 // pred_fallthru
      _
    // Predicated region
    $region42: #{quantize_forward.1} parent=1 // pred_check
      _
    $region43: #{quantize_forward.1} parent=1 // pred_check_branch
      %4672 = sbr.rel (0) target = $region45
    $region44: #{quantize_forward.1} parent=1 // pred_region
      _
    $region45: #{quantize_forward.1} parent=1 // pred_fallthru
      _
    // Predicated region
    $region46: #{quantize_forward.1} parent=1 // pred_check
      _
    $region47: #{quantize_forward.1} parent=1 // pred_check_branch
      %4674 = sbr.rel (0) target = $region49
    $region48: #{quantize_forward.1} parent=1 // pred_region
      _
    $region49: #{quantize_forward.1} parent=1 // pred_fallthru
      _
    // Predicated region
    $region50: #{quantize_forward.1} parent=1 // pred_check
      _
    $region51: #{quantize_forward.1} parent=1 // pred_check_branch
      %4676 = sbr.rel (0) target = $region53
    $region52: #{quantize_forward.1} parent=1 // pred_region
      %4677 = dma.done [#allocation6], 16
    $region53: #{quantize_forward.1} parent=1 // pred_fallthru
      _
    %4678 = vsyncpa [#allocation6], 1

</llo_original>
